<compile_context>
chip_gen: v6e
topology: v6e:2x2x1
jax: 0.10.0
libtpu: 0.0.40
codegen_flags: <defaults>
</compile_context>

<pallas_src>
import functools

import jax
import jax.numpy as jnp
from jax.experimental import pallas as pl
from jax.experimental.pallas import tpu as pltpu


def _round_up(x, m):
    return (x + m - 1) // m * m


def _hint_mult(x, m):
    # pl.multiple_of hint only for traced values; static Python ints pass through.
    return x if isinstance(x, int) else pl.multiple_of(x, m)


def _edm_precond_kernel(coef_ref, x_ref, w_ref, b_ref, wn_ref, o_ref, xpad_ref,
                        *, H, W, K, Cin, tH, tCo, chunk, Wp_al, n_ht, n_ct,
                        compute_dtype):
    """One grid step = one (batch n, Cout tile ct, H-row tile ht).

    coef_ref: (N, 4) SMEM  -> [c_in, c_skip, c_out, c_noise] per batch element
    x_ref:    (1, H, W, Cin) VMEM  (unpadded NHWC image for batch n, f32)
    w_ref:    (K, K, Cin, tCo) VMEM (compute_dtype)
    b_ref:    (1, tCo) VMEM         (conv bias, f32)
    wn_ref:   (1, tCo) VMEM         (noise-conditioning weights, f32)
    o_ref:    (1, tH, W, tCo) VMEM  (output D_x tile, f32)
    xpad_ref: ((Hp+1)*Wp_al, Cin) f32 VMEM scratch (flat, zero-halo'd, UNSCALED x)
    """
    pad = K // 2

    n = pl.program_id(0)
    ct = pl.program_id(1)
    ht = pl.program_id(2)

    c_in = coef_ref[n, 0]
    c_skip = coef_ref[n, 1]
    c_out = coef_ref[n, 2]
    c_noise = coef_ref[n, 3]

    # ------------------------------------------------------------------
    # Build the padded input once per batch element in the flat scratch.
    # Only the halo is zeroed (top/bottom pad rows, left/right pad columns,
    # plus the one-row tap-overhang); the alignment columns [Wp, Wp_al) only
    # ever feed discarded wide-frame output columns and are left untouched.
    # x is copied UNSCALED (c_in folded into the epilogue — stand-in is linear).
    # The x block index only depends on n, so this scratch stays valid across
    # the whole (ct, ht) sub-grid (those axes are "arbitrary", not "parallel").
    # ------------------------------------------------------------------
    @pl.when((ct == 0) & (ht == 0))
    def _():
        # top pad rows
        xpad_ref[pl.ds(0, pad * Wp_al), :] = jnp.zeros((pad * Wp_al, Cin),
                                                       jnp.float32)
        # bottom pad rows + one full overhang row (covers last-chunk tap reads)
        bot = (H + pad) * Wp_al
        xpad_ref[pl.ds(bot, (pad + 1) * Wp_al), :] = jnp.zeros(
            ((pad + 1) * Wp_al, Cin), jnp.float32)
        # interior rows: left/right pad columns + the image row
        for h in range(H):                                   # static loop
            r0 = (h + pad) * Wp_al                           # 8-aligned
            xpad_ref[pl.ds(r0, pad), :] = jnp.zeros((pad, Cin), jnp.float32)
            xpad_ref[pl.ds(r0 + pad, W), :] = x_ref[0, h]
            xpad_ref[pl.ds(r0 + pad + W, pad), :] = jnp.zeros((pad, Cin),
                                                              jnp.float32)

    # Hoisted per-tile scalars/vectors (outside the chunk & tap loops).
    femb = c_out * (b_ref[0, :] + c_noise * wn_ref[0, :])    # (tCo,) f32
    c_conv = c_out * c_in                                    # c_in folded out

    if n_ht == 1:
        h0 = 0
    else:
        h0 = _hint_mult(ht * tH, tH)
    if n_ct == 1:
        c_off = 0
    else:
        c_off = _hint_mult(ct * tCo, tCo)

    # ------------------------------------------------------------------
    # Chunked conv accumulation ("wide frame" trick): for each chunk of output
    # rows, every tap (kh, kw) is ONE flat 2-D MXU matmul
    #   (chunk*Wp_al, Cin) @ (Cin, tCo)
    # reading the scratch at the constant offset kh*Wp_al + kw — no shifted
    # window relayouts.  The f32 accumulator stays ~register resident; the
    # epilogue fuses the femb add, the c_skip/c_out blend and the store.
    # Columns w >= W of the wide frame are garbage and dropped before store.
    # ------------------------------------------------------------------
    n_chunks = tH // chunk
    Mc = chunk * Wp_al
    for c in range(n_chunks):                                # static loop
        cstart = c * chunk
        row = h0 + cstart
        rbase = _hint_mult(row * Wp_al, 8)                   # 8-aligned row start

        acc = jnp.zeros((Mc, tCo), jnp.float32)
        for kh in range(K):
            for kw in range(K):
                slab = xpad_ref[pl.ds(rbase + kh * Wp_al + kw, Mc), :]
                acc = acc + jnp.dot(slab.astype(compute_dtype), w_ref[kh, kw],
                                    preferred_element_type=jnp.float32)

        # Epilogue: drop garbage columns, blend with the skip path, store.
        f = acc.reshape(chunk, Wp_al, tCo)[:, :W, :]          # (chunk, W, tCo)
        if n_ct == 1:
            x_skip = x_ref[0, pl.ds(row, chunk), :, :]
        else:
            x_skip = x_ref[0, pl.ds(row, chunk), :, pl.ds(c_off, tCo)]
        o_ref[0, pl.ds(cstart, chunk), :, :] = c_skip * x_skip + c_conv * f + femb


def _pick_row_tile(H):
    if H <= 32:
        return H
    for t in (32, 16, 8):
        if H % t == 0:
            return t
    return H


def _pick_cout_tile(Cout):
    # 128 is safe on all generations (v5e MXU is 128-wide).  On v6e/v7x pass
    # cout_tile=256 explicitly when Cout % 256 == 0 and VMEM allows.
    if Cout <= 128:
        return Cout
    if Cout % 128 == 0:
        return 128
    return Cout  # non-128-multiple Cout -> masked lane stores (correct, slower)


def _pick_chunk(tH, Wp_al, tCo, acc_budget_bytes=128 * 1024):
    # Largest row-chunk whose f32 accumulator (chunk*Wp_al, tCo) stays small
    # enough to be (mostly) register resident.
    for c in (tH, 32, 16, 8, 4, 2, 1):
        if c <= tH and tH % c == 0 and c * Wp_al * tCo * 4 <= acc_budget_bytes:
            return c
    return 1


def edm_precond_forward(x, sigma, params, *, sigma_data=0.5,
                        compute_dtype=jnp.float32, cout_tile=None):
    """Fused Pallas forward of EDMPrecond (with the single-conv stand-in model).

    x:      (N, C, H, W) array (NCHW, like the PyTorch module)
    sigma:  (N,) (or scalar) noise levels
    params: dict with 'weight' (C, C, K, K), 'bias' (C,), 'w_noise' (C,)
    compute_dtype: MXU operand dtype (jnp.float32 for exact module semantics,
        jnp.bfloat16 for the fast v5e/v6e/v7x MXU path; accumulation and the
        skip/blend math are always f32).
    Returns D_x with shape (N, C, H, W), float32.
    """
    x = x.astype(jnp.float32)
    sigma = jnp.asarray(sigma, jnp.float32).reshape(-1)

    N, C, H, W = x.shape
    weight = params["weight"].astype(jnp.float32)
    bias = params["bias"].astype(jnp.float32)
    w_noise = params["w_noise"].astype(jnp.float32)
    Cout, Cin, K, _ = weight.shape
    assert Cin == C and Cout == C, "EDMPrecond: model in/out channels == img_channels"
    if sigma.shape[0] == 1 and N > 1:
        sigma = jnp.broadcast_to(sigma, (N,))

    pad = K // 2
    Hp = H + 2 * pad
    Wp_al = _round_up(W + 2 * pad, 8)        # sublane-aligned padded row stride

    # Per-batch preconditioning scalars (tiny; go to SMEM).
    c_skip = sigma_data ** 2 / (sigma ** 2 + sigma_data ** 2)
    c_out = sigma * sigma_data / jnp.sqrt(sigma ** 2 + sigma_data ** 2)
    c_in = 1.0 / jnp.sqrt(sigma_data ** 2 + sigma ** 2)
    c_noise = jnp.log(sigma) / 4.0
    coeffs = jnp.stack([c_in, c_skip, c_out, c_noise], axis=1)       # (N, 4)

    # Layout glue: channels -> lanes (NHWC); weight -> (K, K, Cin, Cout).
    # (Interface is NCHW; a full NHWC model would drop these transposes.)
    x_nhwc = jnp.transpose(x, (0, 2, 3, 1))
    w_t = jnp.transpose(weight, (2, 3, 1, 0)).astype(compute_dtype)
    b2 = bias.reshape(1, Cout)
    wn2 = w_noise.reshape(1, Cout)

    tH = _pick_row_tile(H)
    tCo = cout_tile if cout_tile is not None else _pick_cout_tile(Cout)
    n_ht = H // tH
    n_ct = Cout // tCo
    assert n_ht * tH == H and n_ct * tCo == Cout
    chunk = _pick_chunk(tH, Wp_al, tCo)

    kernel = functools.partial(
        _edm_precond_kernel, H=H, W=W, K=K, Cin=Cin, tH=tH, tCo=tCo,
        chunk=chunk, Wp_al=Wp_al, n_ht=n_ht, n_ct=n_ct,
        compute_dtype=compute_dtype)

    cbytes = jnp.dtype(compute_dtype).itemsize
    flops = 2 * N * H * W * K * K * Cin * Cout + 8 * N * H * W * Cout
    bytes_accessed = (4 * (N * H * W * (Cin + Cout) + 2 * Cout + 4 * N)
                      + cbytes * K * K * Cin * Cout)

    # Explicit scoped-VMEM limit (review: don't silently hit the default caps;
    # stay under v7x's 64 MiB physical VMEM).
    scratch_bytes = (Hp + 1) * Wp_al * Cin * 4
    vmem_need = (2 * 4 * H * W * Cin            # x block (double-buffered, f32)
                 + scratch_bytes                # persistent padded scratch
                 + 2 * 4 * tH * W * tCo         # out block (double-buffered)
                 + 2 * cbytes * K * K * Cin * tCo
                 + 4 * 4 * tCo                  # bias / noise weights
                 + 4 * chunk * Wp_al * tCo)     # accumulator headroom
    vmem_limit = int(min(max(2 * vmem_need, 16 * 1024 * 1024), 64 * 1024 * 1024))

    out_nhwc = pl.pallas_call(
        kernel,
        out_shape=jax.ShapeDtypeStruct((N, H, W, Cout), jnp.float32),
        grid=(N, n_ct, n_ht),
        in_specs=[
            pl.BlockSpec(memory_space=pltpu.MemorySpace.SMEM),             # coeffs
            pl.BlockSpec((1, H, W, Cin), lambda n, ct, ht: (n, 0, 0, 0)),  # x
            pl.BlockSpec((K, K, Cin, tCo), lambda n, ct, ht: (0, 0, 0, ct)),
            pl.BlockSpec((1, tCo), lambda n, ct, ht: (0, ct)),             # bias
            pl.BlockSpec((1, tCo), lambda n, ct, ht: (0, ct)),             # w_noise
        ],
        out_specs=pl.BlockSpec((1, tH, W, tCo), lambda n, ct, ht: (n, ht, 0, ct)),
        scratch_shapes=[pltpu.VMEM(((Hp + 1) * Wp_al, Cin), jnp.float32)],
        compiler_params=pltpu.CompilerParams(
            # n is safe to shard across TensorCores; (ct, ht) reuse the
            # per-batch padded-input scratch, so they must stay "arbitrary".
            dimension_semantics=("parallel", "arbitrary", "arbitrary"),
            vmem_limit_bytes=vmem_limit),
        cost_estimate=pl.CostEstimate(
            flops=flops, transcendentals=0, bytes_accessed=bytes_accessed),
    )(coeffs, x_nhwc, w_t, b2, wn2)

    return jnp.transpose(out_nhwc, (0, 3, 1, 2))                     # NHWC -> NCHW


def init_edm_params(key, img_channels, kernel=3):
    """Kaiming-normal conv weight (EDM Conv2d default init), zero bias,
    small noise-conditioning vector for the stand-in model."""
    kw_, kn_ = jax.random.split(key)
    fan_in = img_channels * kernel * kernel
    weight = jnp.sqrt(1.0 / fan_in) * jax.random.normal(
        kw_, (img_channels, img_channels, kernel, kernel), dtype=jnp.float32)
    bias = jnp.zeros((img_channels,), jnp.float32)
    w_noise = 0.1 * jax.random.normal(kn_, (img_channels,), dtype=jnp.float32)
    return {"weight": weight, "bias": bias, "w_noise": w_noise}


def edm_precond_reference(x, sigma, params, *, sigma_data=0.5):
    """Pure-JAX reference of the same forward (for the correctness check)."""
    x = x.astype(jnp.float32)
    sigma = jnp.asarray(sigma, jnp.float32).reshape(-1, 1, 1, 1)
    c_skip = sigma_data ** 2 / (sigma ** 2 + sigma_data ** 2)
    c_out = sigma * sigma_data / jnp.sqrt(sigma ** 2 + sigma_data ** 2)
    c_in = 1.0 / jnp.sqrt(sigma_data ** 2 + sigma ** 2)
    c_noise = jnp.log(sigma) / 4.0
    K = params["weight"].shape[-1]
    F_x = jax.lax.conv_general_dilated(
        c_in * x, params["weight"], window_strides=(1, 1),
        padding=((K // 2, K // 2), (K // 2, K // 2)),
        dimension_numbers=("NCHW", "OIHW", "NCHW"))
    F_x = (F_x + params["bias"].reshape(1, -1, 1, 1)
           + c_noise * params["w_noise"].reshape(1, -1, 1, 1))
    return c_skip * x + c_out * F_x


if __name__ == "__main__":
    key = jax.random.PRNGKey(0)
    kx, ks, kp = jax.random.split(key, 3)

    N, C, H, W = 2, 4, 16, 16
    x = jax.random.normal(kx, (N, C, H, W), dtype=jnp.float32)
    sigma = jnp.exp(jax.random.normal(ks, (N,), dtype=jnp.float32))  # > 0
    params = init_edm_params(kp, C, kernel=3)

    d_ref = edm_precond_reference(x, sigma, params)

    # Exact-precision path (matches the module's default f32 behaviour).
    d_f32 = edm_precond_forward(x, sigma, params, compute_dtype=jnp.float32)
    jax.block_until_ready(d_f32)
    assert d_f32.shape == (N, C, H, W)
    err32 = float(jnp.max(jnp.abs(d_f32 - d_ref)))
    assert err32 < 1e-4, "f32 max abs err = %g" % err32

    # bf16-MXU path (analogous to use_fp16=True: model matmuls in reduced
    # precision, preconditioning blend in f32).
    d_bf16 = edm_precond_forward(x, sigma, params, compute_dtype=jnp.bfloat16)
    jax.block_until_ready(d_bf16)
    assert jnp.allclose(d_bf16, d_ref, atol=5e-2, rtol=5e-2), (
        "bf16 max abs err = %g" % float(jnp.max(jnp.abs(d_bf16 - d_ref))))

    print("KERNEL_OK")
</pallas_src>

<mosaic_0001>
module attributes {stable_mosaic.version = 11 : i64} {
  func.func @_edm_precond_kernel(%arg0: i32, %arg1: i32, %arg2: i32, %arg3: memref<2x4xf32, #tpu.memory_space<smem>>, %arg4: memref<1x16x16x4xf32, #tpu.memory_space<vmem>>, %arg5: memref<3x3x4x4xf32, #tpu.memory_space<vmem>>, %arg6: memref<1x4xf32, #tpu.memory_space<vmem>>, %arg7: memref<1x4xf32, #tpu.memory_space<vmem>>, %arg8: memref<1x16x16x4xf32, #tpu.memory_space<vmem>>, %arg9: memref<456x4xf32, #tpu.memory_space<vmem>>) attributes {dimension_semantics = [#tpu.dimension_semantics<parallel>, #tpu.dimension_semantics<arbitrary>, #tpu.dimension_semantics<arbitrary>], iteration_bounds = array<i64: 2, 1, 1>, scalar_prefetch = 0 : i64, scratch_operands = 1 : i64, tpu.core_type = #tpu.core_type<tc>, window_params = [{transform_indices = @transform_0, window_bounds = array<i64: 2, 4>}, {transform_indices = @transform_1, window_bounds = array<i64: 1, 16, 16, 4>}, {transform_indices = @transform_2, window_bounds = array<i64: 3, 3, 4, 4>}, {transform_indices = @transform_3, window_bounds = array<i64: 1, 4>}, {transform_indices = @transform_4, window_bounds = array<i64: 1, 4>}, {transform_indices = @transform_5, window_bounds = array<i64: 1, 16, 16, 4>}]} {
    %0 = arith.index_cast %arg0 : i32 to index
    %c0 = arith.constant 0 : index
    %1 = memref.load %arg3[%0, %c0] : memref<2x4xf32, #tpu.memory_space<smem>>
    %2 = arith.index_cast %arg0 : i32 to index
    %c1 = arith.constant 1 : index
    %3 = memref.load %arg3[%2, %c1] : memref<2x4xf32, #tpu.memory_space<smem>>
    %4 = arith.index_cast %arg0 : i32 to index
    %c2 = arith.constant 2 : index
    %5 = memref.load %arg3[%4, %c2] : memref<2x4xf32, #tpu.memory_space<smem>>
    %6 = arith.index_cast %arg0 : i32 to index
    %c3 = arith.constant 3 : index
    %7 = memref.load %arg3[%6, %c3] : memref<2x4xf32, #tpu.memory_space<smem>>
    %c0_i32 = arith.constant 0 : i32
    %8 = arith.cmpi eq, %arg1, %c0_i32 : i32
    %c0_i32_0 = arith.constant 0 : i32
    %9 = arith.cmpi eq, %arg2, %c0_i32_0 : i32
    %10 = arith.andi %8, %9 : i1
    %11 = arith.extui %10 : i1 to i32
    %c0_i32_1 = arith.constant 0 : i32
    %12 = arith.cmpi ne, %11, %c0_i32_1 : i32
    scf.if %12 {
      %cst_71 = arith.constant 0.000000e+00 : f32
      %84 = vector.broadcast %cst_71 : f32 to vector<24x4xf32>
      %c0_72 = arith.constant 0 : index
      %c0_73 = arith.constant 0 : index
      %85 = vector.load %arg9[%c0_72, %c0_73] : memref<456x4xf32, #tpu.memory_space<vmem>>, vector<24x4xf32>
      tpu.vector_store %arg9[%c0_72, %c0_73], %84 {strides = array<i32>} : memref<456x4xf32, #tpu.memory_space<vmem>>, vector<24x4xf32>,
      %cst_74 = arith.constant 0.000000e+00 : f32
      %86 = vector.broadcast %cst_74 : f32 to vector<48x4xf32>
      %c408 = arith.constant 408 : index
      %c0_75 = arith.constant 0 : index
      %87 = vector.load %arg9[%c408, %c0_75] : memref<456x4xf32, #tpu.memory_space<vmem>>, vector<48x4xf32>
      tpu.vector_store %arg9[%c408, %c0_75], %86 {strides = array<i32>} : memref<456x4xf32, #tpu.memory_space<vmem>>, vector<48x4xf32>,
      %cst_76 = arith.constant 0.000000e+00 : f32
      %88 = vector.broadcast %cst_76 : f32 to vector<1x4xf32>
      %c24_77 = arith.constant 24 : index
      %c0_78 = arith.constant 0 : index
      %89 = vector.load %arg9[%c24_77, %c0_78] : memref<456x4xf32, #tpu.memory_space<vmem>>, vector<1x4xf32>
      tpu.vector_store %arg9[%c24_77, %c0_78], %88 {strides = array<i32>} : memref<456x4xf32, #tpu.memory_space<vmem>>, vector<1x4xf32>,
      %c0_79 = arith.constant 0 : index
      %c0_80 = arith.constant 0 : index
      %c0_81 = arith.constant 0 : index
      %c0_82 = arith.constant 0 : index
      %90 = vector.load %arg4[%c0_79, %c0_80, %c0_81, %c0_82] : memref<1x16x16x4xf32, #tpu.memory_space<vmem>>, vector<1x1x16x4xf32>
      %91 = vector.shape_cast %90 : vector<1x1x16x4xf32> to vector<16x4xf32>
      %c25_83 = arith.constant 25 : index
      %c0_84 = arith.constant 0 : index
      %92 = vector.load %arg9[%c25_83, %c0_84] : memref<456x4xf32, #tpu.memory_space<vmem>>, vector<16x4xf32>
      tpu.vector_store %arg9[%c25_83, %c0_84], %91 {strides = array<i32>} : memref<456x4xf32, #tpu.memory_space<vmem>>, vector<16x4xf32>,
      %cst_85 = arith.constant 0.000000e+00 : f32
      %93 = vector.broadcast %cst_85 : f32 to vector<1x4xf32>
      %c41 = arith.constant 41 : index
      %c0_86 = arith.constant 0 : index
      %94 = vector.load %arg9[%c41, %c0_86] : memref<456x4xf32, #tpu.memory_space<vmem>>, vector<1x4xf32>
      tpu.vector_store %arg9[%c41, %c0_86], %93 {strides = array<i32>} : memref<456x4xf32, #tpu.memory_space<vmem>>, vector<1x4xf32>,
      %cst_87 = arith.constant 0.000000e+00 : f32
      %95 = vector.broadcast %cst_87 : f32 to vector<1x4xf32>
      %c48_88 = arith.constant 48 : index
      %c0_89 = arith.constant 0 : index
      %96 = vector.load %arg9[%c48_88, %c0_89] : memref<456x4xf32, #tpu.memory_space<vmem>>, vector<1x4xf32>
      tpu.vector_store %arg9[%c48_88, %c0_89], %95 {strides = array<i32>} : memref<456x4xf32, #tpu.memory_space<vmem>>, vector<1x4xf32>,
      %c0_90 = arith.constant 0 : index
      %c1_91 = arith.constant 1 : index
      %c0_92 = arith.constant 0 : index
      %c0_93 = arith.constant 0 : index
      %97 = vector.load %arg4[%c0_90, %c1_91, %c0_92, %c0_93] : memref<1x16x16x4xf32, #tpu.memory_space<vmem>>, vector<1x1x16x4xf32>
      %98 = vector.shape_cast %97 : vector<1x1x16x4xf32> to vector<16x4xf32>
      %c49_94 = arith.constant 49 : index
      %c0_95 = arith.constant 0 : index
      %99 = vector.load %arg9[%c49_94, %c0_95] : memref<456x4xf32, #tpu.memory_space<vmem>>, vector<16x4xf32>
      tpu.vector_store %arg9[%c49_94, %c0_95], %98 {strides = array<i32>} : memref<456x4xf32, #tpu.memory_space<vmem>>, vector<16x4xf32>,
      %cst_96 = arith.constant 0.000000e+00 : f32
      %100 = vector.broadcast %cst_96 : f32 to vector<1x4xf32>
      %c65 = arith.constant 65 : index
      %c0_97 = arith.constant 0 : index
      %101 = vector.load %arg9[%c65, %c0_97] : memref<456x4xf32, #tpu.memory_space<vmem>>, vector<1x4xf32>
      tpu.vector_store %arg9[%c65, %c0_97], %100 {strides = array<i32>} : memref<456x4xf32, #tpu.memory_space<vmem>>, vector<1x4xf32>,
      %cst_98 = arith.constant 0.000000e+00 : f32
      %102 = vector.broadcast %cst_98 : f32 to vector<1x4xf32>
      %c72 = arith.constant 72 : index
      %c0_99 = arith.constant 0 : index
      %103 = vector.load %arg9[%c72, %c0_99] : memref<456x4xf32, #tpu.memory_space<vmem>>, vector<1x4xf32>
      tpu.vector_store %arg9[%c72, %c0_99], %102 {strides = array<i32>} : memref<456x4xf32, #tpu.memory_space<vmem>>, vector<1x4xf32>,
      %c0_100 = arith.constant 0 : index
      %c2_101 = arith.constant 2 : index
      %c0_102 = arith.constant 0 : index
      %c0_103 = arith.constant 0 : index
      %104 = vector.load %arg4[%c0_100, %c2_101, %c0_102, %c0_103] : memref<1x16x16x4xf32, #tpu.memory_space<vmem>>, vector<1x1x16x4xf32>
      %105 = vector.shape_cast %104 : vector<1x1x16x4xf32> to vector<16x4xf32>
      %c73 = arith.constant 73 : index
      %c0_104 = arith.constant 0 : index
      %106 = vector.load %arg9[%c73, %c0_104] : memref<456x4xf32, #tpu.memory_space<vmem>>, vector<16x4xf32>
      tpu.vector_store %arg9[%c73, %c0_104], %105 {strides = array<i32>} : memref<456x4xf32, #tpu.memory_space<vmem>>, vector<16x4xf32>,
      %cst_105 = arith.constant 0.000000e+00 : f32
      %107 = vector.broadcast %cst_105 : f32 to vector<1x4xf32>
      %c89 = arith.constant 89 : index
      %c0_106 = arith.constant 0 : index
      %108 = vector.load %arg9[%c89, %c0_106] : memref<456x4xf32, #tpu.memory_space<vmem>>, vector<1x4xf32>
      tpu.vector_store %arg9[%c89, %c0_106], %107 {strides = array<i32>} : memref<456x4xf32, #tpu.memory_space<vmem>>, vector<1x4xf32>,
      %cst_107 = arith.constant 0.000000e+00 : f32
      %109 = vector.broadcast %cst_107 : f32 to vector<1x4xf32>
      %c96 = arith.constant 96 : index
      %c0_108 = arith.constant 0 : index
      %110 = vector.load %arg9[%c96, %c0_108] : memref<456x4xf32, #tpu.memory_space<vmem>>, vector<1x4xf32>
      tpu.vector_store %arg9[%c96, %c0_108], %109 {strides = array<i32>} : memref<456x4xf32, #tpu.memory_space<vmem>>, vector<1x4xf32>,
      %c0_109 = arith.constant 0 : index
      %c3_110 = arith.constant 3 : index
      %c0_111 = arith.constant 0 : index
      %c0_112 = arith.constant 0 : index
      %111 = vector.load %arg4[%c0_109, %c3_110, %c0_111, %c0_112] : memref<1x16x16x4xf32, #tpu.memory_space<vmem>>, vector<1x1x16x4xf32>
      %112 = vector.shape_cast %111 : vector<1x1x16x4xf32> to vector<16x4xf32>
      %c97 = arith.constant 97 : index
      %c0_113 = arith.constant 0 : index
      %113 = vector.load %arg9[%c97, %c0_113] : memref<456x4xf32, #tpu.memory_space<vmem>>, vector<16x4xf32>
      tpu.vector_store %arg9[%c97, %c0_113], %112 {strides = array<i32>} : memref<456x4xf32, #tpu.memory_space<vmem>>, vector<16x4xf32>,
      %cst_114 = arith.constant 0.000000e+00 : f32
      %114 = vector.broadcast %cst_114 : f32 to vector<1x4xf32>
      %c113 = arith.constant 113 : index
      %c0_115 = arith.constant 0 : index
      %115 = vector.load %arg9[%c113, %c0_115] : memref<456x4xf32, #tpu.memory_space<vmem>>, vector<1x4xf32>
      tpu.vector_store %arg9[%c113, %c0_115], %114 {strides = array<i32>} : memref<456x4xf32, #tpu.memory_space<vmem>>, vector<1x4xf32>,
      %cst_116 = arith.constant 0.000000e+00 : f32
      %116 = vector.broadcast %cst_116 : f32 to vector<1x4xf32>
      %c120 = arith.constant 120 : index
      %c0_117 = arith.constant 0 : index
      %117 = vector.load %arg9[%c120, %c0_117] : memref<456x4xf32, #tpu.memory_space<vmem>>, vector<1x4xf32>
      tpu.vector_store %arg9[%c120, %c0_117], %116 {strides = array<i32>} : memref<456x4xf32, #tpu.memory_space<vmem>>, vector<1x4xf32>,
      %c0_118 = arith.constant 0 : index
      %c4 = arith.constant 4 : index
      %c0_119 = arith.constant 0 : index
      %c0_120 = arith.constant 0 : index
      %118 = vector.load %arg4[%c0_118, %c4, %c0_119, %c0_120] : memref<1x16x16x4xf32, #tpu.memory_space<vmem>>, vector<1x1x16x4xf32>
      %119 = vector.shape_cast %118 : vector<1x1x16x4xf32> to vector<16x4xf32>
      %c121 = arith.constant 121 : index
      %c0_121 = arith.constant 0 : index
      %120 = vector.load %arg9[%c121, %c0_121] : memref<456x4xf32, #tpu.memory_space<vmem>>, vector<16x4xf32>
      tpu.vector_store %arg9[%c121, %c0_121], %119 {strides = array<i32>} : memref<456x4xf32, #tpu.memory_space<vmem>>, vector<16x4xf32>,
      %cst_122 = arith.constant 0.000000e+00 : f32
      %121 = vector.broadcast %cst_122 : f32 to vector<1x4xf32>
      %c137 = arith.constant 137 : index
      %c0_123 = arith.constant 0 : index
      %122 = vector.load %arg9[%c137, %c0_123] : memref<456x4xf32, #tpu.memory_space<vmem>>, vector<1x4xf32>
      tpu.vector_store %arg9[%c137, %c0_123], %121 {strides = array<i32>} : memref<456x4xf32, #tpu.memory_space<vmem>>, vector<1x4xf32>,
      %cst_124 = arith.constant 0.000000e+00 : f32
      %123 = vector.broadcast %cst_124 : f32 to vector<1x4xf32>
      %c144 = arith.constant 144 : index
      %c0_125 = arith.constant 0 : index
      %124 = vector.load %arg9[%c144, %c0_125] : memref<456x4xf32, #tpu.memory_space<vmem>>, vector<1x4xf32>
      tpu.vector_store %arg9[%c144, %c0_125], %123 {strides = array<i32>} : memref<456x4xf32, #tpu.memory_space<vmem>>, vector<1x4xf32>,
      %c0_126 = arith.constant 0 : index
      %c5 = arith.constant 5 : index
      %c0_127 = arith.constant 0 : index
      %c0_128 = arith.constant 0 : index
      %125 = vector.load %arg4[%c0_126, %c5, %c0_127, %c0_128] : memref<1x16x16x4xf32, #tpu.memory_space<vmem>>, vector<1x1x16x4xf32>
      %126 = vector.shape_cast %125 : vector<1x1x16x4xf32> to vector<16x4xf32>
      %c145 = arith.constant 145 : index
      %c0_129 = arith.constant 0 : index
      %127 = vector.load %arg9[%c145, %c0_129] : memref<456x4xf32, #tpu.memory_space<vmem>>, vector<16x4xf32>
      tpu.vector_store %arg9[%c145, %c0_129], %126 {strides = array<i32>} : memref<456x4xf32, #tpu.memory_space<vmem>>, vector<16x4xf32>,
      %cst_130 = arith.constant 0.000000e+00 : f32
      %128 = vector.broadcast %cst_130 : f32 to vector<1x4xf32>
      %c161 = arith.constant 161 : index
      %c0_131 = arith.constant 0 : index
      %129 = vector.load %arg9[%c161, %c0_131] : memref<456x4xf32, #tpu.memory_space<vmem>>, vector<1x4xf32>
      tpu.vector_store %arg9[%c161, %c0_131], %128 {strides = array<i32>} : memref<456x4xf32, #tpu.memory_space<vmem>>, vector<1x4xf32>,
      %cst_132 = arith.constant 0.000000e+00 : f32
      %130 = vector.broadcast %cst_132 : f32 to vector<1x4xf32>
      %c168 = arith.constant 168 : index
      %c0_133 = arith.constant 0 : index
      %131 = vector.load %arg9[%c168, %c0_133] : memref<456x4xf32, #tpu.memory_space<vmem>>, vector<1x4xf32>
      tpu.vector_store %arg9[%c168, %c0_133], %130 {strides = array<i32>} : memref<456x4xf32, #tpu.memory_space<vmem>>, vector<1x4xf32>,
      %c0_134 = arith.constant 0 : index
      %c6 = arith.constant 6 : index
      %c0_135 = arith.constant 0 : index
      %c0_136 = arith.constant 0 : index
      %132 = vector.load %arg4[%c0_134, %c6, %c0_135, %c0_136] : memref<1x16x16x4xf32, #tpu.memory_space<vmem>>, vector<1x1x16x4xf32>
      %133 = vector.shape_cast %132 : vector<1x1x16x4xf32> to vector<16x4xf32>
      %c169 = arith.constant 169 : index
      %c0_137 = arith.constant 0 : index
      %134 = vector.load %arg9[%c169, %c0_137] : memref<456x4xf32, #tpu.memory_space<vmem>>, vector<16x4xf32>
      tpu.vector_store %arg9[%c169, %c0_137], %133 {strides = array<i32>} : memref<456x4xf32, #tpu.memory_space<vmem>>, vector<16x4xf32>,
      %cst_138 = arith.constant 0.000000e+00 : f32
      %135 = vector.broadcast %cst_138 : f32 to vector<1x4xf32>
      %c185 = arith.constant 185 : index
      %c0_139 = arith.constant 0 : index
      %136 = vector.load %arg9[%c185, %c0_139] : memref<456x4xf32, #tpu.memory_space<vmem>>, vector<1x4xf32>
      tpu.vector_store %arg9[%c185, %c0_139], %135 {strides = array<i32>} : memref<456x4xf32, #tpu.memory_space<vmem>>, vector<1x4xf32>,
      %cst_140 = arith.constant 0.000000e+00 : f32
      %137 = vector.broadcast %cst_140 : f32 to vector<1x4xf32>
      %c192 = arith.constant 192 : index
      %c0_141 = arith.constant 0 : index
      %138 = vector.load %arg9[%c192, %c0_141] : memref<456x4xf32, #tpu.memory_space<vmem>>, vector<1x4xf32>
      tpu.vector_store %arg9[%c192, %c0_141], %137 {strides = array<i32>} : memref<456x4xf32, #tpu.memory_space<vmem>>, vector<1x4xf32>,
      %c0_142 = arith.constant 0 : index
      %c7 = arith.constant 7 : index
      %c0_143 = arith.constant 0 : index
      %c0_144 = arith.constant 0 : index
      %139 = vector.load %arg4[%c0_142, %c7, %c0_143, %c0_144] : memref<1x16x16x4xf32, #tpu.memory_space<vmem>>, vector<1x1x16x4xf32>
      %140 = vector.shape_cast %139 : vector<1x1x16x4xf32> to vector<16x4xf32>
      %c193 = arith.constant 193 : index
      %c0_145 = arith.constant 0 : index
      %141 = vector.load %arg9[%c193, %c0_145] : memref<456x4xf32, #tpu.memory_space<vmem>>, vector<16x4xf32>
      tpu.vector_store %arg9[%c193, %c0_145], %140 {strides = array<i32>} : memref<456x4xf32, #tpu.memory_space<vmem>>, vector<16x4xf32>,
      %cst_146 = arith.constant 0.000000e+00 : f32
      %142 = vector.broadcast %cst_146 : f32 to vector<1x4xf32>
      %c209 = arith.constant 209 : index
      %c0_147 = arith.constant 0 : index
      %143 = vector.load %arg9[%c209, %c0_147] : memref<456x4xf32, #tpu.memory_space<vmem>>, vector<1x4xf32>
      tpu.vector_store %arg9[%c209, %c0_147], %142 {strides = array<i32>} : memref<456x4xf32, #tpu.memory_space<vmem>>, vector<1x4xf32>,
      %cst_148 = arith.constant 0.000000e+00 : f32
      %144 = vector.broadcast %cst_148 : f32 to vector<1x4xf32>
      %c216 = arith.constant 216 : index
      %c0_149 = arith.constant 0 : index
      %145 = vector.load %arg9[%c216, %c0_149] : memref<456x4xf32, #tpu.memory_space<vmem>>, vector<1x4xf32>
      tpu.vector_store %arg9[%c216, %c0_149], %144 {strides = array<i32>} : memref<456x4xf32, #tpu.memory_space<vmem>>, vector<1x4xf32>,
      %c0_150 = arith.constant 0 : index
      %c8 = arith.constant 8 : index
      %c0_151 = arith.constant 0 : index
      %c0_152 = arith.constant 0 : index
      %146 = vector.load %arg4[%c0_150, %c8, %c0_151, %c0_152] : memref<1x16x16x4xf32, #tpu.memory_space<vmem>>, vector<1x1x16x4xf32>
      %147 = vector.shape_cast %146 : vector<1x1x16x4xf32> to vector<16x4xf32>
      %c217 = arith.constant 217 : index
      %c0_153 = arith.constant 0 : index
      %148 = vector.load %arg9[%c217, %c0_153] : memref<456x4xf32, #tpu.memory_space<vmem>>, vector<16x4xf32>
      tpu.vector_store %arg9[%c217, %c0_153], %147 {strides = array<i32>} : memref<456x4xf32, #tpu.memory_space<vmem>>, vector<16x4xf32>,
      %cst_154 = arith.constant 0.000000e+00 : f32
      %149 = vector.broadcast %cst_154 : f32 to vector<1x4xf32>
      %c233 = arith.constant 233 : index
      %c0_155 = arith.constant 0 : index
      %150 = vector.load %arg9[%c233, %c0_155] : memref<456x4xf32, #tpu.memory_space<vmem>>, vector<1x4xf32>
      tpu.vector_store %arg9[%c233, %c0_155], %149 {strides = array<i32>} : memref<456x4xf32, #tpu.memory_space<vmem>>, vector<1x4xf32>,
      %cst_156 = arith.constant 0.000000e+00 : f32
      %151 = vector.broadcast %cst_156 : f32 to vector<1x4xf32>
      %c240 = arith.constant 240 : index
      %c0_157 = arith.constant 0 : index
      %152 = vector.load %arg9[%c240, %c0_157] : memref<456x4xf32, #tpu.memory_space<vmem>>, vector<1x4xf32>
      tpu.vector_store %arg9[%c240, %c0_157], %151 {strides = array<i32>} : memref<456x4xf32, #tpu.memory_space<vmem>>, vector<1x4xf32>,
      %c0_158 = arith.constant 0 : index
      %c9 = arith.constant 9 : index
      %c0_159 = arith.constant 0 : index
      %c0_160 = arith.constant 0 : index
      %153 = vector.load %arg4[%c0_158, %c9, %c0_159, %c0_160] : memref<1x16x16x4xf32, #tpu.memory_space<vmem>>, vector<1x1x16x4xf32>
      %154 = vector.shape_cast %153 : vector<1x1x16x4xf32> to vector<16x4xf32>
      %c241 = arith.constant 241 : index
      %c0_161 = arith.constant 0 : index
      %155 = vector.load %arg9[%c241, %c0_161] : memref<456x4xf32, #tpu.memory_space<vmem>>, vector<16x4xf32>
      tpu.vector_store %arg9[%c241, %c0_161], %154 {strides = array<i32>} : memref<456x4xf32, #tpu.memory_space<vmem>>, vector<16x4xf32>,
      %cst_162 = arith.constant 0.000000e+00 : f32
      %156 = vector.broadcast %cst_162 : f32 to vector<1x4xf32>
      %c257 = arith.constant 257 : index
      %c0_163 = arith.constant 0 : index
      %157 = vector.load %arg9[%c257, %c0_163] : memref<456x4xf32, #tpu.memory_space<vmem>>, vector<1x4xf32>
      tpu.vector_store %arg9[%c257, %c0_163], %156 {strides = array<i32>} : memref<456x4xf32, #tpu.memory_space<vmem>>, vector<1x4xf32>,
      %cst_164 = arith.constant 0.000000e+00 : f32
      %158 = vector.broadcast %cst_164 : f32 to vector<1x4xf32>
      %c264 = arith.constant 264 : index
      %c0_165 = arith.constant 0 : index
      %159 = vector.load %arg9[%c264, %c0_165] : memref<456x4xf32, #tpu.memory_space<vmem>>, vector<1x4xf32>
      tpu.vector_store %arg9[%c264, %c0_165], %158 {strides = array<i32>} : memref<456x4xf32, #tpu.memory_space<vmem>>, vector<1x4xf32>,
      %c0_166 = arith.constant 0 : index
      %c10 = arith.constant 10 : index
      %c0_167 = arith.constant 0 : index
      %c0_168 = arith.constant 0 : index
      %160 = vector.load %arg4[%c0_166, %c10, %c0_167, %c0_168] : memref<1x16x16x4xf32, #tpu.memory_space<vmem>>, vector<1x1x16x4xf32>
      %161 = vector.shape_cast %160 : vector<1x1x16x4xf32> to vector<16x4xf32>
      %c265 = arith.constant 265 : index
      %c0_169 = arith.constant 0 : index
      %162 = vector.load %arg9[%c265, %c0_169] : memref<456x4xf32, #tpu.memory_space<vmem>>, vector<16x4xf32>
      tpu.vector_store %arg9[%c265, %c0_169], %161 {strides = array<i32>} : memref<456x4xf32, #tpu.memory_space<vmem>>, vector<16x4xf32>,
      %cst_170 = arith.constant 0.000000e+00 : f32
      %163 = vector.broadcast %cst_170 : f32 to vector<1x4xf32>
      %c281 = arith.constant 281 : index
      %c0_171 = arith.constant 0 : index
      %164 = vector.load %arg9[%c281, %c0_171] : memref<456x4xf32, #tpu.memory_space<vmem>>, vector<1x4xf32>
      tpu.vector_store %arg9[%c281, %c0_171], %163 {strides = array<i32>} : memref<456x4xf32, #tpu.memory_space<vmem>>, vector<1x4xf32>,
      %cst_172 = arith.constant 0.000000e+00 : f32
      %165 = vector.broadcast %cst_172 : f32 to vector<1x4xf32>
      %c288 = arith.constant 288 : index
      %c0_173 = arith.constant 0 : index
      %166 = vector.load %arg9[%c288, %c0_173] : memref<456x4xf32, #tpu.memory_space<vmem>>, vector<1x4xf32>
      tpu.vector_store %arg9[%c288, %c0_173], %165 {strides = array<i32>} : memref<456x4xf32, #tpu.memory_space<vmem>>, vector<1x4xf32>,
      %c0_174 = arith.constant 0 : index
      %c11 = arith.constant 11 : index
      %c0_175 = arith.constant 0 : index
      %c0_176 = arith.constant 0 : index
      %167 = vector.load %arg4[%c0_174, %c11, %c0_175, %c0_176] : memref<1x16x16x4xf32, #tpu.memory_space<vmem>>, vector<1x1x16x4xf32>
      %168 = vector.shape_cast %167 : vector<1x1x16x4xf32> to vector<16x4xf32>
      %c289 = arith.constant 289 : index
      %c0_177 = arith.constant 0 : index
      %169 = vector.load %arg9[%c289, %c0_177] : memref<456x4xf32, #tpu.memory_space<vmem>>, vector<16x4xf32>
      tpu.vector_store %arg9[%c289, %c0_177], %168 {strides = array<i32>} : memref<456x4xf32, #tpu.memory_space<vmem>>, vector<16x4xf32>,
      %cst_178 = arith.constant 0.000000e+00 : f32
      %170 = vector.broadcast %cst_178 : f32 to vector<1x4xf32>
      %c305 = arith.constant 305 : index
      %c0_179 = arith.constant 0 : index
      %171 = vector.load %arg9[%c305, %c0_179] : memref<456x4xf32, #tpu.memory_space<vmem>>, vector<1x4xf32>
      tpu.vector_store %arg9[%c305, %c0_179], %170 {strides = array<i32>} : memref<456x4xf32, #tpu.memory_space<vmem>>, vector<1x4xf32>,
      %cst_180 = arith.constant 0.000000e+00 : f32
      %172 = vector.broadcast %cst_180 : f32 to vector<1x4xf32>
      %c312 = arith.constant 312 : index
      %c0_181 = arith.constant 0 : index
      %173 = vector.load %arg9[%c312, %c0_181] : memref<456x4xf32, #tpu.memory_space<vmem>>, vector<1x4xf32>
      tpu.vector_store %arg9[%c312, %c0_181], %172 {strides = array<i32>} : memref<456x4xf32, #tpu.memory_space<vmem>>, vector<1x4xf32>,
      %c0_182 = arith.constant 0 : index
      %c12 = arith.constant 12 : index
      %c0_183 = arith.constant 0 : index
      %c0_184 = arith.constant 0 : index
      %174 = vector.load %arg4[%c0_182, %c12, %c0_183, %c0_184] : memref<1x16x16x4xf32, #tpu.memory_space<vmem>>, vector<1x1x16x4xf32>
      %175 = vector.shape_cast %174 : vector<1x1x16x4xf32> to vector<16x4xf32>
      %c313 = arith.constant 313 : index
      %c0_185 = arith.constant 0 : index
      %176 = vector.load %arg9[%c313, %c0_185] : memref<456x4xf32, #tpu.memory_space<vmem>>, vector<16x4xf32>
      tpu.vector_store %arg9[%c313, %c0_185], %175 {strides = array<i32>} : memref<456x4xf32, #tpu.memory_space<vmem>>, vector<16x4xf32>,
      %cst_186 = arith.constant 0.000000e+00 : f32
      %177 = vector.broadcast %cst_186 : f32 to vector<1x4xf32>
      %c329 = arith.constant 329 : index
      %c0_187 = arith.constant 0 : index
      %178 = vector.load %arg9[%c329, %c0_187] : memref<456x4xf32, #tpu.memory_space<vmem>>, vector<1x4xf32>
      tpu.vector_store %arg9[%c329, %c0_187], %177 {strides = array<i32>} : memref<456x4xf32, #tpu.memory_space<vmem>>, vector<1x4xf32>,
      %cst_188 = arith.constant 0.000000e+00 : f32
      %179 = vector.broadcast %cst_188 : f32 to vector<1x4xf32>
      %c336 = arith.constant 336 : index
      %c0_189 = arith.constant 0 : index
      %180 = vector.load %arg9[%c336, %c0_189] : memref<456x4xf32, #tpu.memory_space<vmem>>, vector<1x4xf32>
      tpu.vector_store %arg9[%c336, %c0_189], %179 {strides = array<i32>} : memref<456x4xf32, #tpu.memory_space<vmem>>, vector<1x4xf32>,
      %c0_190 = arith.constant 0 : index
      %c13 = arith.constant 13 : index
      %c0_191 = arith.constant 0 : index
      %c0_192 = arith.constant 0 : index
      %181 = vector.load %arg4[%c0_190, %c13, %c0_191, %c0_192] : memref<1x16x16x4xf32, #tpu.memory_space<vmem>>, vector<1x1x16x4xf32>
      %182 = vector.shape_cast %181 : vector<1x1x16x4xf32> to vector<16x4xf32>
      %c337 = arith.constant 337 : index
      %c0_193 = arith.constant 0 : index
      %183 = vector.load %arg9[%c337, %c0_193] : memref<456x4xf32, #tpu.memory_space<vmem>>, vector<16x4xf32>
      tpu.vector_store %arg9[%c337, %c0_193], %182 {strides = array<i32>} : memref<456x4xf32, #tpu.memory_space<vmem>>, vector<16x4xf32>,
      %cst_194 = arith.constant 0.000000e+00 : f32
      %184 = vector.broadcast %cst_194 : f32 to vector<1x4xf32>
      %c353 = arith.constant 353 : index
      %c0_195 = arith.constant 0 : index
      %185 = vector.load %arg9[%c353, %c0_195] : memref<456x4xf32, #tpu.memory_space<vmem>>, vector<1x4xf32>
      tpu.vector_store %arg9[%c353, %c0_195], %184 {strides = array<i32>} : memref<456x4xf32, #tpu.memory_space<vmem>>, vector<1x4xf32>,
      %cst_196 = arith.constant 0.000000e+00 : f32
      %186 = vector.broadcast %cst_196 : f32 to vector<1x4xf32>
      %c360 = arith.constant 360 : index
      %c0_197 = arith.constant 0 : index
      %187 = vector.load %arg9[%c360, %c0_197] : memref<456x4xf32, #tpu.memory_space<vmem>>, vector<1x4xf32>
      tpu.vector_store %arg9[%c360, %c0_197], %186 {strides = array<i32>} : memref<456x4xf32, #tpu.memory_space<vmem>>, vector<1x4xf32>,
      %c0_198 = arith.constant 0 : index
      %c14 = arith.constant 14 : index
      %c0_199 = arith.constant 0 : index
      %c0_200 = arith.constant 0 : index
      %188 = vector.load %arg4[%c0_198, %c14, %c0_199, %c0_200] : memref<1x16x16x4xf32, #tpu.memory_space<vmem>>, vector<1x1x16x4xf32>
      %189 = vector.shape_cast %188 : vector<1x1x16x4xf32> to vector<16x4xf32>
      %c361 = arith.constant 361 : index
      %c0_201 = arith.constant 0 : index
      %190 = vector.load %arg9[%c361, %c0_201] : memref<456x4xf32, #tpu.memory_space<vmem>>, vector<16x4xf32>
      tpu.vector_store %arg9[%c361, %c0_201], %189 {strides = array<i32>} : memref<456x4xf32, #tpu.memory_space<vmem>>, vector<16x4xf32>,
      %cst_202 = arith.constant 0.000000e+00 : f32
      %191 = vector.broadcast %cst_202 : f32 to vector<1x4xf32>
      %c377 = arith.constant 377 : index
      %c0_203 = arith.constant 0 : index
      %192 = vector.load %arg9[%c377, %c0_203] : memref<456x4xf32, #tpu.memory_space<vmem>>, vector<1x4xf32>
      tpu.vector_store %arg9[%c377, %c0_203], %191 {strides = array<i32>} : memref<456x4xf32, #tpu.memory_space<vmem>>, vector<1x4xf32>,
      %cst_204 = arith.constant 0.000000e+00 : f32
      %193 = vector.broadcast %cst_204 : f32 to vector<1x4xf32>
      %c384 = arith.constant 384 : index
      %c0_205 = arith.constant 0 : index
      %194 = vector.load %arg9[%c384, %c0_205] : memref<456x4xf32, #tpu.memory_space<vmem>>, vector<1x4xf32>
      tpu.vector_store %arg9[%c384, %c0_205], %193 {strides = array<i32>} : memref<456x4xf32, #tpu.memory_space<vmem>>, vector<1x4xf32>,
      %c0_206 = arith.constant 0 : index
      %c15 = arith.constant 15 : index
      %c0_207 = arith.constant 0 : index
      %c0_208 = arith.constant 0 : index
      %195 = vector.load %arg4[%c0_206, %c15, %c0_207, %c0_208] : memref<1x16x16x4xf32, #tpu.memory_space<vmem>>, vector<1x1x16x4xf32>
      %196 = vector.shape_cast %195 : vector<1x1x16x4xf32> to vector<16x4xf32>
      %c385 = arith.constant 385 : index
      %c0_209 = arith.constant 0 : index
      %197 = vector.load %arg9[%c385, %c0_209] : memref<456x4xf32, #tpu.memory_space<vmem>>, vector<16x4xf32>
      tpu.vector_store %arg9[%c385, %c0_209], %196 {strides = array<i32>} : memref<456x4xf32, #tpu.memory_space<vmem>>, vector<16x4xf32>,
      %cst_210 = arith.constant 0.000000e+00 : f32
      %198 = vector.broadcast %cst_210 : f32 to vector<1x4xf32>
      %c401 = arith.constant 401 : index
      %c0_211 = arith.constant 0 : index
      %199 = vector.load %arg9[%c401, %c0_211] : memref<456x4xf32, #tpu.memory_space<vmem>>, vector<1x4xf32>
      tpu.vector_store %arg9[%c401, %c0_211], %198 {strides = array<i32>} : memref<456x4xf32, #tpu.memory_space<vmem>>, vector<1x4xf32>,
    } else {
    }
    %c0_2 = arith.constant 0 : index
    %c0_3 = arith.constant 0 : index
    %13 = vector.load %arg6[%c0_2, %c0_3] : memref<1x4xf32, #tpu.memory_space<vmem>>, vector<1x4xf32>
    %14 = vector.shape_cast %13 : vector<1x4xf32> to vector<4xf32>
    %c0_4 = arith.constant 0 : index
    %c0_5 = arith.constant 0 : index
    %15 = vector.load %arg7[%c0_4, %c0_5] : memref<1x4xf32, #tpu.memory_space<vmem>>, vector<1x4xf32>
    %16 = vector.shape_cast %15 : vector<1x4xf32> to vector<4xf32>
    %17 = vector.broadcast %7 : f32 to vector<4xf32>
    %18 = arith.mulf %17, %16 : vector<4xf32>
    %19 = arith.addf %14, %18 : vector<4xf32>
    %20 = vector.broadcast %5 : f32 to vector<4xf32>
    %21 = arith.mulf %20, %19 : vector<4xf32>
    %22 = arith.mulf %5, %1 : f32
    %cst = arith.constant 0.000000e+00 : f32
    %23 = vector.broadcast %cst : f32 to vector<384x4xf32>
    %c0_6 = arith.constant 0 : index
    %c0_7 = arith.constant 0 : index
    %24 = vector.load %arg9[%c0_6, %c0_7] : memref<456x4xf32, #tpu.memory_space<vmem>>, vector<384x4xf32>
    %c0_8 = arith.constant 0 : index
    %c0_9 = arith.constant 0 : index
    %c0_10 = arith.constant 0 : index
    %c0_11 = arith.constant 0 : index
    %25 = vector.load %arg5[%c0_8, %c0_9, %c0_10, %c0_11] : memref<3x3x4x4xf32, #tpu.memory_space<vmem>>, vector<1x1x4x4xf32>
    %26 = vector.shape_cast %25 : vector<1x1x4x4xf32> to vector<4x4xf32>
    %cst_12 = arith.constant dense<0.000000e+00> : vector<384x4xf32>
    %27 = tpu.matmul %24, %26, %cst_12 {dimension_numbers = #tpu.dot_dimension_numbers<[1], [0], [0], [1], [0, 0, 1, 1], [], []>} : vector<384x4xf32>, vector<4x4xf32>, vector<384x4xf32> -> vector<384x4xf32>
    %28 = arith.addf %23, %27 : vector<384x4xf32>
    %c1_13 = arith.constant 1 : index
    %c0_14 = arith.constant 0 : index
    %29 = vector.load %arg9[%c1_13, %c0_14] : memref<456x4xf32, #tpu.memory_space<vmem>>, vector<384x4xf32>
    %c0_15 = arith.constant 0 : index
    %c1_16 = arith.constant 1 : index
    %c0_17 = arith.constant 0 : index
    %c0_18 = arith.constant 0 : index
    %30 = vector.load %arg5[%c0_15, %c1_16, %c0_17, %c0_18] : memref<3x3x4x4xf32, #tpu.memory_space<vmem>>, vector<1x1x4x4xf32>
    %31 = vector.shape_cast %30 : vector<1x1x4x4xf32> to vector<4x4xf32>
    %cst_19 = arith.constant dense<0.000000e+00> : vector<384x4xf32>
    %32 = tpu.matmul %29, %31, %cst_19 {dimension_numbers = #tpu.dot_dimension_numbers<[1], [0], [0], [1], [0, 0, 1, 1], [], []>} : vector<384x4xf32>, vector<4x4xf32>, vector<384x4xf32> -> vector<384x4xf32>
    %33 = arith.addf %28, %32 : vector<384x4xf32>
    %c2_20 = arith.constant 2 : index
    %c0_21 = arith.constant 0 : index
    %34 = vector.load %arg9[%c2_20, %c0_21] : memref<456x4xf32, #tpu.memory_space<vmem>>, vector<384x4xf32>
    %c0_22 = arith.constant 0 : index
    %c2_23 = arith.constant 2 : index
    %c0_24 = arith.constant 0 : index
    %c0_25 = arith.constant 0 : index
    %35 = vector.load %arg5[%c0_22, %c2_23, %c0_24, %c0_25] : memref<3x3x4x4xf32, #tpu.memory_space<vmem>>, vector<1x1x4x4xf32>
    %36 = vector.shape_cast %35 : vector<1x1x4x4xf32> to vector<4x4xf32>
    %cst_26 = arith.constant dense<0.000000e+00> : vector<384x4xf32>
    %37 = tpu.matmul %34, %36, %cst_26 {dimension_numbers = #tpu.dot_dimension_numbers<[1], [0], [0], [1], [0, 0, 1, 1], [], []>} : vector<384x4xf32>, vector<4x4xf32>, vector<384x4xf32> -> vector<384x4xf32>
    %38 = arith.addf %33, %37 : vector<384x4xf32>
    %c24 = arith.constant 24 : index
    %c0_27 = arith.constant 0 : index
    %39 = vector.load %arg9[%c24, %c0_27] : memref<456x4xf32, #tpu.memory_space<vmem>>, vector<384x4xf32>
    %c1_28 = arith.constant 1 : index
    %c0_29 = arith.constant 0 : index
    %c0_30 = arith.constant 0 : index
    %c0_31 = arith.constant 0 : index
    %40 = vector.load %arg5[%c1_28, %c0_29, %c0_30, %c0_31] : memref<3x3x4x4xf32, #tpu.memory_space<vmem>>, vector<1x1x4x4xf32>
    %41 = vector.shape_cast %40 : vector<1x1x4x4xf32> to vector<4x4xf32>
    %cst_32 = arith.constant dense<0.000000e+00> : vector<384x4xf32>
    %42 = tpu.matmul %39, %41, %cst_32 {dimension_numbers = #tpu.dot_dimension_numbers<[1], [0], [0], [1], [0, 0, 1, 1], [], []>} : vector<384x4xf32>, vector<4x4xf32>, vector<384x4xf32> -> vector<384x4xf32>
    %43 = arith.addf %38, %42 : vector<384x4xf32>
    %c25 = arith.constant 25 : index
    %c0_33 = arith.constant 0 : index
    %44 = vector.load %arg9[%c25, %c0_33] : memref<456x4xf32, #tpu.memory_space<vmem>>, vector<384x4xf32>
    %c1_34 = arith.constant 1 : index
    %c1_35 = arith.constant 1 : index
    %c0_36 = arith.constant 0 : index
    %c0_37 = arith.constant 0 : index
    %45 = vector.load %arg5[%c1_34, %c1_35, %c0_36, %c0_37] : memref<3x3x4x4xf32, #tpu.memory_space<vmem>>, vector<1x1x4x4xf32>
    %46 = vector.shape_cast %45 : vector<1x1x4x4xf32> to vector<4x4xf32>
    %cst_38 = arith.constant dense<0.000000e+00> : vector<384x4xf32>
    %47 = tpu.matmul %44, %46, %cst_38 {dimension_numbers = #tpu.dot_dimension_numbers<[1], [0], [0], [1], [0, 0, 1, 1], [], []>} : vector<384x4xf32>, vector<4x4xf32>, vector<384x4xf32> -> vector<384x4xf32>
    %48 = arith.addf %43, %47 : vector<384x4xf32>
    %c26 = arith.constant 26 : index
    %c0_39 = arith.constant 0 : index
    %49 = vector.load %arg9[%c26, %c0_39] : memref<456x4xf32, #tpu.memory_space<vmem>>, vector<384x4xf32>
    %c1_40 = arith.constant 1 : index
    %c2_41 = arith.constant 2 : index
    %c0_42 = arith.constant 0 : index
    %c0_43 = arith.constant 0 : index
    %50 = vector.load %arg5[%c1_40, %c2_41, %c0_42, %c0_43] : memref<3x3x4x4xf32, #tpu.memory_space<vmem>>, vector<1x1x4x4xf32>
    %51 = vector.shape_cast %50 : vector<1x1x4x4xf32> to vector<4x4xf32>
    %cst_44 = arith.constant dense<0.000000e+00> : vector<384x4xf32>
    %52 = tpu.matmul %49, %51, %cst_44 {dimension_numbers = #tpu.dot_dimension_numbers<[1], [0], [0], [1], [0, 0, 1, 1], [], []>} : vector<384x4xf32>, vector<4x4xf32>, vector<384x4xf32> -> vector<384x4xf32>
    %53 = arith.addf %48, %52 : vector<384x4xf32>
    %c48 = arith.constant 48 : index
    %c0_45 = arith.constant 0 : index
    %54 = vector.load %arg9[%c48, %c0_45] : memref<456x4xf32, #tpu.memory_space<vmem>>, vector<384x4xf32>
    %c2_46 = arith.constant 2 : index
    %c0_47 = arith.constant 0 : index
    %c0_48 = arith.constant 0 : index
    %c0_49 = arith.constant 0 : index
    %55 = vector.load %arg5[%c2_46, %c0_47, %c0_48, %c0_49] : memref<3x3x4x4xf32, #tpu.memory_space<vmem>>, vector<1x1x4x4xf32>
    %56 = vector.shape_cast %55 : vector<1x1x4x4xf32> to vector<4x4xf32>
    %cst_50 = arith.constant dense<0.000000e+00> : vector<384x4xf32>
    %57 = tpu.matmul %54, %56, %cst_50 {dimension_numbers = #tpu.dot_dimension_numbers<[1], [0], [0], [1], [0, 0, 1, 1], [], []>} : vector<384x4xf32>, vector<4x4xf32>, vector<384x4xf32> -> vector<384x4xf32>
    %58 = arith.addf %53, %57 : vector<384x4xf32>
    %c49 = arith.constant 49 : index
    %c0_51 = arith.constant 0 : index
    %59 = vector.load %arg9[%c49, %c0_51] : memref<456x4xf32, #tpu.memory_space<vmem>>, vector<384x4xf32>
    %c2_52 = arith.constant 2 : index
    %c1_53 = arith.constant 1 : index
    %c0_54 = arith.constant 0 : index
    %c0_55 = arith.constant 0 : index
    %60 = vector.load %arg5[%c2_52, %c1_53, %c0_54, %c0_55] : memref<3x3x4x4xf32, #tpu.memory_space<vmem>>, vector<1x1x4x4xf32>
    %61 = vector.shape_cast %60 : vector<1x1x4x4xf32> to vector<4x4xf32>
    %cst_56 = arith.constant dense<0.000000e+00> : vector<384x4xf32>
    %62 = tpu.matmul %59, %61, %cst_56 {dimension_numbers = #tpu.dot_dimension_numbers<[1], [0], [0], [1], [0, 0, 1, 1], [], []>} : vector<384x4xf32>, vector<4x4xf32>, vector<384x4xf32> -> vector<384x4xf32>
    %63 = arith.addf %58, %62 : vector<384x4xf32>
    %c50 = arith.constant 50 : index
    %c0_57 = arith.constant 0 : index
    %64 = vector.load %arg9[%c50, %c0_57] : memref<456x4xf32, #tpu.memory_space<vmem>>, vector<384x4xf32>
    %c2_58 = arith.constant 2 : index
    %c2_59 = arith.constant 2 : index
    %c0_60 = arith.constant 0 : index
    %c0_61 = arith.constant 0 : index
    %65 = vector.load %arg5[%c2_58, %c2_59, %c0_60, %c0_61] : memref<3x3x4x4xf32, #tpu.memory_space<vmem>>, vector<1x1x4x4xf32>
    %66 = vector.shape_cast %65 : vector<1x1x4x4xf32> to vector<4x4xf32>
    %cst_62 = arith.constant dense<0.000000e+00> : vector<384x4xf32>
    %67 = tpu.matmul %64, %66, %cst_62 {dimension_numbers = #tpu.dot_dimension_numbers<[1], [0], [0], [1], [0, 0, 1, 1], [], []>} : vector<384x4xf32>, vector<4x4xf32>, vector<384x4xf32> -> vector<384x4xf32>
    %68 = arith.addf %63, %67 : vector<384x4xf32>
    %69 = vector.shape_cast %68 : vector<384x4xf32> to vector<16x24x4xf32>
    %70 = vector.extract_strided_slice %69 {offsets = [0, 0, 0], sizes = [16, 16, 4], strides = [1, 1, 1]} : vector<16x24x4xf32> to vector<16x16x4xf32>
    %c0_63 = arith.constant 0 : index
    %c0_64 = arith.constant 0 : index
    %c0_65 = arith.constant 0 : index
    %c0_66 = arith.constant 0 : index
    %71 = vector.load %arg4[%c0_63, %c0_64, %c0_65, %c0_66] : memref<1x16x16x4xf32, #tpu.memory_space<vmem>>, vector<1x16x16x4xf32>
    %72 = vector.shape_cast %71 : vector<1x16x16x4xf32> to vector<16x16x4xf32>
    %73 = vector.broadcast %3 : f32 to vector<16x16x4xf32>
    %74 = arith.mulf %73, %72 : vector<16x16x4xf32>
    %75 = vector.broadcast %22 : f32 to vector<16x16x4xf32>
    %76 = arith.mulf %75, %70 : vector<16x16x4xf32>
    %77 = arith.addf %74, %76 : vector<16x16x4xf32>
    %78 = vector.shape_cast %21 : vector<4xf32> to vector<1x1x4xf32>
    %79 = vector.broadcast %78 : vector<1x1x4xf32> to vector<16x16x4xf32>
    %80 = arith.addf %77, %79 : vector<16x16x4xf32>
    %c0_67 = arith.constant 0 : index
    %c0_68 = arith.constant 0 : index
    %c0_69 = arith.constant 0 : index
    %c0_70 = arith.constant 0 : index
    %81 = vector.load %arg8[%c0_67, %c0_68, %c0_69, %c0_70] : memref<1x16x16x4xf32, #tpu.memory_space<vmem>>, vector<1x16x16x4xf32>
    %82 = vector.shape_cast %81 : vector<1x16x16x4xf32> to vector<16x16x4xf32>
    %83 = vector.shape_cast %80 : vector<16x16x4xf32> to vector<1x16x16x4xf32>
    tpu.vector_store %arg8[%c0_67, %c0_68, %c0_69, %c0_70], %83 {strides = array<i32>} : memref<1x16x16x4xf32, #tpu.memory_space<vmem>>, vector<1x16x16x4xf32>,
    return
  }
  func.func @transform_0(%arg0: i32, %arg1: i32, %arg2: i32) -> (i32, i32) {
    %c0_i32 = arith.constant 0 : i32
    %c0_i32_0 = arith.constant 0 : i32
    %c0_i32_1 = arith.constant 0 : i32
    return %c0_i32, %c0_i32_0 : i32, i32
  }
  func.func @transform_1(%arg0: i32, %arg1: i32, %arg2: i32) -> (i32, i32, i32, i32) {
    %c0_i32 = arith.constant 0 : i32
    %c0_i32_0 = arith.constant 0 : i32
    %c0_i32_1 = arith.constant 0 : i32
    %c0_i32_2 = arith.constant 0 : i32
    return %arg0, %c0_i32, %c0_i32_0, %c0_i32_1 : i32, i32, i32, i32
  }
  func.func @transform_2(%arg0: i32, %arg1: i32, %arg2: i32) -> (i32, i32, i32, i32) {
    %c0_i32 = arith.constant 0 : i32
    %c0_i32_0 = arith.constant 0 : i32
    %c0_i32_1 = arith.constant 0 : i32
    %c0_i32_2 = arith.constant 0 : i32
    return %c0_i32, %c0_i32_0, %c0_i32_1, %arg1 : i32, i32, i32, i32
  }
  func.func @transform_3(%arg0: i32, %arg1: i32, %arg2: i32) -> (i32, i32) {
    %c0_i32 = arith.constant 0 : i32
    %c0_i32_0 = arith.constant 0 : i32
    return %c0_i32, %arg1 : i32, i32
  }
  func.func @transform_4(%arg0: i32, %arg1: i32, %arg2: i32) -> (i32, i32) {
    %c0_i32 = arith.constant 0 : i32
    %c0_i32_0 = arith.constant 0 : i32
    return %c0_i32, %arg1 : i32, i32
  }
  func.func @transform_5(%arg0: i32, %arg1: i32, %arg2: i32) -> (i32, i32, i32, i32) {
    %c0_i32 = arith.constant 0 : i32
    %c0_i32_0 = arith.constant 0 : i32
    return %arg0, %arg2, %c0_i32, %arg1 : i32, i32, i32, i32
  }
}

</mosaic_0001>

<llo_original>
// kernel: tpu_custom_call.1
$region0: #{tpu_custom_call.1}
  #allocation0 [shape = 'u32[]', space=smem, size = 0x4, offset = 0x4, fixed_abs, tag = 'smem constant byte address 0x4 - core index']
  #allocation1 [shape = 'u32[144,128]{1,0:T(1,128)}', space=vmem, size = 0x12000, scoped, tag = 'internal scratch']
  #allocation2 [shape = 'f32[456,4]{1,0:T(8,128)}', space=vmem, size = 0x39000, scoped, tag = 'scratch operand']
  %s0 = inlined_call_operand.vmem [shape: f32[2,4], index: 0, kind: input, shape index: {}]
  %s1 = inlined_call_operand.vmem [shape: f32[2,16,16,4], index: 1, kind: input, shape index: {}]
  %s2 = inlined_call_operand.vmem [shape: f32[3,3,4,4], index: 2, kind: input, shape index: {}]
  %s3 = inlined_call_operand.vmem [shape: f32[1,4], index: 3, kind: input, shape index: {}]
  %s4 = inlined_call_operand.vmem [shape: f32[1,4], index: 4, kind: input, shape index: {}]
  %s5 = inlined_call_operand.vmem [shape: f32[2,16,16,4], index: 5, kind: output, shape index: {}]
  %s6 = sld [smem:[#allocation0]]
  $region61: #{tpu_custom_call.1} parent=0
    _
  %s8 = ssub.s32 1, %s6
  %s9 = scalar_select 0, %s8, %s6
  $region1: #{tpu_custom_call.1} parent=0
    #allocation3 [shape = 'u8[1024]{0}', space=smem, size = 0x400, scoped, tag = 'input window, operand 0, single buffered']
    #allocation4 [shape = 's32[2]{0}', space=sflag, size = 0x8, scoped, tag = 'scoped memory for tpu_custom_call.1']
    %10 = vsyncpa [#allocation4], 0
    loop: start=0, step=1, limit=4
    $region2: #{tpu_custom_call.1} parent=1 // loop_pre_header
      _
    $region3: #{tpu_custom_call.1} parent=1 // loop_header
      %s12 = sphi 0, %s16
      %p13 = scmp.ge.s32.totalorder %s12, 4
      %s19 = sphi 0, %s38
      %s20 = sphi 0, %s34
      %s21 = sphi 0, %s30
      %s22 = sphi 0, %s19
      %s23 = sphi 0, %s20
      %s24 = sphi 0, %s21
      %s25 = sphi 0, %s22
      %s26 = sphi 0, %s23
      %s27 = sphi 0, %s24
      %s39 = sphi 0, %s39
      %s41 = sphi 0, %s39
      %s42 = sphi 0, %s41
      %s56 = sphi 0, %s42
      %s62 = sphi 0, %s64
      %s65 = sphi 0, %s62
      %s66 = sphi 0, %s65
      %s82 = sphi 0, %s66
      %s88 = sphi 0, %s90
      %s91 = sphi 0, %s88
      %s92 = sphi 0, %s91
      %s108 = sphi 0, %s92
      %s114 = sphi 0, %s116
      %s117 = sphi 0, %s114
      %s118 = sphi 0, %s117
      %s134 = sphi 0, %s118
      %s140 = sphi 0, %s142
      %s143 = sphi 0, %s140
      %s144 = sphi 0, %s143
      %s160 = sphi 0, %s144
      %s170 = sphi 0, %s172
      %s173 = sphi 0, %s170
      %s174 = sphi 0, %s173
      %s190 = sphi 0, %s174
    $region4: #{tpu_custom_call.1} parent=1 // loop_header_branch
      %15 = sbr.rel (%p13) target = $region8
    $region5: #{tpu_custom_call.1} parent=1 // loop_body
      %s17 = ssub.s32 %s12, 1
      %s18 = ssub.s32 %s12, 2
      %s28 = sadd.s32 1, %s21
      %p29 = scmp.ge.s32.totalorder %s28, 1
      %s30 = scalar_select %p29, 0, %s28
      %s31 = sadd.s32 1, %s20
      %s32 = scalar_select %p29, %s31, %s20
      %p33 = scmp.ge.s32.totalorder %s32, 1
      %s34 = scalar_select %p33, 0, %s32
      %s35 = sadd.s32 1, %s19
      %s36 = scalar_select %p33, %s35, %s19
      %p37 = scmp.ge.s32.totalorder %s36, 2
      %s38 = scalar_select %p37, 0, %s36
      %s40 = sadd.s32 %s39, 1
      %p43 = scmp.eq.s32.totalorder %s12, 1
      %p44 = scmp.ne.s32.totalorder %s39, %s41
      %p45 = scmp.eq.s32.totalorder %s12, 0
      %p46 = por %p44, %p45
      %p47 = scmp.ne.s32.totalorder %s39, %s41
      %p48 = scmp.eq.s32.totalorder %s17, 1
      %p49 = por %p47, %p48
      %p50 = scmp.ne.s32.totalorder %s41, %s42
      %p51 = scmp.eq.s32.totalorder %s17, 0
      %p52 = por %p50, %p51
      %p53 = scmp.ne.s32.totalorder %s41, %s42
      %p54 = scmp.eq.s32.totalorder %s18, 1
      %p55 = por %p53, %p54
      %p57 = scmp.ne.s32.totalorder %s42, %s56
      %p58 = scmp.eq.s32.totalorder %s18, 0
      %p59 = por %p57, %p58
      %s60 = ssub.s32 %s19, %s38
      %p61 = scmp.eq.s32.totalorder %s60, 0
      %s63 = sadd.s32 %s62, 1
      %s64 = scalar_select %p61, %s62, %s63
      %p67 = pneg %p61
      %p68 = scmp.eq.s32.totalorder %s12, 1
      %p69 = por %p67, %p68
      %p70 = scmp.ne.s32.totalorder %s62, %s65
      %p71 = scmp.eq.s32.totalorder %s12, 0
      %p72 = por %p70, %p71
      %p73 = scmp.ne.s32.totalorder %s62, %s65
      %p74 = scmp.eq.s32.totalorder %s17, 1
      %p75 = por %p73, %p74
      %p76 = scmp.ne.s32.totalorder %s65, %s66
      %p77 = scmp.eq.s32.totalorder %s17, 0
      %p78 = por %p76, %p77
      %p79 = scmp.ne.s32.totalorder %s65, %s66
      %p80 = scmp.eq.s32.totalorder %s18, 1
      %p81 = por %p79, %p80
      %p83 = scmp.ne.s32.totalorder %s66, %s82
      %p84 = scmp.eq.s32.totalorder %s18, 0
      %p85 = por %p83, %p84
      %s86 = ssub.s32 %s20, %s34
      %p87 = scmp.eq.s32.totalorder %s86, 0
      %s89 = sadd.s32 %s88, 1
      %s90 = scalar_select %p87, %s88, %s89
      %p93 = pneg %p87
      %p94 = scmp.eq.s32.totalorder %s12, 1
      %p95 = por %p93, %p94
      %p96 = scmp.ne.s32.totalorder %s88, %s91
      %p97 = scmp.eq.s32.totalorder %s12, 0
      %p98 = por %p96, %p97
      %p99 = scmp.ne.s32.totalorder %s88, %s91
      %p100 = scmp.eq.s32.totalorder %s17, 1
      %p101 = por %p99, %p100
      %p102 = scmp.ne.s32.totalorder %s91, %s92
      %p103 = scmp.eq.s32.totalorder %s17, 0
      %p104 = por %p102, %p103
      %p105 = scmp.ne.s32.totalorder %s91, %s92
      %p106 = scmp.eq.s32.totalorder %s18, 1
      %p107 = por %p105, %p106
      %p109 = scmp.ne.s32.totalorder %s92, %s108
      %p110 = scmp.eq.s32.totalorder %s18, 0
      %p111 = por %p109, %p110
      %s112 = ssub.s32 %s20, %s34
      %p113 = scmp.eq.s32.totalorder %s112, 0
      %s115 = sadd.s32 %s114, 1
      %s116 = scalar_select %p113, %s114, %s115
      %p119 = pneg %p113
      %p120 = scmp.eq.s32.totalorder %s12, 1
      %p121 = por %p119, %p120
      %p122 = scmp.ne.s32.totalorder %s114, %s117
      %p123 = scmp.eq.s32.totalorder %s12, 0
      %p124 = por %p122, %p123
      %p125 = scmp.ne.s32.totalorder %s114, %s117
      %p126 = scmp.eq.s32.totalorder %s17, 1
      %p127 = por %p125, %p126
      %p128 = scmp.ne.s32.totalorder %s117, %s118
      %p129 = scmp.eq.s32.totalorder %s17, 0
      %p130 = por %p128, %p129
      %p131 = scmp.ne.s32.totalorder %s117, %s118
      %p132 = scmp.eq.s32.totalorder %s18, 1
      %p133 = por %p131, %p132
      %p135 = scmp.ne.s32.totalorder %s118, %s134
      %p136 = scmp.eq.s32.totalorder %s18, 0
      %p137 = por %p135, %p136
      %s138 = ssub.s32 %s20, %s34
      %p139 = scmp.eq.s32.totalorder %s138, 0
      %s141 = sadd.s32 %s140, 1
      %s142 = scalar_select %p139, %s140, %s141
      %p145 = pneg %p139
      %p146 = scmp.eq.s32.totalorder %s12, 1
      %p147 = por %p145, %p146
      %p148 = scmp.ne.s32.totalorder %s140, %s143
      %p149 = scmp.eq.s32.totalorder %s12, 0
      %p150 = por %p148, %p149
      %p151 = scmp.ne.s32.totalorder %s140, %s143
      %p152 = scmp.eq.s32.totalorder %s17, 1
      %p153 = por %p151, %p152
      %p154 = scmp.ne.s32.totalorder %s143, %s144
      %p155 = scmp.eq.s32.totalorder %s17, 0
      %p156 = por %p154, %p155
      %p157 = scmp.ne.s32.totalorder %s143, %s144
      %p158 = scmp.eq.s32.totalorder %s18, 1
      %p159 = por %p157, %p158
      %p161 = scmp.ne.s32.totalorder %s144, %s160
      %p162 = scmp.eq.s32.totalorder %s18, 0
      %p163 = por %p161, %p162
      %s164 = ssub.s32 %s19, %s38
      %s165 = ssub.s32 %s21, %s30
      %s166 = sor.u32 %s164, %s165
      %s167 = ssub.s32 %s20, %s34
      %s168 = sor.u32 %s166, %s167
      %p169 = scmp.eq.s32.totalorder %s168, 0
      %s171 = sadd.s32 %s170, 1
      %s172 = scalar_select %p169, %s170, %s171
      %p175 = pneg %p169
      %p176 = scmp.eq.s32.totalorder %s12, 1
      %p177 = por %p175, %p176
      %p178 = scmp.ne.s32.totalorder %s170, %s173
      %p179 = scmp.eq.s32.totalorder %s12, 0
      %p180 = por %p178, %p179
      %p181 = scmp.ne.s32.totalorder %s170, %s173
      %p182 = scmp.eq.s32.totalorder %s17, 1
      %p183 = por %p181, %p182
      %p184 = scmp.ne.s32.totalorder %s173, %s174
      %p185 = scmp.eq.s32.totalorder %s17, 0
      %p186 = por %p184, %p185
      %p187 = scmp.ne.s32.totalorder %s173, %s174
      %p188 = scmp.eq.s32.totalorder %s18, 1
      %p189 = por %p187, %p188
      %p191 = scmp.ne.s32.totalorder %s174, %s190
      %p192 = scmp.eq.s32.totalorder %s18, 0
      %p193 = por %p191, %p192
      %p194 = scmp.le.s32.totalorder 1, %s12
      %p195 = scmp.lt.s32.totalorder %s12, 3
      %p196 = pnand %p194, %p195
      %p197 = pneg %p196
      // Predicated region
      $region9: #{tpu_custom_call.1} parent=5 // pred_check
        _
      $region10: #{tpu_custom_call.1} parent=5 // pred_check_branch
        %199 = sbr.rel (%p196) target = $region12
      $region11: #{tpu_custom_call.1} parent=5 // pred_region
        %s200 = ssub.s32 %s12, 1
        // Predicated region
        $region13: #{tpu_custom_call.1} parent=11 // pred_check
          %p201 = pneg %p52
        $region14: #{tpu_custom_call.1} parent=11 // pred_check_branch
          %203 = sbr.rel (%p201) target = $region16
        $region15: #{tpu_custom_call.1} parent=11 // pred_region
          %s205 = ssub.s32 32, 32
          %206 = vsyncadd [#allocation4], %s205
          %s208 = sshll.u32 %s0, 4
          %s209 = int_to_ptr.vmem [resolvable:$true] %s208
          %211 = dma.vmem_to_smem %s209, 32, [#allocation3], [#allocation4]
        $region16: #{tpu_custom_call.1} parent=11 // pred_fallthru
          _
        // Predicated region
        $region17: #{tpu_custom_call.1} parent=11 // pred_check
          %p212 = pneg %p104
        $region18: #{tpu_custom_call.1} parent=11 // pred_check_branch
          %214 = sbr.rel (%p212) target = $region20
        $region19: #{tpu_custom_call.1} parent=11 // pred_region
          %p215 = scmp.lt.s32.totalorder %s23, 0
          %s216 = scalar_select %p215, %s23, 0
          %s217 = smul.addr %s216, 4
          %s218 = scalar_lea.vmem %s2, %s217
        $region20: #{tpu_custom_call.1} parent=11 // pred_fallthru
          _
        // Predicated region
        $region21: #{tpu_custom_call.1} parent=11 // pred_check
          %p219 = pneg %p130
        $region22: #{tpu_custom_call.1} parent=11 // pred_check_branch
          %221 = sbr.rel (%p219) target = $region24
        $region23: #{tpu_custom_call.1} parent=11 // pred_region
          %p222 = scmp.lt.s32.totalorder %s23, 0
          %s223 = scalar_select %p222, %s23, 0
          %s224 = scalar_lea.vmem %s3, %s223
        $region24: #{tpu_custom_call.1} parent=11 // pred_fallthru
          _
        // Predicated region
        $region25: #{tpu_custom_call.1} parent=11 // pred_check
          %p225 = pneg %p156
        $region26: #{tpu_custom_call.1} parent=11 // pred_check_branch
          %227 = sbr.rel (%p225) target = $region28
        $region27: #{tpu_custom_call.1} parent=11 // pred_region
          %p228 = scmp.lt.s32.totalorder %s23, 0
          %s229 = scalar_select %p228, %s23, 0
          %s230 = scalar_lea.vmem %s4, %s229
        $region28: #{tpu_custom_call.1} parent=11 // pred_fallthru
          _
      $region12: #{tpu_custom_call.1} parent=5 // pred_fallthru
        _
      %p231 = scmp.lt.s32.totalorder %s12, 2
      // Predicated region
      $region29: #{tpu_custom_call.1} parent=5 // pred_check
        %p232 = pneg %p231
      $region30: #{tpu_custom_call.1} parent=5 // pred_check_branch
        %234 = sbr.rel (%p232) target = $region32
      $region31: #{tpu_custom_call.1} parent=5 // pred_region
        // Predicated region
        $region33: #{tpu_custom_call.1} parent=31 // pred_check
          %p235 = pneg %p72
        $region34: #{tpu_custom_call.1} parent=31 // pred_check_branch
          %237 = sbr.rel (%p235) target = $region36
        $region35: #{tpu_custom_call.1} parent=31 // pred_region
          %p238 = scmp.lt.s32.totalorder %s19, 1
          %s239 = scalar_select %p238, %s19, 1
          %s240 = smul.addr %s239, 32
          %s241 = smul.addr %s240, 8
          %s242 = scalar_lea.vmem %s1, %s241
        $region36: #{tpu_custom_call.1} parent=31 // pred_fallthru
          _
      $region32: #{tpu_custom_call.1} parent=5 // pred_fallthru
        _
      %p243 = scmp.le.s32.totalorder 1, %s12
      %p244 = scmp.lt.s32.totalorder %s12, 3
      %p245 = pnand %p243, %p244
      %p246 = pneg %p245
      // Predicated region
      $region37: #{tpu_custom_call.1} parent=5 // pred_check
        _
      $region38: #{tpu_custom_call.1} parent=5 // pred_check_branch
        %248 = sbr.rel (%p245) target = $region40
      $region39: #{tpu_custom_call.1} parent=5 // pred_region
        %s249 = ssub.s32 %s12, 1
        // Predicated region
        $region41: #{tpu_custom_call.1} parent=39 // pred_check
          %p250 = pneg %p52
        $region42: #{tpu_custom_call.1} parent=39 // pred_check_branch
          %252 = sbr.rel (%p250) target = $region44
        $region43: #{tpu_custom_call.1} parent=39 // pred_region
          %253 = dma.done [#allocation4], 32
        $region44: #{tpu_custom_call.1} parent=39 // pred_fallthru
          _
        %254 = sfence
        %p255 = pneg %p52
        %p256 = pneg %p49
        %p257 = scmp.lt.s32.totalorder %s22, 1
        %s258 = scalar_select %p257, %s22, 1
        %s259 = smul.addr %s258, 32
        %s260 = smul.addr %s259, 8
        %s261 = scalar_lea.vmem %s1, %s260
        %p262 = pneg %p78
        %p263 = pneg %p75
        %p264 = scmp.lt.s32.totalorder %s23, 0
        %s265 = scalar_select %p264, %s23, 0
        %s266 = smul.addr %s265, 4
        %s267 = scalar_lea.vmem %s2, %s266
        %p268 = pneg %p104
        %p269 = pneg %p101
        %p270 = scmp.lt.s32.totalorder %s23, 0
        %s271 = scalar_select %p270, %s23, 0
        %s272 = scalar_lea.vmem %s3, %s271
        %p273 = pneg %p130
        %p274 = pneg %p127
        %p275 = scmp.lt.s32.totalorder %s23, 0
        %s276 = scalar_select %p275, %s23, 0
        %s277 = scalar_lea.vmem %s4, %s276
        %p278 = pneg %p156
        %p279 = pneg %p153
        %p280 = pneg %p186
        %p281 = pneg %p183
        %s282 = smul.u32 16, %s24
        %p283 = scmp.lt.s32.totalorder %s22, 1
        %s284 = scalar_select %p283, %s22, 1
        %p285 = scmp.lt.s32.totalorder %s282, 15
        %s286 = scalar_select %p285, %s282, 15
        %p287 = scmp.lt.s32.totalorder %s23, 0
        %s288 = scalar_select %p287, %s23, 0
        %s289 = smul.addr %s286, 2
        %s290 = sadd.s32 %s288, %s289
        %s291 = smul.addr %s284, 32
        %s292 = sadd.s32 %s290, %s291
        %s293 = smul.addr %s292, 8
        %s294 = scalar_lea.vmem %s5, %s293
        %p295 = scmp.lt.s32.totalorder %s22, 1
        %s296 = scalar_select %p295, %s22, 1
        %s297 = smul.addr %s296, 32
        %s298 = smul.addr %s297, 8
        %s299 = scalar_lea.vmem %s1, %s298
        %p300 = scmp.lt.s32.totalorder %s23, 0
        %s301 = scalar_select %p300, %s23, 0
        %s302 = smul.addr %s301, 4
        %s303 = scalar_lea.vmem %s2, %s302
        %p304 = scmp.lt.s32.totalorder %s23, 0
        %s305 = scalar_select %p304, %s23, 0
        %s306 = scalar_lea.vmem %s3, %s305
        %p307 = scmp.lt.s32.totalorder %s23, 0
        %s308 = scalar_select %p307, %s23, 0
        %s309 = scalar_lea.vmem %s4, %s308
        %s310 = smul.u32 16, %s24
        %p311 = scmp.lt.s32.totalorder %s22, 1
        %s312 = scalar_select %p311, %s22, 1
        %p313 = scmp.lt.s32.totalorder %s310, 15
        %s314 = scalar_select %p313, %s310, 15
        %p315 = scmp.lt.s32.totalorder %s23, 0
        %s316 = scalar_select %p315, %s23, 0
        %s317 = smul.addr %s314, 2
        %s318 = sadd.s32 %s316, %s317
        %s319 = smul.addr %s312, 32
        %s320 = sadd.s32 %s318, %s319
        %s321 = smul.addr %s320, 8
        %s322 = scalar_lea.vmem %s5, %s321
        %s323 = smul.u32 16, %s24
        %s324 = smul.u32 %s22, 128
        %s325 = sld [smem:[#allocation3 + %s324]]
        %s326 = sadd.s32 %s324, 1
        %s327 = sld [smem:[#allocation3 + %s326]]
        %s328 = sadd.s32 %s324, 2
        %s329 = sld [smem:[#allocation3 + %s328]]
        %s330 = sadd.s32 %s324, 3
        %s331 = sld [smem:[#allocation3 + %s330]]
        %p332 = scmp.eq.s32.totalorder %s23, 0
        %p333 = scmp.eq.s32.totalorder %s24, 0
        %p334 = pnand %p332, %p333
        %p335 = pneg %p334
        // Predicated region
        $region45: #{tpu_custom_call.1} parent=39 // pred_check
          _
        $region46: #{tpu_custom_call.1} parent=39 // pred_check_branch
          %337 = sbr.rel (%p334) target = $region48
        $region47: #{tpu_custom_call.1} parent=39 // pred_region
          %vm338 = vcmask 31744
          %339 = vst.msk [vmem:[#allocation2] sm:$0xff] %vm338, 0.0
          %340 = vst.msk [vmem:[#allocation2 + $0x8] sm:$0xff] %vm338, 0.0
          %341 = vst.msk [vmem:[#allocation2 + $0x10] sm:$0xff] %vm338, 0.0
          %342 = vst.msk [vmem:[#allocation2 + $0x198] sm:$0xff] %vm338, 0.0
          %343 = vst.msk [vmem:[#allocation2 + $0x1a0] sm:$0xff] %vm338, 0.0
          %344 = vst.msk [vmem:[#allocation2 + $0x1a8] sm:$0xff] %vm338, 0.0
          %345 = vst.msk [vmem:[#allocation2 + $0x1b0] sm:$0xff] %vm338, 0.0
          %346 = vst.msk [vmem:[#allocation2 + $0x1b8] sm:$0xff] %vm338, 0.0
          %347 = vst.msk [vmem:[#allocation2 + $0x1c0] sm:$0xff] %vm338, 0.0
          %vm348 = vcmask 24576
          %349 = vst.msk [vmem:[#allocation2 + $0x18] sm:$0x1] %vm348, 0.0
          %v350 = vld [vmem:[%s299] sm:$0xff]
          %v351 = vld [vmem:[%s299 + $0x8] sm:$0xff]
          %352 = vst.msk [vmem:[#allocation2 + $0x19] sm:$0xff] %vm338, %v350
          %353 = vst.msk [vmem:[#allocation2 + $0x21] sm:$0xff] %vm338, %v351
          %354 = vst.msk [vmem:[#allocation2 + $0x29] sm:$0x1] %vm348, 0.0
          %355 = vst.msk [vmem:[#allocation2 + $0x30] sm:$0x1] %vm348, 0.0
          %s356 = scalar_lea.vmem %s299, 16
          %v357 = vld [vmem:[%s356] sm:$0xff]
          %v358 = vld [vmem:[%s356 + $0x8] sm:$0xff]
          %359 = vst.msk [vmem:[#allocation2 + $0x31] sm:$0xff] %vm338, %v357
          %360 = vst.msk [vmem:[#allocation2 + $0x39] sm:$0xff] %vm338, %v358
          %361 = vst.msk [vmem:[#allocation2 + $0x41] sm:$0x1] %vm348, 0.0
          %362 = vst.msk [vmem:[#allocation2 + $0x48] sm:$0x1] %vm348, 0.0
          %s363 = scalar_lea.vmem %s299, 32
          %v364 = vld [vmem:[%s363] sm:$0xff]
          %v365 = vld [vmem:[%s363 + $0x8] sm:$0xff]
          %366 = vst.msk [vmem:[#allocation2 + $0x49] sm:$0xff] %vm338, %v364
          %367 = vst.msk [vmem:[#allocation2 + $0x51] sm:$0xff] %vm338, %v365
          %368 = vst.msk [vmem:[#allocation2 + $0x59] sm:$0x1] %vm348, 0.0
          %369 = vst.msk [vmem:[#allocation2 + $0x60] sm:$0x1] %vm348, 0.0
          %s370 = scalar_lea.vmem %s299, 48
          %v371 = vld [vmem:[%s370] sm:$0xff]
          %v372 = vld [vmem:[%s370 + $0x8] sm:$0xff]
          %373 = vst.msk [vmem:[#allocation2 + $0x61] sm:$0xff] %vm338, %v371
          %374 = vst.msk [vmem:[#allocation2 + $0x69] sm:$0xff] %vm338, %v372
          %375 = vst.msk [vmem:[#allocation2 + $0x71] sm:$0x1] %vm348, 0.0
          %376 = vst.msk [vmem:[#allocation2 + $0x78] sm:$0x1] %vm348, 0.0
          %s377 = scalar_lea.vmem %s299, 64
          %v378 = vld [vmem:[%s377] sm:$0xff]
          %v379 = vld [vmem:[%s377 + $0x8] sm:$0xff]
          %380 = vst.msk [vmem:[#allocation2 + $0x79] sm:$0xff] %vm338, %v378
          %381 = vst.msk [vmem:[#allocation2 + $0x81] sm:$0xff] %vm338, %v379
          %382 = vst.msk [vmem:[#allocation2 + $0x89] sm:$0x1] %vm348, 0.0
          %383 = vst.msk [vmem:[#allocation2 + $0x90] sm:$0x1] %vm348, 0.0
          %s384 = scalar_lea.vmem %s299, 80
          %v385 = vld [vmem:[%s384] sm:$0xff]
          %v386 = vld [vmem:[%s384 + $0x8] sm:$0xff]
          %387 = vst.msk [vmem:[#allocation2 + $0x91] sm:$0xff] %vm338, %v385
          %388 = vst.msk [vmem:[#allocation2 + $0x99] sm:$0xff] %vm338, %v386
          %389 = vst.msk [vmem:[#allocation2 + $0xa1] sm:$0x1] %vm348, 0.0
          %390 = vst.msk [vmem:[#allocation2 + $0xa8] sm:$0x1] %vm348, 0.0
          %s391 = scalar_lea.vmem %s299, 96
          %v392 = vld [vmem:[%s391] sm:$0xff]
          %v393 = vld [vmem:[%s391 + $0x8] sm:$0xff]
          %394 = vst.msk [vmem:[#allocation2 + $0xa9] sm:$0xff] %vm338, %v392
          %395 = vst.msk [vmem:[#allocation2 + $0xb1] sm:$0xff] %vm338, %v393
          %396 = vst.msk [vmem:[#allocation2 + $0xb9] sm:$0x1] %vm348, 0.0
          %397 = vst.msk [vmem:[#allocation2 + $0xc0] sm:$0x1] %vm348, 0.0
          %s398 = scalar_lea.vmem %s299, 112
          %v399 = vld [vmem:[%s398] sm:$0xff]
          %v400 = vld [vmem:[%s398 + $0x8] sm:$0xff]
          %401 = vst.msk [vmem:[#allocation2 + $0xc1] sm:$0xff] %vm338, %v399
          %402 = vst.msk [vmem:[#allocation2 + $0xc9] sm:$0xff] %vm338, %v400
          %403 = vst.msk [vmem:[#allocation2 + $0xd1] sm:$0x1] %vm348, 0.0
          %404 = vst.msk [vmem:[#allocation2 + $0xd8] sm:$0x1] %vm348, 0.0
          %s405 = scalar_lea.vmem %s299, 128
          %v406 = vld [vmem:[%s405] sm:$0xff]
          %v407 = vld [vmem:[%s405 + $0x8] sm:$0xff]
          %408 = vst.msk [vmem:[#allocation2 + $0xd9] sm:$0xff] %vm338, %v406
          %409 = vst.msk [vmem:[#allocation2 + $0xe1] sm:$0xff] %vm338, %v407
          %410 = vst.msk [vmem:[#allocation2 + $0xe9] sm:$0x1] %vm348, 0.0
          %411 = vst.msk [vmem:[#allocation2 + $0xf0] sm:$0x1] %vm348, 0.0
          %s412 = scalar_lea.vmem %s299, 144
          %v413 = vld [vmem:[%s412] sm:$0xff]
          %v414 = vld [vmem:[%s412 + $0x8] sm:$0xff]
          %415 = vst.msk [vmem:[#allocation2 + $0xf1] sm:$0xff] %vm338, %v413
          %416 = vst.msk [vmem:[#allocation2 + $0xf9] sm:$0xff] %vm338, %v414
          %417 = vst.msk [vmem:[#allocation2 + $0x101] sm:$0x1] %vm348, 0.0
          %418 = vst.msk [vmem:[#allocation2 + $0x108] sm:$0x1] %vm348, 0.0
          %s419 = scalar_lea.vmem %s299, 160
          %v420 = vld [vmem:[%s419] sm:$0xff]
          %v421 = vld [vmem:[%s419 + $0x8] sm:$0xff]
          %422 = vst.msk [vmem:[#allocation2 + $0x109] sm:$0xff] %vm338, %v420
          %423 = vst.msk [vmem:[#allocation2 + $0x111] sm:$0xff] %vm338, %v421
          %424 = vst.msk [vmem:[#allocation2 + $0x119] sm:$0x1] %vm348, 0.0
          %425 = vst.msk [vmem:[#allocation2 + $0x120] sm:$0x1] %vm348, 0.0
          %s426 = scalar_lea.vmem %s299, 176
          %v427 = vld [vmem:[%s426] sm:$0xff]
          %v428 = vld [vmem:[%s426 + $0x8] sm:$0xff]
          %429 = vst.msk [vmem:[#allocation2 + $0x121] sm:$0xff] %vm338, %v427
          %430 = vst.msk [vmem:[#allocation2 + $0x129] sm:$0xff] %vm338, %v428
          %431 = vst.msk [vmem:[#allocation2 + $0x131] sm:$0x1] %vm348, 0.0
          %432 = vst.msk [vmem:[#allocation2 + $0x138] sm:$0x1] %vm348, 0.0
          %s433 = scalar_lea.vmem %s299, 192
          %v434 = vld [vmem:[%s433] sm:$0xff]
          %v435 = vld [vmem:[%s433 + $0x8] sm:$0xff]
          %436 = vst.msk [vmem:[#allocation2 + $0x139] sm:$0xff] %vm338, %v434
          %437 = vst.msk [vmem:[#allocation2 + $0x141] sm:$0xff] %vm338, %v435
          %438 = vst.msk [vmem:[#allocation2 + $0x149] sm:$0x1] %vm348, 0.0
          %439 = vst.msk [vmem:[#allocation2 + $0x150] sm:$0x1] %vm348, 0.0
          %s440 = scalar_lea.vmem %s299, 208
          %v441 = vld [vmem:[%s440] sm:$0xff]
          %v442 = vld [vmem:[%s440 + $0x8] sm:$0xff]
          %443 = vst.msk [vmem:[#allocation2 + $0x151] sm:$0xff] %vm338, %v441
          %444 = vst.msk [vmem:[#allocation2 + $0x159] sm:$0xff] %vm338, %v442
          %445 = vst.msk [vmem:[#allocation2 + $0x161] sm:$0x1] %vm348, 0.0
          %446 = vst.msk [vmem:[#allocation2 + $0x168] sm:$0x1] %vm348, 0.0
          %s447 = scalar_lea.vmem %s299, 224
          %v448 = vld [vmem:[%s447] sm:$0xff]
          %v449 = vld [vmem:[%s447 + $0x8] sm:$0xff]
          %450 = vst.msk [vmem:[#allocation2 + $0x169] sm:$0xff] %vm338, %v448
          %451 = vst.msk [vmem:[#allocation2 + $0x171] sm:$0xff] %vm338, %v449
          %452 = vst.msk [vmem:[#allocation2 + $0x179] sm:$0x1] %vm348, 0.0
          %453 = vst.msk [vmem:[#allocation2 + $0x180] sm:$0x1] %vm348, 0.0
          %s454 = scalar_lea.vmem %s299, 240
          %v455 = vld [vmem:[%s454] sm:$0xff]
          %v456 = vld [vmem:[%s454 + $0x8] sm:$0xff]
          %457 = vst.msk [vmem:[#allocation2 + $0x181] sm:$0xff] %vm338, %v455
          %458 = vst.msk [vmem:[#allocation2 + $0x189] sm:$0xff] %vm338, %v456
          %459 = vst.msk [vmem:[#allocation2 + $0x191] sm:$0x1] %vm348, 0.0
        $region48: #{tpu_custom_call.1} parent=39 // pred_fallthru
          _
        %v460 = vld [vmem:[%s306] sm:$0x1]
        %v461 = vld [vmem:[%s309] sm:$0x1]
        %v462 = vstv %s331
        %v463 = vmul.f32 %v462, %v461
        %v464 = vadd.f32 %v460, %v463
        %v465 = vstv %s329
        %v466 = vmul.f32 %v465, %v464
        %s467 = smul.f32 %s329, %s325
        %v468 = vld [vmem:[#allocation2] sm:$0xff]
        %v469 = vld [vmem:[#allocation2 + $0x8] sm:$0xff]
        %v470 = vld [vmem:[#allocation2 + $0x10] sm:$0xff]
        %v471 = vld [vmem:[#allocation2 + $0x18] sm:$0xff]
        %v472 = vld [vmem:[#allocation2 + $0x20] sm:$0xff]
        %v473 = vld [vmem:[#allocation2 + $0x28] sm:$0xff]
        %v474 = vld [vmem:[#allocation2 + $0x30] sm:$0xff]
        %v475 = vld [vmem:[#allocation2 + $0x38] sm:$0xff]
        %v476 = vld [vmem:[#allocation2 + $0x40] sm:$0xff]
        %v477 = vld [vmem:[#allocation2 + $0x48] sm:$0xff]
        %v478 = vld [vmem:[#allocation2 + $0x50] sm:$0xff]
        %v479 = vld [vmem:[#allocation2 + $0x58] sm:$0xff]
        %v480 = vld [vmem:[#allocation2 + $0x60] sm:$0xff]
        %v481 = vld [vmem:[#allocation2 + $0x68] sm:$0xff]
        %v482 = vld [vmem:[#allocation2 + $0x70] sm:$0xff]
        %v483 = vld [vmem:[#allocation2 + $0x78] sm:$0xff]
        %v484 = vld [vmem:[#allocation2 + $0x80] sm:$0xff]
        %v485 = vld [vmem:[#allocation2 + $0x88] sm:$0xff]
        %v486 = vld [vmem:[#allocation2 + $0x90] sm:$0xff]
        %v487 = vld [vmem:[#allocation2 + $0x98] sm:$0xff]
        %v488 = vld [vmem:[#allocation2 + $0xa0] sm:$0xff]
        %v489 = vld [vmem:[#allocation2 + $0xa8] sm:$0xff]
        %v490 = vld [vmem:[#allocation2 + $0xb0] sm:$0xff]
        %v491 = vld [vmem:[#allocation2 + $0xb8] sm:$0xff]
        %v492 = vld [vmem:[#allocation2 + $0xc0] sm:$0xff]
        %v493 = vld [vmem:[#allocation2 + $0xc8] sm:$0xff]
        %v494 = vld [vmem:[#allocation2 + $0xd0] sm:$0xff]
        %v495 = vld [vmem:[#allocation2 + $0xd8] sm:$0xff]
        %v496 = vld [vmem:[#allocation2 + $0xe0] sm:$0xff]
        %v497 = vld [vmem:[#allocation2 + $0xe8] sm:$0xff]
        %v498 = vld [vmem:[#allocation2 + $0xf0] sm:$0xff]
        %v499 = vld [vmem:[#allocation2 + $0xf8] sm:$0xff]
        %v500 = vld [vmem:[#allocation2 + $0x100] sm:$0xff]
        %v501 = vld [vmem:[#allocation2 + $0x108] sm:$0xff]
        %v502 = vld [vmem:[#allocation2 + $0x110] sm:$0xff]
        %v503 = vld [vmem:[#allocation2 + $0x118] sm:$0xff]
        %v504 = vld [vmem:[#allocation2 + $0x120] sm:$0xff]
        %v505 = vld [vmem:[#allocation2 + $0x128] sm:$0xff]
        %v506 = vld [vmem:[#allocation2 + $0x130] sm:$0xff]
        %v507 = vld [vmem:[#allocation2 + $0x138] sm:$0xff]
        %v508 = vld [vmem:[#allocation2 + $0x140] sm:$0xff]
        %v509 = vld [vmem:[#allocation2 + $0x148] sm:$0xff]
        %v510 = vld [vmem:[#allocation2 + $0x150] sm:$0xff]
        %v511 = vld [vmem:[#allocation2 + $0x158] sm:$0xff]
        %v512 = vld [vmem:[#allocation2 + $0x160] sm:$0xff]
        %v513 = vld [vmem:[#allocation2 + $0x168] sm:$0xff]
        %v514 = vld [vmem:[#allocation2 + $0x170] sm:$0xff]
        %v515 = vld [vmem:[#allocation2 + $0x178] sm:$0xff]
        %v516 = vld [vmem:[%s303] sm:$0xf]
        %v517 = vld [vmem:[#allocation2 + $0x1] sm:$0xff]
        %v518 = vld [vmem:[#allocation2 + $0x9] sm:$0xff]
        %v519 = vld [vmem:[#allocation2 + $0x11] sm:$0xff]
        %v520 = vld [vmem:[#allocation2 + $0x19] sm:$0xff]
        %v521 = vld [vmem:[#allocation2 + $0x21] sm:$0xff]
        %v522 = vld [vmem:[#allocation2 + $0x29] sm:$0xff]
        %v523 = vld [vmem:[#allocation2 + $0x31] sm:$0xff]
        %v524 = vld [vmem:[#allocation2 + $0x39] sm:$0xff]
        %v525 = vld [vmem:[#allocation2 + $0x41] sm:$0xff]
        %v526 = vld [vmem:[#allocation2 + $0x49] sm:$0xff]
        %v527 = vld [vmem:[#allocation2 + $0x51] sm:$0xff]
        %v528 = vld [vmem:[#allocation2 + $0x59] sm:$0xff]
        %v529 = vld [vmem:[#allocation2 + $0x61] sm:$0xff]
        %v530 = vld [vmem:[#allocation2 + $0x69] sm:$0xff]
        %v531 = vld [vmem:[#allocation2 + $0x71] sm:$0xff]
        %v532 = vld [vmem:[#allocation2 + $0x79] sm:$0xff]
        %v533 = vld [vmem:[#allocation2 + $0x81] sm:$0xff]
        %v534 = vld [vmem:[#allocation2 + $0x89] sm:$0xff]
        %v535 = vld [vmem:[#allocation2 + $0x91] sm:$0xff]
        %v536 = vld [vmem:[#allocation2 + $0x99] sm:$0xff]
        %v537 = vld [vmem:[#allocation2 + $0xa1] sm:$0xff]
        %v538 = vld [vmem:[#allocation2 + $0xa9] sm:$0xff]
        %v539 = vld [vmem:[#allocation2 + $0xb1] sm:$0xff]
        %v540 = vld [vmem:[#allocation2 + $0xb9] sm:$0xff]
        %v541 = vld [vmem:[#allocation2 + $0xc1] sm:$0xff]
        %v542 = vld [vmem:[#allocation2 + $0xc9] sm:$0xff]
        %v543 = vld [vmem:[#allocation2 + $0xd1] sm:$0xff]
        %v544 = vld [vmem:[#allocation2 + $0xd9] sm:$0xff]
        %v545 = vld [vmem:[#allocation2 + $0xe1] sm:$0xff]
        %v546 = vld [vmem:[#allocation2 + $0xe9] sm:$0xff]
        %v547 = vld [vmem:[#allocation2 + $0xf1] sm:$0xff]
        %v548 = vld [vmem:[#allocation2 + $0xf9] sm:$0xff]
        %v549 = vld [vmem:[#allocation2 + $0x101] sm:$0xff]
        %v550 = vld [vmem:[#allocation2 + $0x109] sm:$0xff]
        %v551 = vld [vmem:[#allocation2 + $0x111] sm:$0xff]
        %v552 = vld [vmem:[#allocation2 + $0x119] sm:$0xff]
        %v553 = vld [vmem:[#allocation2 + $0x121] sm:$0xff]
        %v554 = vld [vmem:[#allocation2 + $0x129] sm:$0xff]
        %v555 = vld [vmem:[#allocation2 + $0x131] sm:$0xff]
        %v556 = vld [vmem:[#allocation2 + $0x139] sm:$0xff]
        %v557 = vld [vmem:[#allocation2 + $0x141] sm:$0xff]
        %v558 = vld [vmem:[#allocation2 + $0x149] sm:$0xff]
        %v559 = vld [vmem:[#allocation2 + $0x151] sm:$0xff]
        %v560 = vld [vmem:[#allocation2 + $0x159] sm:$0xff]
        %v561 = vld [vmem:[#allocation2 + $0x161] sm:$0xff]
        %v562 = vld [vmem:[#allocation2 + $0x169] sm:$0xff]
        %v563 = vld [vmem:[#allocation2 + $0x171] sm:$0xff]
        %v564 = vld [vmem:[#allocation2 + $0x179] sm:$0xff]
        %s565 = scalar_lea.vmem %s303, 4
        %v566 = vld [vmem:[%s565] sm:$0xf]
        %vm567 = vcmask 31744
        %v569 = vsel %vm567, %v517, 0
        %v572 = vsel %vm567, %v518, 0
        %v575 = vsel %vm567, %v519, 0
        %v578 = vsel %vm567, %v520, 0
        %v581 = vsel %vm567, %v521, 0
        %v584 = vsel %vm567, %v522, 0
        %v587 = vsel %vm567, %v523, 0
        %v590 = vsel %vm567, %v524, 0
        %v593 = vsel %vm567, %v525, 0
        %v596 = vsel %vm567, %v526, 0
        %v599 = vsel %vm567, %v527, 0
        %v602 = vsel %vm567, %v528, 0
        %v605 = vsel %vm567, %v529, 0
        %v608 = vsel %vm567, %v530, 0
        %v611 = vsel %vm567, %v531, 0
        %v614 = vsel %vm567, %v532, 0
        %v617 = vsel %vm567, %v533, 0
        %v620 = vsel %vm567, %v534, 0
        %v623 = vsel %vm567, %v535, 0
        %v626 = vsel %vm567, %v536, 0
        %v629 = vsel %vm567, %v537, 0
        %v632 = vsel %vm567, %v538, 0
        %v635 = vsel %vm567, %v539, 0
        %v638 = vsel %vm567, %v540, 0
        %v641 = vsel %vm567, %v541, 0
        %v644 = vsel %vm567, %v542, 0
        %v647 = vsel %vm567, %v543, 0
        %v650 = vsel %vm567, %v544, 0
        %v653 = vsel %vm567, %v545, 0
        %v656 = vsel %vm567, %v546, 0
        %v659 = vsel %vm567, %v547, 0
        %v662 = vsel %vm567, %v548, 0
        %v665 = vsel %vm567, %v549, 0
        %v668 = vsel %vm567, %v550, 0
        %v671 = vsel %vm567, %v551, 0
        %v674 = vsel %vm567, %v552, 0
        %v677 = vsel %vm567, %v553, 0
        %v680 = vsel %vm567, %v554, 0
        %v683 = vsel %vm567, %v555, 0
        %v686 = vsel %vm567, %v556, 0
        %v689 = vsel %vm567, %v557, 0
        %v692 = vsel %vm567, %v558, 0
        %v695 = vsel %vm567, %v559, 0
        %v698 = vsel %vm567, %v560, 0
        %v701 = vsel %vm567, %v561, 0
        %v704 = vsel %vm567, %v562, 0
        %v707 = vsel %vm567, %v563, 0
        %v710 = vsel %vm567, %v564, 0
        %vm712 = vcmask 1043456
        %v714 = vsel %vm712, %v566, 0
        %716 = vmatprep.subr.mxu0 0.0
        %717 = vmatpush1.msra.mxu0 0.0
        %718 = vmatprep.subr.mxu0 0.0
        %719 = vmatpush1.msra.mxu0 0.0
        %720 = vmatprep.subr.mxu0 0.0
        %721 = vmatpush1.msra.mxu0 0.0
        %722 = vmatprep.subr.mxu0 0.0
        %723 = vmatpush1.msra.mxu0 0.0
        %724 = vmatprep.subr.mxu0 0.0
        %725 = vmatpush1.msra.mxu0 0.0
        %726 = vmatprep.subr.mxu0 0.0
        %727 = vmatpush1.msra.mxu0 0.0
        %728 = vmatprep.subr.mxu0 0.0
        %729 = vmatpush1.msra.mxu0 0.0
        %730 = vmatprep.subr.mxu0 0.0
        %731 = vmatpush1.msra.mxu0 0.0
        %732 = vmatprep.subr.mxu0 0.0
        %733 = vmatpush1.msra.mxu0 0.0
        %734 = vmatprep.subr.mxu0 0.0
        %735 = vmatpush1.msra.mxu0 0.0
        %736 = vmatprep.subr.mxu0 0.0
        %737 = vmatpush1.msra.mxu0 0.0
        %738 = vmatprep.subr.mxu0 0.0
        %739 = vmatpush1.msra.mxu0 0.0
        %740 = vmatprep.subr.mxu0 0.0
        %741 = vmatpush1.msra.mxu0 0.0
        %742 = vmatprep.subr.mxu0 0.0
        %743 = vmatpush1.msra.mxu0 0.0
        %744 = vmatprep.subr.mxu0 0.0
        %745 = vmatpush1.msra.mxu0 0.0
        %746 = vmatprep.subr.mxu0 0.0
        %747 = vmatpush1.msra.mxu0 %v714
        %748 = vmatprep.subr.mxu0 0.0
        %749 = vmatpush2.msra.mxu0 0.0
        %750 = vmatprep.subr.mxu0 0.0
        %751 = vmatpush2.msra.mxu0 0.0
        %752 = vmatprep.subr.mxu0 0.0
        %753 = vmatpush2.msra.mxu0 0.0
        %754 = vmatprep.subr.mxu0 0.0
        %755 = vmatpush2.msra.mxu0 0.0
        %756 = vmatprep.subr.mxu0 0.0
        %757 = vmatpush2.msra.mxu0 0.0
        %758 = vmatprep.subr.mxu0 0.0
        %759 = vmatpush2.msra.mxu0 0.0
        %760 = vmatprep.subr.mxu0 0.0
        %761 = vmatpush2.msra.mxu0 0.0
        %762 = vmatprep.subr.mxu0 0.0
        %763 = vmatpush2.msra.mxu0 0.0
        %764 = vmatprep.subr.mxu0 0.0
        %765 = vmatpush2.msra.mxu0 0.0
        %766 = vmatprep.subr.mxu0 0.0
        %767 = vmatpush2.msra.mxu0 0.0
        %768 = vmatprep.subr.mxu0 0.0
        %769 = vmatpush2.msra.mxu0 0.0
        %770 = vmatprep.subr.mxu0 0.0
        %771 = vmatpush2.msra.mxu0 0.0
        %772 = vmatprep.subr.mxu0 0.0
        %773 = vmatpush2.msra.mxu0 0.0
        %774 = vmatprep.subr.mxu0 0.0
        %775 = vmatpush2.msra.mxu0 0.0
        %776 = vmatprep.subr.mxu0 0.0
        %777 = vmatpush2.msra.mxu0 0.0
        %778 = vmatprep.subr.mxu0 0.0
        %779 = vmatpush2.msra.mxu0 0.0
        %780 = vmatprep.mubr.f32.mxu0 0.0
        %781 = vmatmul.mubr.f32.gmra.mxu0 %v569
        %v782 = vpop.f32.mrf.mxu0
        %v783 = vadd.f32 0.0, %v782
        %v784 = vpop.f32.mrf.mxu0
        %785 = vmatprep.mubr.f32.mxu0 0.0
        %786 = vmatmul.mubr.f32.gmra.mxu0 %v572
        %v787 = vpop.f32.mrf.mxu0
        %v788 = vadd.f32 0.0, %v787
        %v789 = vpop.f32.mrf.mxu0
        %790 = vmatprep.mubr.f32.mxu0 0.0
        %791 = vmatmul.mubr.f32.gmra.mxu0 %v575
        %v792 = vpop.f32.mrf.mxu0
        %v793 = vpop.f32.mrf.mxu0
        %794 = vmatprep.mubr.f32.mxu0 0.0
        %795 = vmatmul.mubr.f32.gmra.mxu0 %v578
        %v796 = vpop.f32.mrf.mxu0
        %v797 = vadd.f32 0.0, %v796
        %v798 = vpop.f32.mrf.mxu0
        %799 = vmatprep.mubr.f32.mxu0 0.0
        %800 = vmatmul.mubr.f32.gmra.mxu0 %v581
        %v801 = vpop.f32.mrf.mxu0
        %v802 = vadd.f32 0.0, %v801
        %v803 = vpop.f32.mrf.mxu0
        %804 = vmatprep.mubr.f32.mxu0 0.0
        %805 = vmatmul.mubr.f32.gmra.mxu0 %v584
        %v806 = vpop.f32.mrf.mxu0
        %v807 = vpop.f32.mrf.mxu0
        %808 = vmatprep.mubr.f32.mxu0 0.0
        %809 = vmatmul.mubr.f32.gmra.mxu0 %v587
        %v810 = vpop.f32.mrf.mxu0
        %v811 = vadd.f32 0.0, %v810
        %v812 = vpop.f32.mrf.mxu0
        %813 = vmatprep.mubr.f32.mxu0 0.0
        %814 = vmatmul.mubr.f32.gmra.mxu0 %v590
        %v815 = vpop.f32.mrf.mxu0
        %v816 = vadd.f32 0.0, %v815
        %v817 = vpop.f32.mrf.mxu0
        %818 = vmatprep.mubr.f32.mxu0 0.0
        %819 = vmatmul.mubr.f32.gmra.mxu0 %v593
        %v820 = vpop.f32.mrf.mxu0
        %v821 = vpop.f32.mrf.mxu0
        %822 = vmatprep.mubr.f32.mxu0 0.0
        %823 = vmatmul.mubr.f32.gmra.mxu0 %v596
        %v824 = vpop.f32.mrf.mxu0
        %v825 = vadd.f32 0.0, %v824
        %v826 = vpop.f32.mrf.mxu0
        %827 = vmatprep.mubr.f32.mxu0 0.0
        %828 = vmatmul.mubr.f32.gmra.mxu0 %v599
        %v829 = vpop.f32.mrf.mxu0
        %v830 = vadd.f32 0.0, %v829
        %v831 = vpop.f32.mrf.mxu0
        %832 = vmatprep.mubr.f32.mxu0 0.0
        %833 = vmatmul.mubr.f32.gmra.mxu0 %v602
        %v834 = vpop.f32.mrf.mxu0
        %v835 = vpop.f32.mrf.mxu0
        %836 = vmatprep.mubr.f32.mxu0 0.0
        %837 = vmatmul.mubr.f32.gmra.mxu0 %v605
        %v838 = vpop.f32.mrf.mxu0
        %v839 = vadd.f32 0.0, %v838
        %v840 = vpop.f32.mrf.mxu0
        %841 = vmatprep.mubr.f32.mxu0 0.0
        %842 = vmatmul.mubr.f32.gmra.mxu0 %v608
        %v843 = vpop.f32.mrf.mxu0
        %v844 = vadd.f32 0.0, %v843
        %v845 = vpop.f32.mrf.mxu0
        %846 = vmatprep.mubr.f32.mxu0 0.0
        %847 = vmatmul.mubr.f32.gmra.mxu0 %v611
        %v848 = vpop.f32.mrf.mxu0
        %v849 = vpop.f32.mrf.mxu0
        %850 = vmatprep.mubr.f32.mxu0 0.0
        %851 = vmatmul.mubr.f32.gmra.mxu0 %v614
        %v852 = vpop.f32.mrf.mxu0
        %v853 = vadd.f32 0.0, %v852
        %v854 = vpop.f32.mrf.mxu0
        %855 = vmatprep.mubr.f32.mxu0 0.0
        %856 = vmatmul.mubr.f32.gmra.mxu0 %v617
        %v857 = vpop.f32.mrf.mxu0
        %v858 = vadd.f32 0.0, %v857
        %v859 = vpop.f32.mrf.mxu0
        %860 = vmatprep.mubr.f32.mxu0 0.0
        %861 = vmatmul.mubr.f32.gmra.mxu0 %v620
        %v862 = vpop.f32.mrf.mxu0
        %v863 = vpop.f32.mrf.mxu0
        %864 = vmatprep.mubr.f32.mxu0 0.0
        %865 = vmatmul.mubr.f32.gmra.mxu0 %v623
        %v866 = vpop.f32.mrf.mxu0
        %v867 = vadd.f32 0.0, %v866
        %v868 = vpop.f32.mrf.mxu0
        %869 = vmatprep.mubr.f32.mxu0 0.0
        %870 = vmatmul.mubr.f32.gmra.mxu0 %v626
        %v871 = vpop.f32.mrf.mxu0
        %v872 = vadd.f32 0.0, %v871
        %v873 = vpop.f32.mrf.mxu0
        %874 = vmatprep.mubr.f32.mxu0 0.0
        %875 = vmatmul.mubr.f32.gmra.mxu0 %v629
        %v876 = vpop.f32.mrf.mxu0
        %v877 = vpop.f32.mrf.mxu0
        %878 = vmatprep.mubr.f32.mxu0 0.0
        %879 = vmatmul.mubr.f32.gmra.mxu0 %v632
        %v880 = vpop.f32.mrf.mxu0
        %v881 = vadd.f32 0.0, %v880
        %v882 = vpop.f32.mrf.mxu0
        %883 = vmatprep.mubr.f32.mxu0 0.0
        %884 = vmatmul.mubr.f32.gmra.mxu0 %v635
        %v885 = vpop.f32.mrf.mxu0
        %v886 = vadd.f32 0.0, %v885
        %v887 = vpop.f32.mrf.mxu0
        %888 = vmatprep.mubr.f32.mxu0 0.0
        %889 = vmatmul.mubr.f32.gmra.mxu0 %v638
        %v890 = vpop.f32.mrf.mxu0
        %v891 = vpop.f32.mrf.mxu0
        %892 = vmatprep.mubr.f32.mxu0 0.0
        %893 = vmatmul.mubr.f32.gmra.mxu0 %v641
        %v894 = vpop.f32.mrf.mxu0
        %v895 = vadd.f32 0.0, %v894
        %v896 = vpop.f32.mrf.mxu0
        %897 = vmatprep.mubr.f32.mxu0 0.0
        %898 = vmatmul.mubr.f32.gmra.mxu0 %v644
        %v899 = vpop.f32.mrf.mxu0
        %v900 = vadd.f32 0.0, %v899
        %v901 = vpop.f32.mrf.mxu0
        %902 = vmatprep.mubr.f32.mxu0 0.0
        %903 = vmatmul.mubr.f32.gmra.mxu0 %v647
        %v904 = vpop.f32.mrf.mxu0
        %v905 = vpop.f32.mrf.mxu0
        %906 = vmatprep.mubr.f32.mxu0 0.0
        %907 = vmatmul.mubr.f32.gmra.mxu0 %v650
        %v908 = vpop.f32.mrf.mxu0
        %v909 = vadd.f32 0.0, %v908
        %v910 = vpop.f32.mrf.mxu0
        %911 = vmatprep.mubr.f32.mxu0 0.0
        %912 = vmatmul.mubr.f32.gmra.mxu0 %v653
        %v913 = vpop.f32.mrf.mxu0
        %v914 = vadd.f32 0.0, %v913
        %v915 = vpop.f32.mrf.mxu0
        %916 = vmatprep.mubr.f32.mxu0 0.0
        %917 = vmatmul.mubr.f32.gmra.mxu0 %v656
        %v918 = vpop.f32.mrf.mxu0
        %v919 = vpop.f32.mrf.mxu0
        %920 = vmatprep.mubr.f32.mxu0 0.0
        %921 = vmatmul.mubr.f32.gmra.mxu0 %v659
        %v922 = vpop.f32.mrf.mxu0
        %v923 = vadd.f32 0.0, %v922
        %v924 = vpop.f32.mrf.mxu0
        %925 = vmatprep.mubr.f32.mxu0 0.0
        %926 = vmatmul.mubr.f32.gmra.mxu0 %v662
        %v927 = vpop.f32.mrf.mxu0
        %v928 = vadd.f32 0.0, %v927
        %v929 = vpop.f32.mrf.mxu0
        %930 = vmatprep.mubr.f32.mxu0 0.0
        %931 = vmatmul.mubr.f32.gmra.mxu0 %v665
        %v932 = vpop.f32.mrf.mxu0
        %v933 = vpop.f32.mrf.mxu0
        %934 = vmatprep.mubr.f32.mxu0 0.0
        %935 = vmatmul.mubr.f32.gmra.mxu0 %v668
        %v936 = vpop.f32.mrf.mxu0
        %v937 = vadd.f32 0.0, %v936
        %v938 = vpop.f32.mrf.mxu0
        %939 = vmatprep.mubr.f32.mxu0 0.0
        %940 = vmatmul.mubr.f32.gmra.mxu0 %v671
        %v941 = vpop.f32.mrf.mxu0
        %v942 = vadd.f32 0.0, %v941
        %v943 = vpop.f32.mrf.mxu0
        %944 = vmatprep.mubr.f32.mxu0 0.0
        %945 = vmatmul.mubr.f32.gmra.mxu0 %v674
        %v946 = vpop.f32.mrf.mxu0
        %v947 = vpop.f32.mrf.mxu0
        %948 = vmatprep.mubr.f32.mxu0 0.0
        %949 = vmatmul.mubr.f32.gmra.mxu0 %v677
        %v950 = vpop.f32.mrf.mxu0
        %v951 = vadd.f32 0.0, %v950
        %v952 = vpop.f32.mrf.mxu0
        %953 = vmatprep.mubr.f32.mxu0 0.0
        %954 = vmatmul.mubr.f32.gmra.mxu0 %v680
        %v955 = vpop.f32.mrf.mxu0
        %v956 = vadd.f32 0.0, %v955
        %v957 = vpop.f32.mrf.mxu0
        %958 = vmatprep.mubr.f32.mxu0 0.0
        %959 = vmatmul.mubr.f32.gmra.mxu0 %v683
        %v960 = vpop.f32.mrf.mxu0
        %v961 = vpop.f32.mrf.mxu0
        %962 = vmatprep.mubr.f32.mxu0 0.0
        %963 = vmatmul.mubr.f32.gmra.mxu0 %v686
        %v964 = vpop.f32.mrf.mxu0
        %v965 = vadd.f32 0.0, %v964
        %v966 = vpop.f32.mrf.mxu0
        %967 = vmatprep.mubr.f32.mxu0 0.0
        %968 = vmatmul.mubr.f32.gmra.mxu0 %v689
        %v969 = vpop.f32.mrf.mxu0
        %v970 = vadd.f32 0.0, %v969
        %v971 = vpop.f32.mrf.mxu0
        %972 = vmatprep.mubr.f32.mxu0 0.0
        %973 = vmatmul.mubr.f32.gmra.mxu0 %v692
        %v974 = vpop.f32.mrf.mxu0
        %v975 = vpop.f32.mrf.mxu0
        %976 = vmatprep.mubr.f32.mxu0 0.0
        %977 = vmatmul.mubr.f32.gmra.mxu0 %v695
        %v978 = vpop.f32.mrf.mxu0
        %v979 = vadd.f32 0.0, %v978
        %v980 = vpop.f32.mrf.mxu0
        %981 = vmatprep.mubr.f32.mxu0 0.0
        %982 = vmatmul.mubr.f32.gmra.mxu0 %v698
        %v983 = vpop.f32.mrf.mxu0
        %v984 = vadd.f32 0.0, %v983
        %v985 = vpop.f32.mrf.mxu0
        %986 = vmatprep.mubr.f32.mxu0 0.0
        %987 = vmatmul.mubr.f32.gmra.mxu0 %v701
        %v988 = vpop.f32.mrf.mxu0
        %v989 = vpop.f32.mrf.mxu0
        %990 = vmatprep.mubr.f32.mxu0 0.0
        %991 = vmatmul.mubr.f32.gmra.mxu0 %v704
        %v992 = vpop.f32.mrf.mxu0
        %v993 = vadd.f32 0.0, %v992
        %v994 = vpop.f32.mrf.mxu0
        %995 = vmatprep.mubr.f32.mxu0 0.0
        %996 = vmatmul.mubr.f32.gmra.mxu0 %v707
        %v997 = vpop.f32.mrf.mxu0
        %v998 = vadd.f32 0.0, %v997
        %v999 = vpop.f32.mrf.mxu0
        %1000 = vmatprep.mubr.f32.mxu0 0.0
        %1001 = vmatmul.mubr.f32.gmra.mxu0 %v710
        %v1002 = vpop.f32.mrf.mxu0
        %v1003 = vpop.f32.mrf.mxu0
        %1004 = vdwg.mxu0
        %v1006 = vsel %vm567, %v468, 0
        %v1009 = vsel %vm567, %v469, 0
        %v1012 = vsel %vm567, %v470, 0
        %v1015 = vsel %vm567, %v471, 0
        %v1018 = vsel %vm567, %v472, 0
        %v1021 = vsel %vm567, %v473, 0
        %v1024 = vsel %vm567, %v474, 0
        %v1027 = vsel %vm567, %v475, 0
        %v1030 = vsel %vm567, %v476, 0
        %v1033 = vsel %vm567, %v477, 0
        %v1036 = vsel %vm567, %v478, 0
        %v1039 = vsel %vm567, %v479, 0
        %v1042 = vsel %vm567, %v480, 0
        %v1045 = vsel %vm567, %v481, 0
        %v1048 = vsel %vm567, %v482, 0
        %v1051 = vsel %vm567, %v483, 0
        %v1054 = vsel %vm567, %v484, 0
        %v1057 = vsel %vm567, %v485, 0
        %v1060 = vsel %vm567, %v486, 0
        %v1063 = vsel %vm567, %v487, 0
        %v1066 = vsel %vm567, %v488, 0
        %v1069 = vsel %vm567, %v489, 0
        %v1072 = vsel %vm567, %v490, 0
        %v1075 = vsel %vm567, %v491, 0
        %v1078 = vsel %vm567, %v492, 0
        %v1081 = vsel %vm567, %v493, 0
        %v1084 = vsel %vm567, %v494, 0
        %v1087 = vsel %vm567, %v495, 0
        %v1090 = vsel %vm567, %v496, 0
        %v1093 = vsel %vm567, %v497, 0
        %v1096 = vsel %vm567, %v498, 0
        %v1099 = vsel %vm567, %v499, 0
        %v1102 = vsel %vm567, %v500, 0
        %v1105 = vsel %vm567, %v501, 0
        %v1108 = vsel %vm567, %v502, 0
        %v1111 = vsel %vm567, %v503, 0
        %v1114 = vsel %vm567, %v504, 0
        %v1117 = vsel %vm567, %v505, 0
        %v1120 = vsel %vm567, %v506, 0
        %v1123 = vsel %vm567, %v507, 0
        %v1126 = vsel %vm567, %v508, 0
        %v1129 = vsel %vm567, %v509, 0
        %v1132 = vsel %vm567, %v510, 0
        %v1135 = vsel %vm567, %v511, 0
        %v1138 = vsel %vm567, %v512, 0
        %v1141 = vsel %vm567, %v513, 0
        %v1144 = vsel %vm567, %v514, 0
        %v1147 = vsel %vm567, %v515, 0
        %v1150 = vsel %vm712, %v516, 0
        %1152 = vmatprep.subr.mxu0 0.0
        %1153 = vmatpush1.msra.mxu0 0.0
        %1154 = vmatprep.subr.mxu0 0.0
        %1155 = vmatpush1.msra.mxu0 0.0
        %1156 = vmatprep.subr.mxu0 0.0
        %1157 = vmatpush1.msra.mxu0 0.0
        %1158 = vmatprep.subr.mxu0 0.0
        %1159 = vmatpush1.msra.mxu0 0.0
        %1160 = vmatprep.subr.mxu0 0.0
        %1161 = vmatpush1.msra.mxu0 0.0
        %1162 = vmatprep.subr.mxu0 0.0
        %1163 = vmatpush1.msra.mxu0 0.0
        %1164 = vmatprep.subr.mxu0 0.0
        %1165 = vmatpush1.msra.mxu0 0.0
        %1166 = vmatprep.subr.mxu0 0.0
        %1167 = vmatpush1.msra.mxu0 0.0
        %1168 = vmatprep.subr.mxu0 0.0
        %1169 = vmatpush1.msra.mxu0 0.0
        %1170 = vmatprep.subr.mxu0 0.0
        %1171 = vmatpush1.msra.mxu0 0.0
        %1172 = vmatprep.subr.mxu0 0.0
        %1173 = vmatpush1.msra.mxu0 0.0
        %1174 = vmatprep.subr.mxu0 0.0
        %1175 = vmatpush1.msra.mxu0 0.0
        %1176 = vmatprep.subr.mxu0 0.0
        %1177 = vmatpush1.msra.mxu0 0.0
        %1178 = vmatprep.subr.mxu0 0.0
        %1179 = vmatpush1.msra.mxu0 0.0
        %1180 = vmatprep.subr.mxu0 0.0
        %1181 = vmatpush1.msra.mxu0 0.0
        %1182 = vmatprep.subr.mxu0 0.0
        %1183 = vmatpush1.msra.mxu0 %v1150
        %1184 = vmatprep.subr.mxu0 0.0
        %1185 = vmatpush2.msra.mxu0 0.0
        %1186 = vmatprep.subr.mxu0 0.0
        %1187 = vmatpush2.msra.mxu0 0.0
        %1188 = vmatprep.subr.mxu0 0.0
        %1189 = vmatpush2.msra.mxu0 0.0
        %1190 = vmatprep.subr.mxu0 0.0
        %1191 = vmatpush2.msra.mxu0 0.0
        %1192 = vmatprep.subr.mxu0 0.0
        %1193 = vmatpush2.msra.mxu0 0.0
        %1194 = vmatprep.subr.mxu0 0.0
        %1195 = vmatpush2.msra.mxu0 0.0
        %1196 = vmatprep.subr.mxu0 0.0
        %1197 = vmatpush2.msra.mxu0 0.0
        %1198 = vmatprep.subr.mxu0 0.0
        %1199 = vmatpush2.msra.mxu0 0.0
        %1200 = vmatprep.subr.mxu0 0.0
        %1201 = vmatpush2.msra.mxu0 0.0
        %1202 = vmatprep.subr.mxu0 0.0
        %1203 = vmatpush2.msra.mxu0 0.0
        %1204 = vmatprep.subr.mxu0 0.0
        %1205 = vmatpush2.msra.mxu0 0.0
        %1206 = vmatprep.subr.mxu0 0.0
        %1207 = vmatpush2.msra.mxu0 0.0
        %1208 = vmatprep.subr.mxu0 0.0
        %1209 = vmatpush2.msra.mxu0 0.0
        %1210 = vmatprep.subr.mxu0 0.0
        %1211 = vmatpush2.msra.mxu0 0.0
        %1212 = vmatprep.subr.mxu0 0.0
        %1213 = vmatpush2.msra.mxu0 0.0
        %1214 = vmatprep.subr.mxu0 0.0
        %1215 = vmatpush2.msra.mxu0 0.0
        %1216 = vmatprep.mubr.f32.mxu0 0.0
        %1217 = vmatmul.mubr.f32.gmra.mxu0 %v1006
        %v1218 = vpop.f32.mrf.mxu0
        %v1219 = vadd.f32 %v783, %v1218
        %v1220 = vpop.f32.mrf.mxu0
        %1221 = vmatprep.mubr.f32.mxu0 0.0
        %1222 = vmatmul.mubr.f32.gmra.mxu0 %v1009
        %v1223 = vpop.f32.mrf.mxu0
        %v1224 = vadd.f32 %v788, %v1223
        %v1225 = vpop.f32.mrf.mxu0
        %1226 = vmatprep.mubr.f32.mxu0 0.0
        %1227 = vmatmul.mubr.f32.gmra.mxu0 %v1012
        %v1228 = vpop.f32.mrf.mxu0
        %v1229 = vpop.f32.mrf.mxu0
        %1230 = vmatprep.mubr.f32.mxu0 0.0
        %1231 = vmatmul.mubr.f32.gmra.mxu0 %v1015
        %v1232 = vpop.f32.mrf.mxu0
        %v1233 = vadd.f32 %v797, %v1232
        %v1234 = vpop.f32.mrf.mxu0
        %1235 = vmatprep.mubr.f32.mxu0 0.0
        %1236 = vmatmul.mubr.f32.gmra.mxu0 %v1018
        %v1237 = vpop.f32.mrf.mxu0
        %v1238 = vadd.f32 %v802, %v1237
        %v1239 = vpop.f32.mrf.mxu0
        %1240 = vmatprep.mubr.f32.mxu0 0.0
        %1241 = vmatmul.mubr.f32.gmra.mxu0 %v1021
        %v1242 = vpop.f32.mrf.mxu0
        %v1243 = vpop.f32.mrf.mxu0
        %1244 = vmatprep.mubr.f32.mxu0 0.0
        %1245 = vmatmul.mubr.f32.gmra.mxu0 %v1024
        %v1246 = vpop.f32.mrf.mxu0
        %v1247 = vadd.f32 %v811, %v1246
        %v1248 = vpop.f32.mrf.mxu0
        %1249 = vmatprep.mubr.f32.mxu0 0.0
        %1250 = vmatmul.mubr.f32.gmra.mxu0 %v1027
        %v1251 = vpop.f32.mrf.mxu0
        %v1252 = vadd.f32 %v816, %v1251
        %v1253 = vpop.f32.mrf.mxu0
        %1254 = vmatprep.mubr.f32.mxu0 0.0
        %1255 = vmatmul.mubr.f32.gmra.mxu0 %v1030
        %v1256 = vpop.f32.mrf.mxu0
        %v1257 = vpop.f32.mrf.mxu0
        %1258 = vmatprep.mubr.f32.mxu0 0.0
        %1259 = vmatmul.mubr.f32.gmra.mxu0 %v1033
        %v1260 = vpop.f32.mrf.mxu0
        %v1261 = vadd.f32 %v825, %v1260
        %v1262 = vpop.f32.mrf.mxu0
        %1263 = vmatprep.mubr.f32.mxu0 0.0
        %1264 = vmatmul.mubr.f32.gmra.mxu0 %v1036
        %v1265 = vpop.f32.mrf.mxu0
        %v1266 = vadd.f32 %v830, %v1265
        %v1267 = vpop.f32.mrf.mxu0
        %1268 = vmatprep.mubr.f32.mxu0 0.0
        %1269 = vmatmul.mubr.f32.gmra.mxu0 %v1039
        %v1270 = vpop.f32.mrf.mxu0
        %v1271 = vpop.f32.mrf.mxu0
        %1272 = vmatprep.mubr.f32.mxu0 0.0
        %1273 = vmatmul.mubr.f32.gmra.mxu0 %v1042
        %v1274 = vpop.f32.mrf.mxu0
        %v1275 = vadd.f32 %v839, %v1274
        %v1276 = vpop.f32.mrf.mxu0
        %1277 = vmatprep.mubr.f32.mxu0 0.0
        %1278 = vmatmul.mubr.f32.gmra.mxu0 %v1045
        %v1279 = vpop.f32.mrf.mxu0
        %v1280 = vadd.f32 %v844, %v1279
        %v1281 = vpop.f32.mrf.mxu0
        %1282 = vmatprep.mubr.f32.mxu0 0.0
        %1283 = vmatmul.mubr.f32.gmra.mxu0 %v1048
        %v1284 = vpop.f32.mrf.mxu0
        %v1285 = vpop.f32.mrf.mxu0
        %1286 = vmatprep.mubr.f32.mxu0 0.0
        %1287 = vmatmul.mubr.f32.gmra.mxu0 %v1051
        %v1288 = vpop.f32.mrf.mxu0
        %v1289 = vadd.f32 %v853, %v1288
        %v1290 = vpop.f32.mrf.mxu0
        %1291 = vmatprep.mubr.f32.mxu0 0.0
        %1292 = vmatmul.mubr.f32.gmra.mxu0 %v1054
        %v1293 = vpop.f32.mrf.mxu0
        %v1294 = vadd.f32 %v858, %v1293
        %v1295 = vpop.f32.mrf.mxu0
        %1296 = vmatprep.mubr.f32.mxu0 0.0
        %1297 = vmatmul.mubr.f32.gmra.mxu0 %v1057
        %v1298 = vpop.f32.mrf.mxu0
        %v1299 = vpop.f32.mrf.mxu0
        %1300 = vmatprep.mubr.f32.mxu0 0.0
        %1301 = vmatmul.mubr.f32.gmra.mxu0 %v1060
        %v1302 = vpop.f32.mrf.mxu0
        %v1303 = vadd.f32 %v867, %v1302
        %v1304 = vpop.f32.mrf.mxu0
        %1305 = vmatprep.mubr.f32.mxu0 0.0
        %1306 = vmatmul.mubr.f32.gmra.mxu0 %v1063
        %v1307 = vpop.f32.mrf.mxu0
        %v1308 = vadd.f32 %v872, %v1307
        %v1309 = vpop.f32.mrf.mxu0
        %1310 = vmatprep.mubr.f32.mxu0 0.0
        %1311 = vmatmul.mubr.f32.gmra.mxu0 %v1066
        %v1312 = vpop.f32.mrf.mxu0
        %v1313 = vpop.f32.mrf.mxu0
        %1314 = vmatprep.mubr.f32.mxu0 0.0
        %1315 = vmatmul.mubr.f32.gmra.mxu0 %v1069
        %v1316 = vpop.f32.mrf.mxu0
        %v1317 = vadd.f32 %v881, %v1316
        %v1318 = vpop.f32.mrf.mxu0
        %1319 = vmatprep.mubr.f32.mxu0 0.0
        %1320 = vmatmul.mubr.f32.gmra.mxu0 %v1072
        %v1321 = vpop.f32.mrf.mxu0
        %v1322 = vadd.f32 %v886, %v1321
        %v1323 = vpop.f32.mrf.mxu0
        %1324 = vmatprep.mubr.f32.mxu0 0.0
        %1325 = vmatmul.mubr.f32.gmra.mxu0 %v1075
        %v1326 = vpop.f32.mrf.mxu0
        %v1327 = vpop.f32.mrf.mxu0
        %1328 = vmatprep.mubr.f32.mxu0 0.0
        %1329 = vmatmul.mubr.f32.gmra.mxu0 %v1078
        %v1330 = vpop.f32.mrf.mxu0
        %v1331 = vadd.f32 %v895, %v1330
        %v1332 = vpop.f32.mrf.mxu0
        %1333 = vmatprep.mubr.f32.mxu0 0.0
        %1334 = vmatmul.mubr.f32.gmra.mxu0 %v1081
        %v1335 = vpop.f32.mrf.mxu0
        %v1336 = vadd.f32 %v900, %v1335
        %v1337 = vpop.f32.mrf.mxu0
        %1338 = vmatprep.mubr.f32.mxu0 0.0
        %1339 = vmatmul.mubr.f32.gmra.mxu0 %v1084
        %v1340 = vpop.f32.mrf.mxu0
        %v1341 = vpop.f32.mrf.mxu0
        %1342 = vmatprep.mubr.f32.mxu0 0.0
        %1343 = vmatmul.mubr.f32.gmra.mxu0 %v1087
        %v1344 = vpop.f32.mrf.mxu0
        %v1345 = vadd.f32 %v909, %v1344
        %v1346 = vpop.f32.mrf.mxu0
        %1347 = vmatprep.mubr.f32.mxu0 0.0
        %1348 = vmatmul.mubr.f32.gmra.mxu0 %v1090
        %v1349 = vpop.f32.mrf.mxu0
        %v1350 = vadd.f32 %v914, %v1349
        %v1351 = vpop.f32.mrf.mxu0
        %1352 = vmatprep.mubr.f32.mxu0 0.0
        %1353 = vmatmul.mubr.f32.gmra.mxu0 %v1093
        %v1354 = vpop.f32.mrf.mxu0
        %v1355 = vpop.f32.mrf.mxu0
        %1356 = vmatprep.mubr.f32.mxu0 0.0
        %1357 = vmatmul.mubr.f32.gmra.mxu0 %v1096
        %v1358 = vpop.f32.mrf.mxu0
        %v1359 = vadd.f32 %v923, %v1358
        %v1360 = vpop.f32.mrf.mxu0
        %1361 = vmatprep.mubr.f32.mxu0 0.0
        %1362 = vmatmul.mubr.f32.gmra.mxu0 %v1099
        %v1363 = vpop.f32.mrf.mxu0
        %v1364 = vadd.f32 %v928, %v1363
        %v1365 = vpop.f32.mrf.mxu0
        %1366 = vmatprep.mubr.f32.mxu0 0.0
        %1367 = vmatmul.mubr.f32.gmra.mxu0 %v1102
        %v1368 = vpop.f32.mrf.mxu0
        %v1369 = vpop.f32.mrf.mxu0
        %1370 = vmatprep.mubr.f32.mxu0 0.0
        %1371 = vmatmul.mubr.f32.gmra.mxu0 %v1105
        %v1372 = vpop.f32.mrf.mxu0
        %v1373 = vadd.f32 %v937, %v1372
        %v1374 = vpop.f32.mrf.mxu0
        %1375 = vmatprep.mubr.f32.mxu0 0.0
        %1376 = vmatmul.mubr.f32.gmra.mxu0 %v1108
        %v1377 = vpop.f32.mrf.mxu0
        %v1378 = vadd.f32 %v942, %v1377
        %v1379 = vpop.f32.mrf.mxu0
        %1380 = vmatprep.mubr.f32.mxu0 0.0
        %1381 = vmatmul.mubr.f32.gmra.mxu0 %v1111
        %v1382 = vpop.f32.mrf.mxu0
        %v1383 = vpop.f32.mrf.mxu0
        %1384 = vmatprep.mubr.f32.mxu0 0.0
        %1385 = vmatmul.mubr.f32.gmra.mxu0 %v1114
        %v1386 = vpop.f32.mrf.mxu0
        %v1387 = vadd.f32 %v951, %v1386
        %v1388 = vpop.f32.mrf.mxu0
        %1389 = vmatprep.mubr.f32.mxu0 0.0
        %1390 = vmatmul.mubr.f32.gmra.mxu0 %v1117
        %v1391 = vpop.f32.mrf.mxu0
        %v1392 = vadd.f32 %v956, %v1391
        %v1393 = vpop.f32.mrf.mxu0
        %1394 = vmatprep.mubr.f32.mxu0 0.0
        %1395 = vmatmul.mubr.f32.gmra.mxu0 %v1120
        %v1396 = vpop.f32.mrf.mxu0
        %v1397 = vpop.f32.mrf.mxu0
        %1398 = vmatprep.mubr.f32.mxu0 0.0
        %1399 = vmatmul.mubr.f32.gmra.mxu0 %v1123
        %v1400 = vpop.f32.mrf.mxu0
        %v1401 = vadd.f32 %v965, %v1400
        %v1402 = vpop.f32.mrf.mxu0
        %1403 = vmatprep.mubr.f32.mxu0 0.0
        %1404 = vmatmul.mubr.f32.gmra.mxu0 %v1126
        %v1405 = vpop.f32.mrf.mxu0
        %v1406 = vadd.f32 %v970, %v1405
        %v1407 = vpop.f32.mrf.mxu0
        %1408 = vmatprep.mubr.f32.mxu0 0.0
        %1409 = vmatmul.mubr.f32.gmra.mxu0 %v1129
        %v1410 = vpop.f32.mrf.mxu0
        %v1411 = vpop.f32.mrf.mxu0
        %1412 = vmatprep.mubr.f32.mxu0 0.0
        %1413 = vmatmul.mubr.f32.gmra.mxu0 %v1132
        %v1414 = vpop.f32.mrf.mxu0
        %v1415 = vadd.f32 %v979, %v1414
        %v1416 = vpop.f32.mrf.mxu0
        %1417 = vmatprep.mubr.f32.mxu0 0.0
        %1418 = vmatmul.mubr.f32.gmra.mxu0 %v1135
        %v1419 = vpop.f32.mrf.mxu0
        %v1420 = vadd.f32 %v984, %v1419
        %v1421 = vpop.f32.mrf.mxu0
        %1422 = vmatprep.mubr.f32.mxu0 0.0
        %1423 = vmatmul.mubr.f32.gmra.mxu0 %v1138
        %v1424 = vpop.f32.mrf.mxu0
        %v1425 = vpop.f32.mrf.mxu0
        %1426 = vmatprep.mubr.f32.mxu0 0.0
        %1427 = vmatmul.mubr.f32.gmra.mxu0 %v1141
        %v1428 = vpop.f32.mrf.mxu0
        %v1429 = vadd.f32 %v993, %v1428
        %v1430 = vpop.f32.mrf.mxu0
        %1431 = vmatprep.mubr.f32.mxu0 0.0
        %1432 = vmatmul.mubr.f32.gmra.mxu0 %v1144
        %v1433 = vpop.f32.mrf.mxu0
        %v1434 = vadd.f32 %v998, %v1433
        %v1435 = vpop.f32.mrf.mxu0
        %1436 = vmatprep.mubr.f32.mxu0 0.0
        %1437 = vmatmul.mubr.f32.gmra.mxu0 %v1147
        %v1438 = vpop.f32.mrf.mxu0
        %v1439 = vpop.f32.mrf.mxu0
        %1440 = vdwg.mxu0
        %v1441 = vld [vmem:[#allocation2 + $0x2] sm:$0xff]
        %v1442 = vld [vmem:[#allocation2 + $0xa] sm:$0xff]
        %v1443 = vld [vmem:[#allocation2 + $0x12] sm:$0xff]
        %v1444 = vld [vmem:[#allocation2 + $0x1a] sm:$0xff]
        %v1445 = vld [vmem:[#allocation2 + $0x22] sm:$0xff]
        %v1446 = vld [vmem:[#allocation2 + $0x2a] sm:$0xff]
        %v1447 = vld [vmem:[#allocation2 + $0x32] sm:$0xff]
        %v1448 = vld [vmem:[#allocation2 + $0x3a] sm:$0xff]
        %v1449 = vld [vmem:[#allocation2 + $0x42] sm:$0xff]
        %v1450 = vld [vmem:[#allocation2 + $0x4a] sm:$0xff]
        %v1451 = vld [vmem:[#allocation2 + $0x52] sm:$0xff]
        %v1452 = vld [vmem:[#allocation2 + $0x5a] sm:$0xff]
        %v1453 = vld [vmem:[#allocation2 + $0x62] sm:$0xff]
        %v1454 = vld [vmem:[#allocation2 + $0x6a] sm:$0xff]
        %v1455 = vld [vmem:[#allocation2 + $0x72] sm:$0xff]
        %v1456 = vld [vmem:[#allocation2 + $0x7a] sm:$0xff]
        %v1457 = vld [vmem:[#allocation2 + $0x82] sm:$0xff]
        %v1458 = vld [vmem:[#allocation2 + $0x8a] sm:$0xff]
        %v1459 = vld [vmem:[#allocation2 + $0x92] sm:$0xff]
        %v1460 = vld [vmem:[#allocation2 + $0x9a] sm:$0xff]
        %v1461 = vld [vmem:[#allocation2 + $0xa2] sm:$0xff]
        %v1462 = vld [vmem:[#allocation2 + $0xaa] sm:$0xff]
        %v1463 = vld [vmem:[#allocation2 + $0xb2] sm:$0xff]
        %v1464 = vld [vmem:[#allocation2 + $0xba] sm:$0xff]
        %v1465 = vld [vmem:[#allocation2 + $0xc2] sm:$0xff]
        %v1466 = vld [vmem:[#allocation2 + $0xca] sm:$0xff]
        %v1467 = vld [vmem:[#allocation2 + $0xd2] sm:$0xff]
        %v1468 = vld [vmem:[#allocation2 + $0xda] sm:$0xff]
        %v1469 = vld [vmem:[#allocation2 + $0xe2] sm:$0xff]
        %v1470 = vld [vmem:[#allocation2 + $0xea] sm:$0xff]
        %v1471 = vld [vmem:[#allocation2 + $0xf2] sm:$0xff]
        %v1472 = vld [vmem:[#allocation2 + $0xfa] sm:$0xff]
        %v1473 = vld [vmem:[#allocation2 + $0x102] sm:$0xff]
        %v1474 = vld [vmem:[#allocation2 + $0x10a] sm:$0xff]
        %v1475 = vld [vmem:[#allocation2 + $0x112] sm:$0xff]
        %v1476 = vld [vmem:[#allocation2 + $0x11a] sm:$0xff]
        %v1477 = vld [vmem:[#allocation2 + $0x122] sm:$0xff]
        %v1478 = vld [vmem:[#allocation2 + $0x12a] sm:$0xff]
        %v1479 = vld [vmem:[#allocation2 + $0x132] sm:$0xff]
        %v1480 = vld [vmem:[#allocation2 + $0x13a] sm:$0xff]
        %v1481 = vld [vmem:[#allocation2 + $0x142] sm:$0xff]
        %v1482 = vld [vmem:[#allocation2 + $0x14a] sm:$0xff]
        %v1483 = vld [vmem:[#allocation2 + $0x152] sm:$0xff]
        %v1484 = vld [vmem:[#allocation2 + $0x15a] sm:$0xff]
        %v1485 = vld [vmem:[#allocation2 + $0x162] sm:$0xff]
        %v1486 = vld [vmem:[#allocation2 + $0x16a] sm:$0xff]
        %v1487 = vld [vmem:[#allocation2 + $0x172] sm:$0xff]
        %v1488 = vld [vmem:[#allocation2 + $0x17a] sm:$0xff]
        %s1489 = scalar_lea.vmem %s303, 8
        %v1490 = vld [vmem:[%s1489] sm:$0xf]
        %v1492 = vsel %vm567, %v1441, 0
        %v1495 = vsel %vm567, %v1442, 0
        %v1498 = vsel %vm567, %v1443, 0
        %v1501 = vsel %vm567, %v1444, 0
        %v1504 = vsel %vm567, %v1445, 0
        %v1507 = vsel %vm567, %v1446, 0
        %v1510 = vsel %vm567, %v1447, 0
        %v1513 = vsel %vm567, %v1448, 0
        %v1516 = vsel %vm567, %v1449, 0
        %v1519 = vsel %vm567, %v1450, 0
        %v1522 = vsel %vm567, %v1451, 0
        %v1525 = vsel %vm567, %v1452, 0
        %v1528 = vsel %vm567, %v1453, 0
        %v1531 = vsel %vm567, %v1454, 0
        %v1534 = vsel %vm567, %v1455, 0
        %v1537 = vsel %vm567, %v1456, 0
        %v1540 = vsel %vm567, %v1457, 0
        %v1543 = vsel %vm567, %v1458, 0
        %v1546 = vsel %vm567, %v1459, 0
        %v1549 = vsel %vm567, %v1460, 0
        %v1552 = vsel %vm567, %v1461, 0
        %v1555 = vsel %vm567, %v1462, 0
        %v1558 = vsel %vm567, %v1463, 0
        %v1561 = vsel %vm567, %v1464, 0
        %v1564 = vsel %vm567, %v1465, 0
        %v1567 = vsel %vm567, %v1466, 0
        %v1570 = vsel %vm567, %v1467, 0
        %v1573 = vsel %vm567, %v1468, 0
        %v1576 = vsel %vm567, %v1469, 0
        %v1579 = vsel %vm567, %v1470, 0
        %v1582 = vsel %vm567, %v1471, 0
        %v1585 = vsel %vm567, %v1472, 0
        %v1588 = vsel %vm567, %v1473, 0
        %v1591 = vsel %vm567, %v1474, 0
        %v1594 = vsel %vm567, %v1475, 0
        %v1597 = vsel %vm567, %v1476, 0
        %v1600 = vsel %vm567, %v1477, 0
        %v1603 = vsel %vm567, %v1478, 0
        %v1606 = vsel %vm567, %v1479, 0
        %v1609 = vsel %vm567, %v1480, 0
        %v1612 = vsel %vm567, %v1481, 0
        %v1615 = vsel %vm567, %v1482, 0
        %v1618 = vsel %vm567, %v1483, 0
        %v1621 = vsel %vm567, %v1484, 0
        %v1624 = vsel %vm567, %v1485, 0
        %v1627 = vsel %vm567, %v1486, 0
        %v1630 = vsel %vm567, %v1487, 0
        %v1633 = vsel %vm567, %v1488, 0
        %v1636 = vsel %vm712, %v1490, 0
        %1638 = vmatprep.subr.mxu0 0.0
        %1639 = vmatpush1.msra.mxu0 0.0
        %1640 = vmatprep.subr.mxu0 0.0
        %1641 = vmatpush1.msra.mxu0 0.0
        %1642 = vmatprep.subr.mxu0 0.0
        %1643 = vmatpush1.msra.mxu0 0.0
        %1644 = vmatprep.subr.mxu0 0.0
        %1645 = vmatpush1.msra.mxu0 0.0
        %1646 = vmatprep.subr.mxu0 0.0
        %1647 = vmatpush1.msra.mxu0 0.0
        %1648 = vmatprep.subr.mxu0 0.0
        %1649 = vmatpush1.msra.mxu0 0.0
        %1650 = vmatprep.subr.mxu0 0.0
        %1651 = vmatpush1.msra.mxu0 0.0
        %1652 = vmatprep.subr.mxu0 0.0
        %1653 = vmatpush1.msra.mxu0 0.0
        %1654 = vmatprep.subr.mxu0 0.0
        %1655 = vmatpush1.msra.mxu0 0.0
        %1656 = vmatprep.subr.mxu0 0.0
        %1657 = vmatpush1.msra.mxu0 0.0
        %1658 = vmatprep.subr.mxu0 0.0
        %1659 = vmatpush1.msra.mxu0 0.0
        %1660 = vmatprep.subr.mxu0 0.0
        %1661 = vmatpush1.msra.mxu0 0.0
        %1662 = vmatprep.subr.mxu0 0.0
        %1663 = vmatpush1.msra.mxu0 0.0
        %1664 = vmatprep.subr.mxu0 0.0
        %1665 = vmatpush1.msra.mxu0 0.0
        %1666 = vmatprep.subr.mxu0 0.0
        %1667 = vmatpush1.msra.mxu0 0.0
        %1668 = vmatprep.subr.mxu0 0.0
        %1669 = vmatpush1.msra.mxu0 %v1636
        %1670 = vmatprep.subr.mxu0 0.0
        %1671 = vmatpush2.msra.mxu0 0.0
        %1672 = vmatprep.subr.mxu0 0.0
        %1673 = vmatpush2.msra.mxu0 0.0
        %1674 = vmatprep.subr.mxu0 0.0
        %1675 = vmatpush2.msra.mxu0 0.0
        %1676 = vmatprep.subr.mxu0 0.0
        %1677 = vmatpush2.msra.mxu0 0.0
        %1678 = vmatprep.subr.mxu0 0.0
        %1679 = vmatpush2.msra.mxu0 0.0
        %1680 = vmatprep.subr.mxu0 0.0
        %1681 = vmatpush2.msra.mxu0 0.0
        %1682 = vmatprep.subr.mxu0 0.0
        %1683 = vmatpush2.msra.mxu0 0.0
        %1684 = vmatprep.subr.mxu0 0.0
        %1685 = vmatpush2.msra.mxu0 0.0
        %1686 = vmatprep.subr.mxu0 0.0
        %1687 = vmatpush2.msra.mxu0 0.0
        %1688 = vmatprep.subr.mxu0 0.0
        %1689 = vmatpush2.msra.mxu0 0.0
        %1690 = vmatprep.subr.mxu0 0.0
        %1691 = vmatpush2.msra.mxu0 0.0
        %1692 = vmatprep.subr.mxu0 0.0
        %1693 = vmatpush2.msra.mxu0 0.0
        %1694 = vmatprep.subr.mxu0 0.0
        %1695 = vmatpush2.msra.mxu0 0.0
        %1696 = vmatprep.subr.mxu0 0.0
        %1697 = vmatpush2.msra.mxu0 0.0
        %1698 = vmatprep.subr.mxu0 0.0
        %1699 = vmatpush2.msra.mxu0 0.0
        %1700 = vmatprep.subr.mxu0 0.0
        %1701 = vmatpush2.msra.mxu0 0.0
        %1702 = vmatprep.mubr.f32.mxu0 0.0
        %1703 = vmatmul.mubr.f32.gmra.mxu0 %v1492
        %v1704 = vpop.f32.mrf.mxu0
        %v1705 = vadd.f32 0.0, %v1704
        %v1706 = vpop.f32.mrf.mxu0
        %1707 = vmatprep.mubr.f32.mxu0 0.0
        %1708 = vmatmul.mubr.f32.gmra.mxu0 %v1495
        %v1709 = vpop.f32.mrf.mxu0
        %v1710 = vadd.f32 0.0, %v1709
        %v1711 = vpop.f32.mrf.mxu0
        %1712 = vmatprep.mubr.f32.mxu0 0.0
        %1713 = vmatmul.mubr.f32.gmra.mxu0 %v1498
        %v1714 = vpop.f32.mrf.mxu0
        %v1715 = vpop.f32.mrf.mxu0
        %1716 = vmatprep.mubr.f32.mxu0 0.0
        %1717 = vmatmul.mubr.f32.gmra.mxu0 %v1501
        %v1718 = vpop.f32.mrf.mxu0
        %v1719 = vadd.f32 0.0, %v1718
        %v1720 = vpop.f32.mrf.mxu0
        %1721 = vmatprep.mubr.f32.mxu0 0.0
        %1722 = vmatmul.mubr.f32.gmra.mxu0 %v1504
        %v1723 = vpop.f32.mrf.mxu0
        %v1724 = vadd.f32 0.0, %v1723
        %v1725 = vpop.f32.mrf.mxu0
        %1726 = vmatprep.mubr.f32.mxu0 0.0
        %1727 = vmatmul.mubr.f32.gmra.mxu0 %v1507
        %v1728 = vpop.f32.mrf.mxu0
        %v1729 = vpop.f32.mrf.mxu0
        %1730 = vmatprep.mubr.f32.mxu0 0.0
        %1731 = vmatmul.mubr.f32.gmra.mxu0 %v1510
        %v1732 = vpop.f32.mrf.mxu0
        %v1733 = vadd.f32 0.0, %v1732
        %v1734 = vpop.f32.mrf.mxu0
        %1735 = vmatprep.mubr.f32.mxu0 0.0
        %1736 = vmatmul.mubr.f32.gmra.mxu0 %v1513
        %v1737 = vpop.f32.mrf.mxu0
        %v1738 = vadd.f32 0.0, %v1737
        %v1739 = vpop.f32.mrf.mxu0
        %1740 = vmatprep.mubr.f32.mxu0 0.0
        %1741 = vmatmul.mubr.f32.gmra.mxu0 %v1516
        %v1742 = vpop.f32.mrf.mxu0
        %v1743 = vpop.f32.mrf.mxu0
        %1744 = vmatprep.mubr.f32.mxu0 0.0
        %1745 = vmatmul.mubr.f32.gmra.mxu0 %v1519
        %v1746 = vpop.f32.mrf.mxu0
        %v1747 = vadd.f32 0.0, %v1746
        %v1748 = vpop.f32.mrf.mxu0
        %1749 = vmatprep.mubr.f32.mxu0 0.0
        %1750 = vmatmul.mubr.f32.gmra.mxu0 %v1522
        %v1751 = vpop.f32.mrf.mxu0
        %v1752 = vadd.f32 0.0, %v1751
        %v1753 = vpop.f32.mrf.mxu0
        %1754 = vmatprep.mubr.f32.mxu0 0.0
        %1755 = vmatmul.mubr.f32.gmra.mxu0 %v1525
        %v1756 = vpop.f32.mrf.mxu0
        %v1757 = vpop.f32.mrf.mxu0
        %1758 = vmatprep.mubr.f32.mxu0 0.0
        %1759 = vmatmul.mubr.f32.gmra.mxu0 %v1528
        %v1760 = vpop.f32.mrf.mxu0
        %v1761 = vadd.f32 0.0, %v1760
        %v1762 = vpop.f32.mrf.mxu0
        %1763 = vmatprep.mubr.f32.mxu0 0.0
        %1764 = vmatmul.mubr.f32.gmra.mxu0 %v1531
        %v1765 = vpop.f32.mrf.mxu0
        %v1766 = vadd.f32 0.0, %v1765
        %v1767 = vpop.f32.mrf.mxu0
        %1768 = vmatprep.mubr.f32.mxu0 0.0
        %1769 = vmatmul.mubr.f32.gmra.mxu0 %v1534
        %v1770 = vpop.f32.mrf.mxu0
        %v1771 = vpop.f32.mrf.mxu0
        %1772 = vmatprep.mubr.f32.mxu0 0.0
        %1773 = vmatmul.mubr.f32.gmra.mxu0 %v1537
        %v1774 = vpop.f32.mrf.mxu0
        %v1775 = vadd.f32 0.0, %v1774
        %v1776 = vpop.f32.mrf.mxu0
        %1777 = vmatprep.mubr.f32.mxu0 0.0
        %1778 = vmatmul.mubr.f32.gmra.mxu0 %v1540
        %v1779 = vpop.f32.mrf.mxu0
        %v1780 = vadd.f32 0.0, %v1779
        %v1781 = vpop.f32.mrf.mxu0
        %1782 = vmatprep.mubr.f32.mxu0 0.0
        %1783 = vmatmul.mubr.f32.gmra.mxu0 %v1543
        %v1784 = vpop.f32.mrf.mxu0
        %v1785 = vpop.f32.mrf.mxu0
        %1786 = vmatprep.mubr.f32.mxu0 0.0
        %1787 = vmatmul.mubr.f32.gmra.mxu0 %v1546
        %v1788 = vpop.f32.mrf.mxu0
        %v1789 = vadd.f32 0.0, %v1788
        %v1790 = vpop.f32.mrf.mxu0
        %1791 = vmatprep.mubr.f32.mxu0 0.0
        %1792 = vmatmul.mubr.f32.gmra.mxu0 %v1549
        %v1793 = vpop.f32.mrf.mxu0
        %v1794 = vadd.f32 0.0, %v1793
        %v1795 = vpop.f32.mrf.mxu0
        %1796 = vmatprep.mubr.f32.mxu0 0.0
        %1797 = vmatmul.mubr.f32.gmra.mxu0 %v1552
        %v1798 = vpop.f32.mrf.mxu0
        %v1799 = vpop.f32.mrf.mxu0
        %1800 = vmatprep.mubr.f32.mxu0 0.0
        %1801 = vmatmul.mubr.f32.gmra.mxu0 %v1555
        %v1802 = vpop.f32.mrf.mxu0
        %v1803 = vadd.f32 0.0, %v1802
        %v1804 = vpop.f32.mrf.mxu0
        %1805 = vmatprep.mubr.f32.mxu0 0.0
        %1806 = vmatmul.mubr.f32.gmra.mxu0 %v1558
        %v1807 = vpop.f32.mrf.mxu0
        %v1808 = vadd.f32 0.0, %v1807
        %v1809 = vpop.f32.mrf.mxu0
        %1810 = vmatprep.mubr.f32.mxu0 0.0
        %1811 = vmatmul.mubr.f32.gmra.mxu0 %v1561
        %v1812 = vpop.f32.mrf.mxu0
        %v1813 = vpop.f32.mrf.mxu0
        %1814 = vmatprep.mubr.f32.mxu0 0.0
        %1815 = vmatmul.mubr.f32.gmra.mxu0 %v1564
        %v1816 = vpop.f32.mrf.mxu0
        %v1817 = vadd.f32 0.0, %v1816
        %v1818 = vpop.f32.mrf.mxu0
        %1819 = vmatprep.mubr.f32.mxu0 0.0
        %1820 = vmatmul.mubr.f32.gmra.mxu0 %v1567
        %v1821 = vpop.f32.mrf.mxu0
        %v1822 = vadd.f32 0.0, %v1821
        %v1823 = vpop.f32.mrf.mxu0
        %1824 = vmatprep.mubr.f32.mxu0 0.0
        %1825 = vmatmul.mubr.f32.gmra.mxu0 %v1570
        %v1826 = vpop.f32.mrf.mxu0
        %v1827 = vpop.f32.mrf.mxu0
        %1828 = vmatprep.mubr.f32.mxu0 0.0
        %1829 = vmatmul.mubr.f32.gmra.mxu0 %v1573
        %v1830 = vpop.f32.mrf.mxu0
        %v1831 = vadd.f32 0.0, %v1830
        %v1832 = vpop.f32.mrf.mxu0
        %1833 = vmatprep.mubr.f32.mxu0 0.0
        %1834 = vmatmul.mubr.f32.gmra.mxu0 %v1576
        %v1835 = vpop.f32.mrf.mxu0
        %v1836 = vadd.f32 0.0, %v1835
        %v1837 = vpop.f32.mrf.mxu0
        %1838 = vmatprep.mubr.f32.mxu0 0.0
        %1839 = vmatmul.mubr.f32.gmra.mxu0 %v1579
        %v1840 = vpop.f32.mrf.mxu0
        %v1841 = vpop.f32.mrf.mxu0
        %1842 = vmatprep.mubr.f32.mxu0 0.0
        %1843 = vmatmul.mubr.f32.gmra.mxu0 %v1582
        %v1844 = vpop.f32.mrf.mxu0
        %v1845 = vadd.f32 0.0, %v1844
        %v1846 = vpop.f32.mrf.mxu0
        %1847 = vmatprep.mubr.f32.mxu0 0.0
        %1848 = vmatmul.mubr.f32.gmra.mxu0 %v1585
        %v1849 = vpop.f32.mrf.mxu0
        %v1850 = vadd.f32 0.0, %v1849
        %v1851 = vpop.f32.mrf.mxu0
        %1852 = vmatprep.mubr.f32.mxu0 0.0
        %1853 = vmatmul.mubr.f32.gmra.mxu0 %v1588
        %v1854 = vpop.f32.mrf.mxu0
        %v1855 = vpop.f32.mrf.mxu0
        %1856 = vmatprep.mubr.f32.mxu0 0.0
        %1857 = vmatmul.mubr.f32.gmra.mxu0 %v1591
        %v1858 = vpop.f32.mrf.mxu0
        %v1859 = vadd.f32 0.0, %v1858
        %v1860 = vpop.f32.mrf.mxu0
        %1861 = vmatprep.mubr.f32.mxu0 0.0
        %1862 = vmatmul.mubr.f32.gmra.mxu0 %v1594
        %v1863 = vpop.f32.mrf.mxu0
        %v1864 = vadd.f32 0.0, %v1863
        %v1865 = vpop.f32.mrf.mxu0
        %1866 = vmatprep.mubr.f32.mxu0 0.0
        %1867 = vmatmul.mubr.f32.gmra.mxu0 %v1597
        %v1868 = vpop.f32.mrf.mxu0
        %v1869 = vpop.f32.mrf.mxu0
        %1870 = vmatprep.mubr.f32.mxu0 0.0
        %1871 = vmatmul.mubr.f32.gmra.mxu0 %v1600
        %v1872 = vpop.f32.mrf.mxu0
        %v1873 = vadd.f32 0.0, %v1872
        %v1874 = vpop.f32.mrf.mxu0
        %1875 = vmatprep.mubr.f32.mxu0 0.0
        %1876 = vmatmul.mubr.f32.gmra.mxu0 %v1603
        %v1877 = vpop.f32.mrf.mxu0
        %v1878 = vadd.f32 0.0, %v1877
        %v1879 = vpop.f32.mrf.mxu0
        %1880 = vmatprep.mubr.f32.mxu0 0.0
        %1881 = vmatmul.mubr.f32.gmra.mxu0 %v1606
        %v1882 = vpop.f32.mrf.mxu0
        %v1883 = vpop.f32.mrf.mxu0
        %1884 = vmatprep.mubr.f32.mxu0 0.0
        %1885 = vmatmul.mubr.f32.gmra.mxu0 %v1609
        %v1886 = vpop.f32.mrf.mxu0
        %v1887 = vadd.f32 0.0, %v1886
        %v1888 = vpop.f32.mrf.mxu0
        %1889 = vmatprep.mubr.f32.mxu0 0.0
        %1890 = vmatmul.mubr.f32.gmra.mxu0 %v1612
        %v1891 = vpop.f32.mrf.mxu0
        %v1892 = vadd.f32 0.0, %v1891
        %v1893 = vpop.f32.mrf.mxu0
        %1894 = vmatprep.mubr.f32.mxu0 0.0
        %1895 = vmatmul.mubr.f32.gmra.mxu0 %v1615
        %v1896 = vpop.f32.mrf.mxu0
        %v1897 = vpop.f32.mrf.mxu0
        %1898 = vmatprep.mubr.f32.mxu0 0.0
        %1899 = vmatmul.mubr.f32.gmra.mxu0 %v1618
        %v1900 = vpop.f32.mrf.mxu0
        %v1901 = vadd.f32 0.0, %v1900
        %v1902 = vpop.f32.mrf.mxu0
        %1903 = vmatprep.mubr.f32.mxu0 0.0
        %1904 = vmatmul.mubr.f32.gmra.mxu0 %v1621
        %v1905 = vpop.f32.mrf.mxu0
        %v1906 = vadd.f32 0.0, %v1905
        %v1907 = vpop.f32.mrf.mxu0
        %1908 = vmatprep.mubr.f32.mxu0 0.0
        %1909 = vmatmul.mubr.f32.gmra.mxu0 %v1624
        %v1910 = vpop.f32.mrf.mxu0
        %v1911 = vpop.f32.mrf.mxu0
        %1912 = vmatprep.mubr.f32.mxu0 0.0
        %1913 = vmatmul.mubr.f32.gmra.mxu0 %v1627
        %v1914 = vpop.f32.mrf.mxu0
        %v1915 = vadd.f32 0.0, %v1914
        %v1916 = vpop.f32.mrf.mxu0
        %1917 = vmatprep.mubr.f32.mxu0 0.0
        %1918 = vmatmul.mubr.f32.gmra.mxu0 %v1630
        %v1919 = vpop.f32.mrf.mxu0
        %v1920 = vadd.f32 0.0, %v1919
        %v1921 = vpop.f32.mrf.mxu0
        %1922 = vmatprep.mubr.f32.mxu0 0.0
        %1923 = vmatmul.mubr.f32.gmra.mxu0 %v1633
        %v1924 = vpop.f32.mrf.mxu0
        %v1925 = vpop.f32.mrf.mxu0
        %1926 = vdwg.mxu0
        %v1927 = vadd.f32 %v1219, %v1705
        %v1928 = vadd.f32 %v1224, %v1710
        %v1929 = vadd.f32 %v1233, %v1719
        %v1930 = vadd.f32 %v1238, %v1724
        %v1931 = vadd.f32 %v1247, %v1733
        %v1932 = vadd.f32 %v1252, %v1738
        %v1933 = vadd.f32 %v1261, %v1747
        %v1934 = vadd.f32 %v1266, %v1752
        %v1935 = vadd.f32 %v1275, %v1761
        %v1936 = vadd.f32 %v1280, %v1766
        %v1937 = vadd.f32 %v1289, %v1775
        %v1938 = vadd.f32 %v1294, %v1780
        %v1939 = vadd.f32 %v1303, %v1789
        %v1940 = vadd.f32 %v1308, %v1794
        %v1941 = vadd.f32 %v1317, %v1803
        %v1942 = vadd.f32 %v1322, %v1808
        %v1943 = vadd.f32 %v1331, %v1817
        %v1944 = vadd.f32 %v1336, %v1822
        %v1945 = vadd.f32 %v1345, %v1831
        %v1946 = vadd.f32 %v1350, %v1836
        %v1947 = vadd.f32 %v1359, %v1845
        %v1948 = vadd.f32 %v1364, %v1850
        %v1949 = vadd.f32 %v1373, %v1859
        %v1950 = vadd.f32 %v1378, %v1864
        %v1951 = vadd.f32 %v1387, %v1873
        %v1952 = vadd.f32 %v1392, %v1878
        %v1953 = vadd.f32 %v1401, %v1887
        %v1954 = vadd.f32 %v1406, %v1892
        %v1955 = vadd.f32 %v1415, %v1901
        %v1956 = vadd.f32 %v1420, %v1906
        %v1957 = vadd.f32 %v1429, %v1915
        %v1958 = vadd.f32 %v1434, %v1920
        %v1959 = vld [vmem:[#allocation2 + $0x18] sm:$0xff]
        %v1960 = vld [vmem:[#allocation2 + $0x20] sm:$0xff]
        %v1961 = vld [vmem:[#allocation2 + $0x28] sm:$0xff]
        %v1962 = vld [vmem:[#allocation2 + $0x30] sm:$0xff]
        %v1963 = vld [vmem:[#allocation2 + $0x38] sm:$0xff]
        %v1964 = vld [vmem:[#allocation2 + $0x40] sm:$0xff]
        %v1965 = vld [vmem:[#allocation2 + $0x48] sm:$0xff]
        %v1966 = vld [vmem:[#allocation2 + $0x50] sm:$0xff]
        %v1967 = vld [vmem:[#allocation2 + $0x58] sm:$0xff]
        %v1968 = vld [vmem:[#allocation2 + $0x60] sm:$0xff]
        %v1969 = vld [vmem:[#allocation2 + $0x68] sm:$0xff]
        %v1970 = vld [vmem:[#allocation2 + $0x70] sm:$0xff]
        %v1971 = vld [vmem:[#allocation2 + $0x78] sm:$0xff]
        %v1972 = vld [vmem:[#allocation2 + $0x80] sm:$0xff]
        %v1973 = vld [vmem:[#allocation2 + $0x88] sm:$0xff]
        %v1974 = vld [vmem:[#allocation2 + $0x90] sm:$0xff]
        %v1975 = vld [vmem:[#allocation2 + $0x98] sm:$0xff]
        %v1976 = vld [vmem:[#allocation2 + $0xa0] sm:$0xff]
        %v1977 = vld [vmem:[#allocation2 + $0xa8] sm:$0xff]
        %v1978 = vld [vmem:[#allocation2 + $0xb0] sm:$0xff]
        %v1979 = vld [vmem:[#allocation2 + $0xb8] sm:$0xff]
        %v1980 = vld [vmem:[#allocation2 + $0xc0] sm:$0xff]
        %v1981 = vld [vmem:[#allocation2 + $0xc8] sm:$0xff]
        %v1982 = vld [vmem:[#allocation2 + $0xd0] sm:$0xff]
        %v1983 = vld [vmem:[#allocation2 + $0xd8] sm:$0xff]
        %v1984 = vld [vmem:[#allocation2 + $0xe0] sm:$0xff]
        %v1985 = vld [vmem:[#allocation2 + $0xe8] sm:$0xff]
        %v1986 = vld [vmem:[#allocation2 + $0xf0] sm:$0xff]
        %v1987 = vld [vmem:[#allocation2 + $0xf8] sm:$0xff]
        %v1988 = vld [vmem:[#allocation2 + $0x100] sm:$0xff]
        %v1989 = vld [vmem:[#allocation2 + $0x108] sm:$0xff]
        %v1990 = vld [vmem:[#allocation2 + $0x110] sm:$0xff]
        %v1991 = vld [vmem:[#allocation2 + $0x118] sm:$0xff]
        %v1992 = vld [vmem:[#allocation2 + $0x120] sm:$0xff]
        %v1993 = vld [vmem:[#allocation2 + $0x128] sm:$0xff]
        %v1994 = vld [vmem:[#allocation2 + $0x130] sm:$0xff]
        %v1995 = vld [vmem:[#allocation2 + $0x138] sm:$0xff]
        %v1996 = vld [vmem:[#allocation2 + $0x140] sm:$0xff]
        %v1997 = vld [vmem:[#allocation2 + $0x148] sm:$0xff]
        %v1998 = vld [vmem:[#allocation2 + $0x150] sm:$0xff]
        %v1999 = vld [vmem:[#allocation2 + $0x158] sm:$0xff]
        %v2000 = vld [vmem:[#allocation2 + $0x160] sm:$0xff]
        %v2001 = vld [vmem:[#allocation2 + $0x168] sm:$0xff]
        %v2002 = vld [vmem:[#allocation2 + $0x170] sm:$0xff]
        %v2003 = vld [vmem:[#allocation2 + $0x178] sm:$0xff]
        %v2004 = vld [vmem:[#allocation2 + $0x180] sm:$0xff]
        %v2005 = vld [vmem:[#allocation2 + $0x188] sm:$0xff]
        %v2006 = vld [vmem:[#allocation2 + $0x190] sm:$0xff]
        %s2007 = scalar_lea.vmem %s303, 12
        %v2008 = vld [vmem:[%s2007] sm:$0xf]
        %v2010 = vsel %vm567, %v1959, 0
        %v2013 = vsel %vm567, %v1960, 0
        %v2016 = vsel %vm567, %v1961, 0
        %v2019 = vsel %vm567, %v1962, 0
        %v2022 = vsel %vm567, %v1963, 0
        %v2025 = vsel %vm567, %v1964, 0
        %v2028 = vsel %vm567, %v1965, 0
        %v2031 = vsel %vm567, %v1966, 0
        %v2034 = vsel %vm567, %v1967, 0
        %v2037 = vsel %vm567, %v1968, 0
        %v2040 = vsel %vm567, %v1969, 0
        %v2043 = vsel %vm567, %v1970, 0
        %v2046 = vsel %vm567, %v1971, 0
        %v2049 = vsel %vm567, %v1972, 0
        %v2052 = vsel %vm567, %v1973, 0
        %v2055 = vsel %vm567, %v1974, 0
        %v2058 = vsel %vm567, %v1975, 0
        %v2061 = vsel %vm567, %v1976, 0
        %v2064 = vsel %vm567, %v1977, 0
        %v2067 = vsel %vm567, %v1978, 0
        %v2070 = vsel %vm567, %v1979, 0
        %v2073 = vsel %vm567, %v1980, 0
        %v2076 = vsel %vm567, %v1981, 0
        %v2079 = vsel %vm567, %v1982, 0
        %v2082 = vsel %vm567, %v1983, 0
        %v2085 = vsel %vm567, %v1984, 0
        %v2088 = vsel %vm567, %v1985, 0
        %v2091 = vsel %vm567, %v1986, 0
        %v2094 = vsel %vm567, %v1987, 0
        %v2097 = vsel %vm567, %v1988, 0
        %v2100 = vsel %vm567, %v1989, 0
        %v2103 = vsel %vm567, %v1990, 0
        %v2106 = vsel %vm567, %v1991, 0
        %v2109 = vsel %vm567, %v1992, 0
        %v2112 = vsel %vm567, %v1993, 0
        %v2115 = vsel %vm567, %v1994, 0
        %v2118 = vsel %vm567, %v1995, 0
        %v2121 = vsel %vm567, %v1996, 0
        %v2124 = vsel %vm567, %v1997, 0
        %v2127 = vsel %vm567, %v1998, 0
        %v2130 = vsel %vm567, %v1999, 0
        %v2133 = vsel %vm567, %v2000, 0
        %v2136 = vsel %vm567, %v2001, 0
        %v2139 = vsel %vm567, %v2002, 0
        %v2142 = vsel %vm567, %v2003, 0
        %v2145 = vsel %vm567, %v2004, 0
        %v2148 = vsel %vm567, %v2005, 0
        %v2151 = vsel %vm567, %v2006, 0
        %v2154 = vsel %vm712, %v2008, 0
        %2156 = vmatprep.subr.mxu0 0.0
        %2157 = vmatpush1.msra.mxu0 0.0
        %2158 = vmatprep.subr.mxu0 0.0
        %2159 = vmatpush1.msra.mxu0 0.0
        %2160 = vmatprep.subr.mxu0 0.0
        %2161 = vmatpush1.msra.mxu0 0.0
        %2162 = vmatprep.subr.mxu0 0.0
        %2163 = vmatpush1.msra.mxu0 0.0
        %2164 = vmatprep.subr.mxu0 0.0
        %2165 = vmatpush1.msra.mxu0 0.0
        %2166 = vmatprep.subr.mxu0 0.0
        %2167 = vmatpush1.msra.mxu0 0.0
        %2168 = vmatprep.subr.mxu0 0.0
        %2169 = vmatpush1.msra.mxu0 0.0
        %2170 = vmatprep.subr.mxu0 0.0
        %2171 = vmatpush1.msra.mxu0 0.0
        %2172 = vmatprep.subr.mxu0 0.0
        %2173 = vmatpush1.msra.mxu0 0.0
        %2174 = vmatprep.subr.mxu0 0.0
        %2175 = vmatpush1.msra.mxu0 0.0
        %2176 = vmatprep.subr.mxu0 0.0
        %2177 = vmatpush1.msra.mxu0 0.0
        %2178 = vmatprep.subr.mxu0 0.0
        %2179 = vmatpush1.msra.mxu0 0.0
        %2180 = vmatprep.subr.mxu0 0.0
        %2181 = vmatpush1.msra.mxu0 0.0
        %2182 = vmatprep.subr.mxu0 0.0
        %2183 = vmatpush1.msra.mxu0 0.0
        %2184 = vmatprep.subr.mxu0 0.0
        %2185 = vmatpush1.msra.mxu0 0.0
        %2186 = vmatprep.subr.mxu0 0.0
        %2187 = vmatpush1.msra.mxu0 %v2154
        %2188 = vmatprep.subr.mxu0 0.0
        %2189 = vmatpush2.msra.mxu0 0.0
        %2190 = vmatprep.subr.mxu0 0.0
        %2191 = vmatpush2.msra.mxu0 0.0
        %2192 = vmatprep.subr.mxu0 0.0
        %2193 = vmatpush2.msra.mxu0 0.0
        %2194 = vmatprep.subr.mxu0 0.0
        %2195 = vmatpush2.msra.mxu0 0.0
        %2196 = vmatprep.subr.mxu0 0.0
        %2197 = vmatpush2.msra.mxu0 0.0
        %2198 = vmatprep.subr.mxu0 0.0
        %2199 = vmatpush2.msra.mxu0 0.0
        %2200 = vmatprep.subr.mxu0 0.0
        %2201 = vmatpush2.msra.mxu0 0.0
        %2202 = vmatprep.subr.mxu0 0.0
        %2203 = vmatpush2.msra.mxu0 0.0
        %2204 = vmatprep.subr.mxu0 0.0
        %2205 = vmatpush2.msra.mxu0 0.0
        %2206 = vmatprep.subr.mxu0 0.0
        %2207 = vmatpush2.msra.mxu0 0.0
        %2208 = vmatprep.subr.mxu0 0.0
        %2209 = vmatpush2.msra.mxu0 0.0
        %2210 = vmatprep.subr.mxu0 0.0
        %2211 = vmatpush2.msra.mxu0 0.0
        %2212 = vmatprep.subr.mxu0 0.0
        %2213 = vmatpush2.msra.mxu0 0.0
        %2214 = vmatprep.subr.mxu0 0.0
        %2215 = vmatpush2.msra.mxu0 0.0
        %2216 = vmatprep.subr.mxu0 0.0
        %2217 = vmatpush2.msra.mxu0 0.0
        %2218 = vmatprep.subr.mxu0 0.0
        %2219 = vmatpush2.msra.mxu0 0.0
        %2220 = vmatprep.mubr.f32.mxu0 0.0
        %2221 = vmatmul.mubr.f32.gmra.mxu0 %v2010
        %v2222 = vpop.f32.mrf.mxu0
        %v2223 = vadd.f32 0.0, %v2222
        %v2224 = vpop.f32.mrf.mxu0
        %2225 = vmatprep.mubr.f32.mxu0 0.0
        %2226 = vmatmul.mubr.f32.gmra.mxu0 %v2013
        %v2227 = vpop.f32.mrf.mxu0
        %v2228 = vadd.f32 0.0, %v2227
        %v2229 = vpop.f32.mrf.mxu0
        %2230 = vmatprep.mubr.f32.mxu0 0.0
        %2231 = vmatmul.mubr.f32.gmra.mxu0 %v2016
        %v2232 = vpop.f32.mrf.mxu0
        %v2233 = vpop.f32.mrf.mxu0
        %2234 = vmatprep.mubr.f32.mxu0 0.0
        %2235 = vmatmul.mubr.f32.gmra.mxu0 %v2019
        %v2236 = vpop.f32.mrf.mxu0
        %v2237 = vadd.f32 0.0, %v2236
        %v2238 = vpop.f32.mrf.mxu0
        %2239 = vmatprep.mubr.f32.mxu0 0.0
        %2240 = vmatmul.mubr.f32.gmra.mxu0 %v2022
        %v2241 = vpop.f32.mrf.mxu0
        %v2242 = vadd.f32 0.0, %v2241
        %v2243 = vpop.f32.mrf.mxu0
        %2244 = vmatprep.mubr.f32.mxu0 0.0
        %2245 = vmatmul.mubr.f32.gmra.mxu0 %v2025
        %v2246 = vpop.f32.mrf.mxu0
        %v2247 = vpop.f32.mrf.mxu0
        %2248 = vmatprep.mubr.f32.mxu0 0.0
        %2249 = vmatmul.mubr.f32.gmra.mxu0 %v2028
        %v2250 = vpop.f32.mrf.mxu0
        %v2251 = vadd.f32 0.0, %v2250
        %v2252 = vpop.f32.mrf.mxu0
        %2253 = vmatprep.mubr.f32.mxu0 0.0
        %2254 = vmatmul.mubr.f32.gmra.mxu0 %v2031
        %v2255 = vpop.f32.mrf.mxu0
        %v2256 = vadd.f32 0.0, %v2255
        %v2257 = vpop.f32.mrf.mxu0
        %2258 = vmatprep.mubr.f32.mxu0 0.0
        %2259 = vmatmul.mubr.f32.gmra.mxu0 %v2034
        %v2260 = vpop.f32.mrf.mxu0
        %v2261 = vpop.f32.mrf.mxu0
        %2262 = vmatprep.mubr.f32.mxu0 0.0
        %2263 = vmatmul.mubr.f32.gmra.mxu0 %v2037
        %v2264 = vpop.f32.mrf.mxu0
        %v2265 = vadd.f32 0.0, %v2264
        %v2266 = vpop.f32.mrf.mxu0
        %2267 = vmatprep.mubr.f32.mxu0 0.0
        %2268 = vmatmul.mubr.f32.gmra.mxu0 %v2040
        %v2269 = vpop.f32.mrf.mxu0
        %v2270 = vadd.f32 0.0, %v2269
        %v2271 = vpop.f32.mrf.mxu0
        %2272 = vmatprep.mubr.f32.mxu0 0.0
        %2273 = vmatmul.mubr.f32.gmra.mxu0 %v2043
        %v2274 = vpop.f32.mrf.mxu0
        %v2275 = vpop.f32.mrf.mxu0
        %2276 = vmatprep.mubr.f32.mxu0 0.0
        %2277 = vmatmul.mubr.f32.gmra.mxu0 %v2046
        %v2278 = vpop.f32.mrf.mxu0
        %v2279 = vadd.f32 0.0, %v2278
        %v2280 = vpop.f32.mrf.mxu0
        %2281 = vmatprep.mubr.f32.mxu0 0.0
        %2282 = vmatmul.mubr.f32.gmra.mxu0 %v2049
        %v2283 = vpop.f32.mrf.mxu0
        %v2284 = vadd.f32 0.0, %v2283
        %v2285 = vpop.f32.mrf.mxu0
        %2286 = vmatprep.mubr.f32.mxu0 0.0
        %2287 = vmatmul.mubr.f32.gmra.mxu0 %v2052
        %v2288 = vpop.f32.mrf.mxu0
        %v2289 = vpop.f32.mrf.mxu0
        %2290 = vmatprep.mubr.f32.mxu0 0.0
        %2291 = vmatmul.mubr.f32.gmra.mxu0 %v2055
        %v2292 = vpop.f32.mrf.mxu0
        %v2293 = vadd.f32 0.0, %v2292
        %v2294 = vpop.f32.mrf.mxu0
        %2295 = vmatprep.mubr.f32.mxu0 0.0
        %2296 = vmatmul.mubr.f32.gmra.mxu0 %v2058
        %v2297 = vpop.f32.mrf.mxu0
        %v2298 = vadd.f32 0.0, %v2297
        %v2299 = vpop.f32.mrf.mxu0
        %2300 = vmatprep.mubr.f32.mxu0 0.0
        %2301 = vmatmul.mubr.f32.gmra.mxu0 %v2061
        %v2302 = vpop.f32.mrf.mxu0
        %v2303 = vpop.f32.mrf.mxu0
        %2304 = vmatprep.mubr.f32.mxu0 0.0
        %2305 = vmatmul.mubr.f32.gmra.mxu0 %v2064
        %v2306 = vpop.f32.mrf.mxu0
        %v2307 = vadd.f32 0.0, %v2306
        %v2308 = vpop.f32.mrf.mxu0
        %2309 = vmatprep.mubr.f32.mxu0 0.0
        %2310 = vmatmul.mubr.f32.gmra.mxu0 %v2067
        %v2311 = vpop.f32.mrf.mxu0
        %v2312 = vadd.f32 0.0, %v2311
        %v2313 = vpop.f32.mrf.mxu0
        %2314 = vmatprep.mubr.f32.mxu0 0.0
        %2315 = vmatmul.mubr.f32.gmra.mxu0 %v2070
        %v2316 = vpop.f32.mrf.mxu0
        %v2317 = vpop.f32.mrf.mxu0
        %2318 = vmatprep.mubr.f32.mxu0 0.0
        %2319 = vmatmul.mubr.f32.gmra.mxu0 %v2073
        %v2320 = vpop.f32.mrf.mxu0
        %v2321 = vadd.f32 0.0, %v2320
        %v2322 = vpop.f32.mrf.mxu0
        %2323 = vmatprep.mubr.f32.mxu0 0.0
        %2324 = vmatmul.mubr.f32.gmra.mxu0 %v2076
        %v2325 = vpop.f32.mrf.mxu0
        %v2326 = vadd.f32 0.0, %v2325
        %v2327 = vpop.f32.mrf.mxu0
        %2328 = vmatprep.mubr.f32.mxu0 0.0
        %2329 = vmatmul.mubr.f32.gmra.mxu0 %v2079
        %v2330 = vpop.f32.mrf.mxu0
        %v2331 = vpop.f32.mrf.mxu0
        %2332 = vmatprep.mubr.f32.mxu0 0.0
        %2333 = vmatmul.mubr.f32.gmra.mxu0 %v2082
        %v2334 = vpop.f32.mrf.mxu0
        %v2335 = vadd.f32 0.0, %v2334
        %v2336 = vpop.f32.mrf.mxu0
        %2337 = vmatprep.mubr.f32.mxu0 0.0
        %2338 = vmatmul.mubr.f32.gmra.mxu0 %v2085
        %v2339 = vpop.f32.mrf.mxu0
        %v2340 = vadd.f32 0.0, %v2339
        %v2341 = vpop.f32.mrf.mxu0
        %2342 = vmatprep.mubr.f32.mxu0 0.0
        %2343 = vmatmul.mubr.f32.gmra.mxu0 %v2088
        %v2344 = vpop.f32.mrf.mxu0
        %v2345 = vpop.f32.mrf.mxu0
        %2346 = vmatprep.mubr.f32.mxu0 0.0
        %2347 = vmatmul.mubr.f32.gmra.mxu0 %v2091
        %v2348 = vpop.f32.mrf.mxu0
        %v2349 = vadd.f32 0.0, %v2348
        %v2350 = vpop.f32.mrf.mxu0
        %2351 = vmatprep.mubr.f32.mxu0 0.0
        %2352 = vmatmul.mubr.f32.gmra.mxu0 %v2094
        %v2353 = vpop.f32.mrf.mxu0
        %v2354 = vadd.f32 0.0, %v2353
        %v2355 = vpop.f32.mrf.mxu0
        %2356 = vmatprep.mubr.f32.mxu0 0.0
        %2357 = vmatmul.mubr.f32.gmra.mxu0 %v2097
        %v2358 = vpop.f32.mrf.mxu0
        %v2359 = vpop.f32.mrf.mxu0
        %2360 = vmatprep.mubr.f32.mxu0 0.0
        %2361 = vmatmul.mubr.f32.gmra.mxu0 %v2100
        %v2362 = vpop.f32.mrf.mxu0
        %v2363 = vadd.f32 0.0, %v2362
        %v2364 = vpop.f32.mrf.mxu0
        %2365 = vmatprep.mubr.f32.mxu0 0.0
        %2366 = vmatmul.mubr.f32.gmra.mxu0 %v2103
        %v2367 = vpop.f32.mrf.mxu0
        %v2368 = vadd.f32 0.0, %v2367
        %v2369 = vpop.f32.mrf.mxu0
        %2370 = vmatprep.mubr.f32.mxu0 0.0
        %2371 = vmatmul.mubr.f32.gmra.mxu0 %v2106
        %v2372 = vpop.f32.mrf.mxu0
        %v2373 = vpop.f32.mrf.mxu0
        %2374 = vmatprep.mubr.f32.mxu0 0.0
        %2375 = vmatmul.mubr.f32.gmra.mxu0 %v2109
        %v2376 = vpop.f32.mrf.mxu0
        %v2377 = vadd.f32 0.0, %v2376
        %v2378 = vpop.f32.mrf.mxu0
        %2379 = vmatprep.mubr.f32.mxu0 0.0
        %2380 = vmatmul.mubr.f32.gmra.mxu0 %v2112
        %v2381 = vpop.f32.mrf.mxu0
        %v2382 = vadd.f32 0.0, %v2381
        %v2383 = vpop.f32.mrf.mxu0
        %2384 = vmatprep.mubr.f32.mxu0 0.0
        %2385 = vmatmul.mubr.f32.gmra.mxu0 %v2115
        %v2386 = vpop.f32.mrf.mxu0
        %v2387 = vpop.f32.mrf.mxu0
        %2388 = vmatprep.mubr.f32.mxu0 0.0
        %2389 = vmatmul.mubr.f32.gmra.mxu0 %v2118
        %v2390 = vpop.f32.mrf.mxu0
        %v2391 = vadd.f32 0.0, %v2390
        %v2392 = vpop.f32.mrf.mxu0
        %2393 = vmatprep.mubr.f32.mxu0 0.0
        %2394 = vmatmul.mubr.f32.gmra.mxu0 %v2121
        %v2395 = vpop.f32.mrf.mxu0
        %v2396 = vadd.f32 0.0, %v2395
        %v2397 = vpop.f32.mrf.mxu0
        %2398 = vmatprep.mubr.f32.mxu0 0.0
        %2399 = vmatmul.mubr.f32.gmra.mxu0 %v2124
        %v2400 = vpop.f32.mrf.mxu0
        %v2401 = vpop.f32.mrf.mxu0
        %2402 = vmatprep.mubr.f32.mxu0 0.0
        %2403 = vmatmul.mubr.f32.gmra.mxu0 %v2127
        %v2404 = vpop.f32.mrf.mxu0
        %v2405 = vadd.f32 0.0, %v2404
        %v2406 = vpop.f32.mrf.mxu0
        %2407 = vmatprep.mubr.f32.mxu0 0.0
        %2408 = vmatmul.mubr.f32.gmra.mxu0 %v2130
        %v2409 = vpop.f32.mrf.mxu0
        %v2410 = vadd.f32 0.0, %v2409
        %v2411 = vpop.f32.mrf.mxu0
        %2412 = vmatprep.mubr.f32.mxu0 0.0
        %2413 = vmatmul.mubr.f32.gmra.mxu0 %v2133
        %v2414 = vpop.f32.mrf.mxu0
        %v2415 = vpop.f32.mrf.mxu0
        %2416 = vmatprep.mubr.f32.mxu0 0.0
        %2417 = vmatmul.mubr.f32.gmra.mxu0 %v2136
        %v2418 = vpop.f32.mrf.mxu0
        %v2419 = vadd.f32 0.0, %v2418
        %v2420 = vpop.f32.mrf.mxu0
        %2421 = vmatprep.mubr.f32.mxu0 0.0
        %2422 = vmatmul.mubr.f32.gmra.mxu0 %v2139
        %v2423 = vpop.f32.mrf.mxu0
        %v2424 = vadd.f32 0.0, %v2423
        %v2425 = vpop.f32.mrf.mxu0
        %2426 = vmatprep.mubr.f32.mxu0 0.0
        %2427 = vmatmul.mubr.f32.gmra.mxu0 %v2142
        %v2428 = vpop.f32.mrf.mxu0
        %v2429 = vpop.f32.mrf.mxu0
        %2430 = vmatprep.mubr.f32.mxu0 0.0
        %2431 = vmatmul.mubr.f32.gmra.mxu0 %v2145
        %v2432 = vpop.f32.mrf.mxu0
        %v2433 = vadd.f32 0.0, %v2432
        %v2434 = vpop.f32.mrf.mxu0
        %2435 = vmatprep.mubr.f32.mxu0 0.0
        %2436 = vmatmul.mubr.f32.gmra.mxu0 %v2148
        %v2437 = vpop.f32.mrf.mxu0
        %v2438 = vadd.f32 0.0, %v2437
        %v2439 = vpop.f32.mrf.mxu0
        %2440 = vmatprep.mubr.f32.mxu0 0.0
        %2441 = vmatmul.mubr.f32.gmra.mxu0 %v2151
        %v2442 = vpop.f32.mrf.mxu0
        %v2443 = vpop.f32.mrf.mxu0
        %2444 = vdwg.mxu0
        %v2445 = vadd.f32 %v1927, %v2223
        %v2446 = vadd.f32 %v1928, %v2228
        %v2447 = vadd.f32 %v1929, %v2237
        %v2448 = vadd.f32 %v1930, %v2242
        %v2449 = vadd.f32 %v1931, %v2251
        %v2450 = vadd.f32 %v1932, %v2256
        %v2451 = vadd.f32 %v1933, %v2265
        %v2452 = vadd.f32 %v1934, %v2270
        %v2453 = vadd.f32 %v1935, %v2279
        %v2454 = vadd.f32 %v1936, %v2284
        %v2455 = vadd.f32 %v1937, %v2293
        %v2456 = vadd.f32 %v1938, %v2298
        %v2457 = vadd.f32 %v1939, %v2307
        %v2458 = vadd.f32 %v1940, %v2312
        %v2459 = vadd.f32 %v1941, %v2321
        %v2460 = vadd.f32 %v1942, %v2326
        %v2461 = vadd.f32 %v1943, %v2335
        %v2462 = vadd.f32 %v1944, %v2340
        %v2463 = vadd.f32 %v1945, %v2349
        %v2464 = vadd.f32 %v1946, %v2354
        %v2465 = vadd.f32 %v1947, %v2363
        %v2466 = vadd.f32 %v1948, %v2368
        %v2467 = vadd.f32 %v1949, %v2377
        %v2468 = vadd.f32 %v1950, %v2382
        %v2469 = vadd.f32 %v1951, %v2391
        %v2470 = vadd.f32 %v1952, %v2396
        %v2471 = vadd.f32 %v1953, %v2405
        %v2472 = vadd.f32 %v1954, %v2410
        %v2473 = vadd.f32 %v1955, %v2419
        %v2474 = vadd.f32 %v1956, %v2424
        %v2475 = vadd.f32 %v1957, %v2433
        %v2476 = vadd.f32 %v1958, %v2438
        %v2477 = vld [vmem:[#allocation2 + $0x19] sm:$0xff]
        %v2478 = vld [vmem:[#allocation2 + $0x21] sm:$0xff]
        %v2479 = vld [vmem:[#allocation2 + $0x29] sm:$0xff]
        %v2480 = vld [vmem:[#allocation2 + $0x31] sm:$0xff]
        %v2481 = vld [vmem:[#allocation2 + $0x39] sm:$0xff]
        %v2482 = vld [vmem:[#allocation2 + $0x41] sm:$0xff]
        %v2483 = vld [vmem:[#allocation2 + $0x49] sm:$0xff]
        %v2484 = vld [vmem:[#allocation2 + $0x51] sm:$0xff]
        %v2485 = vld [vmem:[#allocation2 + $0x59] sm:$0xff]
        %v2486 = vld [vmem:[#allocation2 + $0x61] sm:$0xff]
        %v2487 = vld [vmem:[#allocation2 + $0x69] sm:$0xff]
        %v2488 = vld [vmem:[#allocation2 + $0x71] sm:$0xff]
        %v2489 = vld [vmem:[#allocation2 + $0x79] sm:$0xff]
        %v2490 = vld [vmem:[#allocation2 + $0x81] sm:$0xff]
        %v2491 = vld [vmem:[#allocation2 + $0x89] sm:$0xff]
        %v2492 = vld [vmem:[#allocation2 + $0x91] sm:$0xff]
        %v2493 = vld [vmem:[#allocation2 + $0x99] sm:$0xff]
        %v2494 = vld [vmem:[#allocation2 + $0xa1] sm:$0xff]
        %v2495 = vld [vmem:[#allocation2 + $0xa9] sm:$0xff]
        %v2496 = vld [vmem:[#allocation2 + $0xb1] sm:$0xff]
        %v2497 = vld [vmem:[#allocation2 + $0xb9] sm:$0xff]
        %v2498 = vld [vmem:[#allocation2 + $0xc1] sm:$0xff]
        %v2499 = vld [vmem:[#allocation2 + $0xc9] sm:$0xff]
        %v2500 = vld [vmem:[#allocation2 + $0xd1] sm:$0xff]
        %v2501 = vld [vmem:[#allocation2 + $0xd9] sm:$0xff]
        %v2502 = vld [vmem:[#allocation2 + $0xe1] sm:$0xff]
        %v2503 = vld [vmem:[#allocation2 + $0xe9] sm:$0xff]
        %v2504 = vld [vmem:[#allocation2 + $0xf1] sm:$0xff]
        %v2505 = vld [vmem:[#allocation2 + $0xf9] sm:$0xff]
        %v2506 = vld [vmem:[#allocation2 + $0x101] sm:$0xff]
        %v2507 = vld [vmem:[#allocation2 + $0x109] sm:$0xff]
        %v2508 = vld [vmem:[#allocation2 + $0x111] sm:$0xff]
        %v2509 = vld [vmem:[#allocation2 + $0x119] sm:$0xff]
        %v2510 = vld [vmem:[#allocation2 + $0x121] sm:$0xff]
        %v2511 = vld [vmem:[#allocation2 + $0x129] sm:$0xff]
        %v2512 = vld [vmem:[#allocation2 + $0x131] sm:$0xff]
        %v2513 = vld [vmem:[#allocation2 + $0x139] sm:$0xff]
        %v2514 = vld [vmem:[#allocation2 + $0x141] sm:$0xff]
        %v2515 = vld [vmem:[#allocation2 + $0x149] sm:$0xff]
        %v2516 = vld [vmem:[#allocation2 + $0x151] sm:$0xff]
        %v2517 = vld [vmem:[#allocation2 + $0x159] sm:$0xff]
        %v2518 = vld [vmem:[#allocation2 + $0x161] sm:$0xff]
        %v2519 = vld [vmem:[#allocation2 + $0x169] sm:$0xff]
        %v2520 = vld [vmem:[#allocation2 + $0x171] sm:$0xff]
        %v2521 = vld [vmem:[#allocation2 + $0x179] sm:$0xff]
        %v2522 = vld [vmem:[#allocation2 + $0x181] sm:$0xff]
        %v2523 = vld [vmem:[#allocation2 + $0x189] sm:$0xff]
        %v2524 = vld [vmem:[#allocation2 + $0x191] sm:$0xff]
        %s2525 = scalar_lea.vmem %s303, 16
        %v2526 = vld [vmem:[%s2525] sm:$0xf]
        %v2528 = vsel %vm567, %v2477, 0
        %v2531 = vsel %vm567, %v2478, 0
        %v2534 = vsel %vm567, %v2479, 0
        %v2537 = vsel %vm567, %v2480, 0
        %v2540 = vsel %vm567, %v2481, 0
        %v2543 = vsel %vm567, %v2482, 0
        %v2546 = vsel %vm567, %v2483, 0
        %v2549 = vsel %vm567, %v2484, 0
        %v2552 = vsel %vm567, %v2485, 0
        %v2555 = vsel %vm567, %v2486, 0
        %v2558 = vsel %vm567, %v2487, 0
        %v2561 = vsel %vm567, %v2488, 0
        %v2564 = vsel %vm567, %v2489, 0
        %v2567 = vsel %vm567, %v2490, 0
        %v2570 = vsel %vm567, %v2491, 0
        %v2573 = vsel %vm567, %v2492, 0
        %v2576 = vsel %vm567, %v2493, 0
        %v2579 = vsel %vm567, %v2494, 0
        %v2582 = vsel %vm567, %v2495, 0
        %v2585 = vsel %vm567, %v2496, 0
        %v2588 = vsel %vm567, %v2497, 0
        %v2591 = vsel %vm567, %v2498, 0
        %v2594 = vsel %vm567, %v2499, 0
        %v2597 = vsel %vm567, %v2500, 0
        %v2600 = vsel %vm567, %v2501, 0
        %v2603 = vsel %vm567, %v2502, 0
        %v2606 = vsel %vm567, %v2503, 0
        %v2609 = vsel %vm567, %v2504, 0
        %v2612 = vsel %vm567, %v2505, 0
        %v2615 = vsel %vm567, %v2506, 0
        %v2618 = vsel %vm567, %v2507, 0
        %v2621 = vsel %vm567, %v2508, 0
        %v2624 = vsel %vm567, %v2509, 0
        %v2627 = vsel %vm567, %v2510, 0
        %v2630 = vsel %vm567, %v2511, 0
        %v2633 = vsel %vm567, %v2512, 0
        %v2636 = vsel %vm567, %v2513, 0
        %v2639 = vsel %vm567, %v2514, 0
        %v2642 = vsel %vm567, %v2515, 0
        %v2645 = vsel %vm567, %v2516, 0
        %v2648 = vsel %vm567, %v2517, 0
        %v2651 = vsel %vm567, %v2518, 0
        %v2654 = vsel %vm567, %v2519, 0
        %v2657 = vsel %vm567, %v2520, 0
        %v2660 = vsel %vm567, %v2521, 0
        %v2663 = vsel %vm567, %v2522, 0
        %v2666 = vsel %vm567, %v2523, 0
        %v2669 = vsel %vm567, %v2524, 0
        %v2672 = vsel %vm712, %v2526, 0
        %2674 = vmatprep.subr.mxu0 0.0
        %2675 = vmatpush1.msra.mxu0 0.0
        %2676 = vmatprep.subr.mxu0 0.0
        %2677 = vmatpush1.msra.mxu0 0.0
        %2678 = vmatprep.subr.mxu0 0.0
        %2679 = vmatpush1.msra.mxu0 0.0
        %2680 = vmatprep.subr.mxu0 0.0
        %2681 = vmatpush1.msra.mxu0 0.0
        %2682 = vmatprep.subr.mxu0 0.0
        %2683 = vmatpush1.msra.mxu0 0.0
        %2684 = vmatprep.subr.mxu0 0.0
        %2685 = vmatpush1.msra.mxu0 0.0
        %2686 = vmatprep.subr.mxu0 0.0
        %2687 = vmatpush1.msra.mxu0 0.0
        %2688 = vmatprep.subr.mxu0 0.0
        %2689 = vmatpush1.msra.mxu0 0.0
        %2690 = vmatprep.subr.mxu0 0.0
        %2691 = vmatpush1.msra.mxu0 0.0
        %2692 = vmatprep.subr.mxu0 0.0
        %2693 = vmatpush1.msra.mxu0 0.0
        %2694 = vmatprep.subr.mxu0 0.0
        %2695 = vmatpush1.msra.mxu0 0.0
        %2696 = vmatprep.subr.mxu0 0.0
        %2697 = vmatpush1.msra.mxu0 0.0
        %2698 = vmatprep.subr.mxu0 0.0
        %2699 = vmatpush1.msra.mxu0 0.0
        %2700 = vmatprep.subr.mxu0 0.0
        %2701 = vmatpush1.msra.mxu0 0.0
        %2702 = vmatprep.subr.mxu0 0.0
        %2703 = vmatpush1.msra.mxu0 0.0
        %2704 = vmatprep.subr.mxu0 0.0
        %2705 = vmatpush1.msra.mxu0 %v2672
        %2706 = vmatprep.subr.mxu0 0.0
        %2707 = vmatpush2.msra.mxu0 0.0
        %2708 = vmatprep.subr.mxu0 0.0
        %2709 = vmatpush2.msra.mxu0 0.0
        %2710 = vmatprep.subr.mxu0 0.0
        %2711 = vmatpush2.msra.mxu0 0.0
        %2712 = vmatprep.subr.mxu0 0.0
        %2713 = vmatpush2.msra.mxu0 0.0
        %2714 = vmatprep.subr.mxu0 0.0
        %2715 = vmatpush2.msra.mxu0 0.0
        %2716 = vmatprep.subr.mxu0 0.0
        %2717 = vmatpush2.msra.mxu0 0.0
        %2718 = vmatprep.subr.mxu0 0.0
        %2719 = vmatpush2.msra.mxu0 0.0
        %2720 = vmatprep.subr.mxu0 0.0
        %2721 = vmatpush2.msra.mxu0 0.0
        %2722 = vmatprep.subr.mxu0 0.0
        %2723 = vmatpush2.msra.mxu0 0.0
        %2724 = vmatprep.subr.mxu0 0.0
        %2725 = vmatpush2.msra.mxu0 0.0
        %2726 = vmatprep.subr.mxu0 0.0
        %2727 = vmatpush2.msra.mxu0 0.0
        %2728 = vmatprep.subr.mxu0 0.0
        %2729 = vmatpush2.msra.mxu0 0.0
        %2730 = vmatprep.subr.mxu0 0.0
        %2731 = vmatpush2.msra.mxu0 0.0
        %2732 = vmatprep.subr.mxu0 0.0
        %2733 = vmatpush2.msra.mxu0 0.0
        %2734 = vmatprep.subr.mxu0 0.0
        %2735 = vmatpush2.msra.mxu0 0.0
        %2736 = vmatprep.subr.mxu0 0.0
        %2737 = vmatpush2.msra.mxu0 0.0
        %2738 = vmatprep.mubr.f32.mxu0 0.0
        %2739 = vmatmul.mubr.f32.gmra.mxu0 %v2528
        %v2740 = vpop.f32.mrf.mxu0
        %v2741 = vadd.f32 0.0, %v2740
        %v2742 = vpop.f32.mrf.mxu0
        %2743 = vmatprep.mubr.f32.mxu0 0.0
        %2744 = vmatmul.mubr.f32.gmra.mxu0 %v2531
        %v2745 = vpop.f32.mrf.mxu0
        %v2746 = vadd.f32 0.0, %v2745
        %v2747 = vpop.f32.mrf.mxu0
        %2748 = vmatprep.mubr.f32.mxu0 0.0
        %2749 = vmatmul.mubr.f32.gmra.mxu0 %v2534
        %v2750 = vpop.f32.mrf.mxu0
        %v2751 = vpop.f32.mrf.mxu0
        %2752 = vmatprep.mubr.f32.mxu0 0.0
        %2753 = vmatmul.mubr.f32.gmra.mxu0 %v2537
        %v2754 = vpop.f32.mrf.mxu0
        %v2755 = vadd.f32 0.0, %v2754
        %v2756 = vpop.f32.mrf.mxu0
        %2757 = vmatprep.mubr.f32.mxu0 0.0
        %2758 = vmatmul.mubr.f32.gmra.mxu0 %v2540
        %v2759 = vpop.f32.mrf.mxu0
        %v2760 = vadd.f32 0.0, %v2759
        %v2761 = vpop.f32.mrf.mxu0
        %2762 = vmatprep.mubr.f32.mxu0 0.0
        %2763 = vmatmul.mubr.f32.gmra.mxu0 %v2543
        %v2764 = vpop.f32.mrf.mxu0
        %v2765 = vpop.f32.mrf.mxu0
        %2766 = vmatprep.mubr.f32.mxu0 0.0
        %2767 = vmatmul.mubr.f32.gmra.mxu0 %v2546
        %v2768 = vpop.f32.mrf.mxu0
        %v2769 = vadd.f32 0.0, %v2768
        %v2770 = vpop.f32.mrf.mxu0
        %2771 = vmatprep.mubr.f32.mxu0 0.0
        %2772 = vmatmul.mubr.f32.gmra.mxu0 %v2549
        %v2773 = vpop.f32.mrf.mxu0
        %v2774 = vadd.f32 0.0, %v2773
        %v2775 = vpop.f32.mrf.mxu0
        %2776 = vmatprep.mubr.f32.mxu0 0.0
        %2777 = vmatmul.mubr.f32.gmra.mxu0 %v2552
        %v2778 = vpop.f32.mrf.mxu0
        %v2779 = vpop.f32.mrf.mxu0
        %2780 = vmatprep.mubr.f32.mxu0 0.0
        %2781 = vmatmul.mubr.f32.gmra.mxu0 %v2555
        %v2782 = vpop.f32.mrf.mxu0
        %v2783 = vadd.f32 0.0, %v2782
        %v2784 = vpop.f32.mrf.mxu0
        %2785 = vmatprep.mubr.f32.mxu0 0.0
        %2786 = vmatmul.mubr.f32.gmra.mxu0 %v2558
        %v2787 = vpop.f32.mrf.mxu0
        %v2788 = vadd.f32 0.0, %v2787
        %v2789 = vpop.f32.mrf.mxu0
        %2790 = vmatprep.mubr.f32.mxu0 0.0
        %2791 = vmatmul.mubr.f32.gmra.mxu0 %v2561
        %v2792 = vpop.f32.mrf.mxu0
        %v2793 = vpop.f32.mrf.mxu0
        %2794 = vmatprep.mubr.f32.mxu0 0.0
        %2795 = vmatmul.mubr.f32.gmra.mxu0 %v2564
        %v2796 = vpop.f32.mrf.mxu0
        %v2797 = vadd.f32 0.0, %v2796
        %v2798 = vpop.f32.mrf.mxu0
        %2799 = vmatprep.mubr.f32.mxu0 0.0
        %2800 = vmatmul.mubr.f32.gmra.mxu0 %v2567
        %v2801 = vpop.f32.mrf.mxu0
        %v2802 = vadd.f32 0.0, %v2801
        %v2803 = vpop.f32.mrf.mxu0
        %2804 = vmatprep.mubr.f32.mxu0 0.0
        %2805 = vmatmul.mubr.f32.gmra.mxu0 %v2570
        %v2806 = vpop.f32.mrf.mxu0
        %v2807 = vpop.f32.mrf.mxu0
        %2808 = vmatprep.mubr.f32.mxu0 0.0
        %2809 = vmatmul.mubr.f32.gmra.mxu0 %v2573
        %v2810 = vpop.f32.mrf.mxu0
        %v2811 = vadd.f32 0.0, %v2810
        %v2812 = vpop.f32.mrf.mxu0
        %2813 = vmatprep.mubr.f32.mxu0 0.0
        %2814 = vmatmul.mubr.f32.gmra.mxu0 %v2576
        %v2815 = vpop.f32.mrf.mxu0
        %v2816 = vadd.f32 0.0, %v2815
        %v2817 = vpop.f32.mrf.mxu0
        %2818 = vmatprep.mubr.f32.mxu0 0.0
        %2819 = vmatmul.mubr.f32.gmra.mxu0 %v2579
        %v2820 = vpop.f32.mrf.mxu0
        %v2821 = vpop.f32.mrf.mxu0
        %2822 = vmatprep.mubr.f32.mxu0 0.0
        %2823 = vmatmul.mubr.f32.gmra.mxu0 %v2582
        %v2824 = vpop.f32.mrf.mxu0
        %v2825 = vadd.f32 0.0, %v2824
        %v2826 = vpop.f32.mrf.mxu0
        %2827 = vmatprep.mubr.f32.mxu0 0.0
        %2828 = vmatmul.mubr.f32.gmra.mxu0 %v2585
        %v2829 = vpop.f32.mrf.mxu0
        %v2830 = vadd.f32 0.0, %v2829
        %v2831 = vpop.f32.mrf.mxu0
        %2832 = vmatprep.mubr.f32.mxu0 0.0
        %2833 = vmatmul.mubr.f32.gmra.mxu0 %v2588
        %v2834 = vpop.f32.mrf.mxu0
        %v2835 = vpop.f32.mrf.mxu0
        %2836 = vmatprep.mubr.f32.mxu0 0.0
        %2837 = vmatmul.mubr.f32.gmra.mxu0 %v2591
        %v2838 = vpop.f32.mrf.mxu0
        %v2839 = vadd.f32 0.0, %v2838
        %v2840 = vpop.f32.mrf.mxu0
        %2841 = vmatprep.mubr.f32.mxu0 0.0
        %2842 = vmatmul.mubr.f32.gmra.mxu0 %v2594
        %v2843 = vpop.f32.mrf.mxu0
        %v2844 = vadd.f32 0.0, %v2843
        %v2845 = vpop.f32.mrf.mxu0
        %2846 = vmatprep.mubr.f32.mxu0 0.0
        %2847 = vmatmul.mubr.f32.gmra.mxu0 %v2597
        %v2848 = vpop.f32.mrf.mxu0
        %v2849 = vpop.f32.mrf.mxu0
        %2850 = vmatprep.mubr.f32.mxu0 0.0
        %2851 = vmatmul.mubr.f32.gmra.mxu0 %v2600
        %v2852 = vpop.f32.mrf.mxu0
        %v2853 = vadd.f32 0.0, %v2852
        %v2854 = vpop.f32.mrf.mxu0
        %2855 = vmatprep.mubr.f32.mxu0 0.0
        %2856 = vmatmul.mubr.f32.gmra.mxu0 %v2603
        %v2857 = vpop.f32.mrf.mxu0
        %v2858 = vadd.f32 0.0, %v2857
        %v2859 = vpop.f32.mrf.mxu0
        %2860 = vmatprep.mubr.f32.mxu0 0.0
        %2861 = vmatmul.mubr.f32.gmra.mxu0 %v2606
        %v2862 = vpop.f32.mrf.mxu0
        %v2863 = vpop.f32.mrf.mxu0
        %2864 = vmatprep.mubr.f32.mxu0 0.0
        %2865 = vmatmul.mubr.f32.gmra.mxu0 %v2609
        %v2866 = vpop.f32.mrf.mxu0
        %v2867 = vadd.f32 0.0, %v2866
        %v2868 = vpop.f32.mrf.mxu0
        %2869 = vmatprep.mubr.f32.mxu0 0.0
        %2870 = vmatmul.mubr.f32.gmra.mxu0 %v2612
        %v2871 = vpop.f32.mrf.mxu0
        %v2872 = vadd.f32 0.0, %v2871
        %v2873 = vpop.f32.mrf.mxu0
        %2874 = vmatprep.mubr.f32.mxu0 0.0
        %2875 = vmatmul.mubr.f32.gmra.mxu0 %v2615
        %v2876 = vpop.f32.mrf.mxu0
        %v2877 = vpop.f32.mrf.mxu0
        %2878 = vmatprep.mubr.f32.mxu0 0.0
        %2879 = vmatmul.mubr.f32.gmra.mxu0 %v2618
        %v2880 = vpop.f32.mrf.mxu0
        %v2881 = vadd.f32 0.0, %v2880
        %v2882 = vpop.f32.mrf.mxu0
        %2883 = vmatprep.mubr.f32.mxu0 0.0
        %2884 = vmatmul.mubr.f32.gmra.mxu0 %v2621
        %v2885 = vpop.f32.mrf.mxu0
        %v2886 = vadd.f32 0.0, %v2885
        %v2887 = vpop.f32.mrf.mxu0
        %2888 = vmatprep.mubr.f32.mxu0 0.0
        %2889 = vmatmul.mubr.f32.gmra.mxu0 %v2624
        %v2890 = vpop.f32.mrf.mxu0
        %v2891 = vpop.f32.mrf.mxu0
        %2892 = vmatprep.mubr.f32.mxu0 0.0
        %2893 = vmatmul.mubr.f32.gmra.mxu0 %v2627
        %v2894 = vpop.f32.mrf.mxu0
        %v2895 = vadd.f32 0.0, %v2894
        %v2896 = vpop.f32.mrf.mxu0
        %2897 = vmatprep.mubr.f32.mxu0 0.0
        %2898 = vmatmul.mubr.f32.gmra.mxu0 %v2630
        %v2899 = vpop.f32.mrf.mxu0
        %v2900 = vadd.f32 0.0, %v2899
        %v2901 = vpop.f32.mrf.mxu0
        %2902 = vmatprep.mubr.f32.mxu0 0.0
        %2903 = vmatmul.mubr.f32.gmra.mxu0 %v2633
        %v2904 = vpop.f32.mrf.mxu0
        %v2905 = vpop.f32.mrf.mxu0
        %2906 = vmatprep.mubr.f32.mxu0 0.0
        %2907 = vmatmul.mubr.f32.gmra.mxu0 %v2636
        %v2908 = vpop.f32.mrf.mxu0
        %v2909 = vadd.f32 0.0, %v2908
        %v2910 = vpop.f32.mrf.mxu0
        %2911 = vmatprep.mubr.f32.mxu0 0.0
        %2912 = vmatmul.mubr.f32.gmra.mxu0 %v2639
        %v2913 = vpop.f32.mrf.mxu0
        %v2914 = vadd.f32 0.0, %v2913
        %v2915 = vpop.f32.mrf.mxu0
        %2916 = vmatprep.mubr.f32.mxu0 0.0
        %2917 = vmatmul.mubr.f32.gmra.mxu0 %v2642
        %v2918 = vpop.f32.mrf.mxu0
        %v2919 = vpop.f32.mrf.mxu0
        %2920 = vmatprep.mubr.f32.mxu0 0.0
        %2921 = vmatmul.mubr.f32.gmra.mxu0 %v2645
        %v2922 = vpop.f32.mrf.mxu0
        %v2923 = vadd.f32 0.0, %v2922
        %v2924 = vpop.f32.mrf.mxu0
        %2925 = vmatprep.mubr.f32.mxu0 0.0
        %2926 = vmatmul.mubr.f32.gmra.mxu0 %v2648
        %v2927 = vpop.f32.mrf.mxu0
        %v2928 = vadd.f32 0.0, %v2927
        %v2929 = vpop.f32.mrf.mxu0
        %2930 = vmatprep.mubr.f32.mxu0 0.0
        %2931 = vmatmul.mubr.f32.gmra.mxu0 %v2651
        %v2932 = vpop.f32.mrf.mxu0
        %v2933 = vpop.f32.mrf.mxu0
        %2934 = vmatprep.mubr.f32.mxu0 0.0
        %2935 = vmatmul.mubr.f32.gmra.mxu0 %v2654
        %v2936 = vpop.f32.mrf.mxu0
        %v2937 = vadd.f32 0.0, %v2936
        %v2938 = vpop.f32.mrf.mxu0
        %2939 = vmatprep.mubr.f32.mxu0 0.0
        %2940 = vmatmul.mubr.f32.gmra.mxu0 %v2657
        %v2941 = vpop.f32.mrf.mxu0
        %v2942 = vadd.f32 0.0, %v2941
        %v2943 = vpop.f32.mrf.mxu0
        %2944 = vmatprep.mubr.f32.mxu0 0.0
        %2945 = vmatmul.mubr.f32.gmra.mxu0 %v2660
        %v2946 = vpop.f32.mrf.mxu0
        %v2947 = vpop.f32.mrf.mxu0
        %2948 = vmatprep.mubr.f32.mxu0 0.0
        %2949 = vmatmul.mubr.f32.gmra.mxu0 %v2663
        %v2950 = vpop.f32.mrf.mxu0
        %v2951 = vadd.f32 0.0, %v2950
        %v2952 = vpop.f32.mrf.mxu0
        %2953 = vmatprep.mubr.f32.mxu0 0.0
        %2954 = vmatmul.mubr.f32.gmra.mxu0 %v2666
        %v2955 = vpop.f32.mrf.mxu0
        %v2956 = vadd.f32 0.0, %v2955
        %v2957 = vpop.f32.mrf.mxu0
        %2958 = vmatprep.mubr.f32.mxu0 0.0
        %2959 = vmatmul.mubr.f32.gmra.mxu0 %v2669
        %v2960 = vpop.f32.mrf.mxu0
        %v2961 = vpop.f32.mrf.mxu0
        %2962 = vdwg.mxu0
        %v2963 = vadd.f32 %v2445, %v2741
        %v2964 = vadd.f32 %v2446, %v2746
        %v2965 = vadd.f32 %v2447, %v2755
        %v2966 = vadd.f32 %v2448, %v2760
        %v2967 = vadd.f32 %v2449, %v2769
        %v2968 = vadd.f32 %v2450, %v2774
        %v2969 = vadd.f32 %v2451, %v2783
        %v2970 = vadd.f32 %v2452, %v2788
        %v2971 = vadd.f32 %v2453, %v2797
        %v2972 = vadd.f32 %v2454, %v2802
        %v2973 = vadd.f32 %v2455, %v2811
        %v2974 = vadd.f32 %v2456, %v2816
        %v2975 = vadd.f32 %v2457, %v2825
        %v2976 = vadd.f32 %v2458, %v2830
        %v2977 = vadd.f32 %v2459, %v2839
        %v2978 = vadd.f32 %v2460, %v2844
        %v2979 = vadd.f32 %v2461, %v2853
        %v2980 = vadd.f32 %v2462, %v2858
        %v2981 = vadd.f32 %v2463, %v2867
        %v2982 = vadd.f32 %v2464, %v2872
        %v2983 = vadd.f32 %v2465, %v2881
        %v2984 = vadd.f32 %v2466, %v2886
        %v2985 = vadd.f32 %v2467, %v2895
        %v2986 = vadd.f32 %v2468, %v2900
        %v2987 = vadd.f32 %v2469, %v2909
        %v2988 = vadd.f32 %v2470, %v2914
        %v2989 = vadd.f32 %v2471, %v2923
        %v2990 = vadd.f32 %v2472, %v2928
        %v2991 = vadd.f32 %v2473, %v2937
        %v2992 = vadd.f32 %v2474, %v2942
        %v2993 = vadd.f32 %v2475, %v2951
        %v2994 = vadd.f32 %v2476, %v2956
        %v2995 = vld [vmem:[#allocation2 + $0x1a] sm:$0xff]
        %v2996 = vld [vmem:[#allocation2 + $0x22] sm:$0xff]
        %v2997 = vld [vmem:[#allocation2 + $0x2a] sm:$0xff]
        %v2998 = vld [vmem:[#allocation2 + $0x32] sm:$0xff]
        %v2999 = vld [vmem:[#allocation2 + $0x3a] sm:$0xff]
        %v3000 = vld [vmem:[#allocation2 + $0x42] sm:$0xff]
        %v3001 = vld [vmem:[#allocation2 + $0x4a] sm:$0xff]
        %v3002 = vld [vmem:[#allocation2 + $0x52] sm:$0xff]
        %v3003 = vld [vmem:[#allocation2 + $0x5a] sm:$0xff]
        %v3004 = vld [vmem:[#allocation2 + $0x62] sm:$0xff]
        %v3005 = vld [vmem:[#allocation2 + $0x6a] sm:$0xff]
        %v3006 = vld [vmem:[#allocation2 + $0x72] sm:$0xff]
        %v3007 = vld [vmem:[#allocation2 + $0x7a] sm:$0xff]
        %v3008 = vld [vmem:[#allocation2 + $0x82] sm:$0xff]
        %v3009 = vld [vmem:[#allocation2 + $0x8a] sm:$0xff]
        %v3010 = vld [vmem:[#allocation2 + $0x92] sm:$0xff]
        %v3011 = vld [vmem:[#allocation2 + $0x9a] sm:$0xff]
        %v3012 = vld [vmem:[#allocation2 + $0xa2] sm:$0xff]
        %v3013 = vld [vmem:[#allocation2 + $0xaa] sm:$0xff]
        %v3014 = vld [vmem:[#allocation2 + $0xb2] sm:$0xff]
        %v3015 = vld [vmem:[#allocation2 + $0xba] sm:$0xff]
        %v3016 = vld [vmem:[#allocation2 + $0xc2] sm:$0xff]
        %v3017 = vld [vmem:[#allocation2 + $0xca] sm:$0xff]
        %v3018 = vld [vmem:[#allocation2 + $0xd2] sm:$0xff]
        %v3019 = vld [vmem:[#allocation2 + $0xda] sm:$0xff]
        %v3020 = vld [vmem:[#allocation2 + $0xe2] sm:$0xff]
        %v3021 = vld [vmem:[#allocation2 + $0xea] sm:$0xff]
        %v3022 = vld [vmem:[#allocation2 + $0xf2] sm:$0xff]
        %v3023 = vld [vmem:[#allocation2 + $0xfa] sm:$0xff]
        %v3024 = vld [vmem:[#allocation2 + $0x102] sm:$0xff]
        %v3025 = vld [vmem:[#allocation2 + $0x10a] sm:$0xff]
        %v3026 = vld [vmem:[#allocation2 + $0x112] sm:$0xff]
        %v3027 = vld [vmem:[#allocation2 + $0x11a] sm:$0xff]
        %v3028 = vld [vmem:[#allocation2 + $0x122] sm:$0xff]
        %v3029 = vld [vmem:[#allocation2 + $0x12a] sm:$0xff]
        %v3030 = vld [vmem:[#allocation2 + $0x132] sm:$0xff]
        %v3031 = vld [vmem:[#allocation2 + $0x13a] sm:$0xff]
        %v3032 = vld [vmem:[#allocation2 + $0x142] sm:$0xff]
        %v3033 = vld [vmem:[#allocation2 + $0x14a] sm:$0xff]
        %v3034 = vld [vmem:[#allocation2 + $0x152] sm:$0xff]
        %v3035 = vld [vmem:[#allocation2 + $0x15a] sm:$0xff]
        %v3036 = vld [vmem:[#allocation2 + $0x162] sm:$0xff]
        %v3037 = vld [vmem:[#allocation2 + $0x16a] sm:$0xff]
        %v3038 = vld [vmem:[#allocation2 + $0x172] sm:$0xff]
        %v3039 = vld [vmem:[#allocation2 + $0x17a] sm:$0xff]
        %v3040 = vld [vmem:[#allocation2 + $0x182] sm:$0xff]
        %v3041 = vld [vmem:[#allocation2 + $0x18a] sm:$0xff]
        %v3042 = vld [vmem:[#allocation2 + $0x192] sm:$0xff]
        %s3043 = scalar_lea.vmem %s303, 20
        %v3044 = vld [vmem:[%s3043] sm:$0xf]
        %v3046 = vsel %vm567, %v2995, 0
        %v3049 = vsel %vm567, %v2996, 0
        %v3052 = vsel %vm567, %v2997, 0
        %v3055 = vsel %vm567, %v2998, 0
        %v3058 = vsel %vm567, %v2999, 0
        %v3061 = vsel %vm567, %v3000, 0
        %v3064 = vsel %vm567, %v3001, 0
        %v3067 = vsel %vm567, %v3002, 0
        %v3070 = vsel %vm567, %v3003, 0
        %v3073 = vsel %vm567, %v3004, 0
        %v3076 = vsel %vm567, %v3005, 0
        %v3079 = vsel %vm567, %v3006, 0
        %v3082 = vsel %vm567, %v3007, 0
        %v3085 = vsel %vm567, %v3008, 0
        %v3088 = vsel %vm567, %v3009, 0
        %v3091 = vsel %vm567, %v3010, 0
        %v3094 = vsel %vm567, %v3011, 0
        %v3097 = vsel %vm567, %v3012, 0
        %v3100 = vsel %vm567, %v3013, 0
        %v3103 = vsel %vm567, %v3014, 0
        %v3106 = vsel %vm567, %v3015, 0
        %v3109 = vsel %vm567, %v3016, 0
        %v3112 = vsel %vm567, %v3017, 0
        %v3115 = vsel %vm567, %v3018, 0
        %v3118 = vsel %vm567, %v3019, 0
        %v3121 = vsel %vm567, %v3020, 0
        %v3124 = vsel %vm567, %v3021, 0
        %v3127 = vsel %vm567, %v3022, 0
        %v3130 = vsel %vm567, %v3023, 0
        %v3133 = vsel %vm567, %v3024, 0
        %v3136 = vsel %vm567, %v3025, 0
        %v3139 = vsel %vm567, %v3026, 0
        %v3142 = vsel %vm567, %v3027, 0
        %v3145 = vsel %vm567, %v3028, 0
        %v3148 = vsel %vm567, %v3029, 0
        %v3151 = vsel %vm567, %v3030, 0
        %v3154 = vsel %vm567, %v3031, 0
        %v3157 = vsel %vm567, %v3032, 0
        %v3160 = vsel %vm567, %v3033, 0
        %v3163 = vsel %vm567, %v3034, 0
        %v3166 = vsel %vm567, %v3035, 0
        %v3169 = vsel %vm567, %v3036, 0
        %v3172 = vsel %vm567, %v3037, 0
        %v3175 = vsel %vm567, %v3038, 0
        %v3178 = vsel %vm567, %v3039, 0
        %v3181 = vsel %vm567, %v3040, 0
        %v3184 = vsel %vm567, %v3041, 0
        %v3187 = vsel %vm567, %v3042, 0
        %v3190 = vsel %vm712, %v3044, 0
        %3192 = vmatprep.subr.mxu0 0.0
        %3193 = vmatpush1.msra.mxu0 0.0
        %3194 = vmatprep.subr.mxu0 0.0
        %3195 = vmatpush1.msra.mxu0 0.0
        %3196 = vmatprep.subr.mxu0 0.0
        %3197 = vmatpush1.msra.mxu0 0.0
        %3198 = vmatprep.subr.mxu0 0.0
        %3199 = vmatpush1.msra.mxu0 0.0
        %3200 = vmatprep.subr.mxu0 0.0
        %3201 = vmatpush1.msra.mxu0 0.0
        %3202 = vmatprep.subr.mxu0 0.0
        %3203 = vmatpush1.msra.mxu0 0.0
        %3204 = vmatprep.subr.mxu0 0.0
        %3205 = vmatpush1.msra.mxu0 0.0
        %3206 = vmatprep.subr.mxu0 0.0
        %3207 = vmatpush1.msra.mxu0 0.0
        %3208 = vmatprep.subr.mxu0 0.0
        %3209 = vmatpush1.msra.mxu0 0.0
        %3210 = vmatprep.subr.mxu0 0.0
        %3211 = vmatpush1.msra.mxu0 0.0
        %3212 = vmatprep.subr.mxu0 0.0
        %3213 = vmatpush1.msra.mxu0 0.0
        %3214 = vmatprep.subr.mxu0 0.0
        %3215 = vmatpush1.msra.mxu0 0.0
        %3216 = vmatprep.subr.mxu0 0.0
        %3217 = vmatpush1.msra.mxu0 0.0
        %3218 = vmatprep.subr.mxu0 0.0
        %3219 = vmatpush1.msra.mxu0 0.0
        %3220 = vmatprep.subr.mxu0 0.0
        %3221 = vmatpush1.msra.mxu0 0.0
        %3222 = vmatprep.subr.mxu0 0.0
        %3223 = vmatpush1.msra.mxu0 %v3190
        %3224 = vmatprep.subr.mxu0 0.0
        %3225 = vmatpush2.msra.mxu0 0.0
        %3226 = vmatprep.subr.mxu0 0.0
        %3227 = vmatpush2.msra.mxu0 0.0
        %3228 = vmatprep.subr.mxu0 0.0
        %3229 = vmatpush2.msra.mxu0 0.0
        %3230 = vmatprep.subr.mxu0 0.0
        %3231 = vmatpush2.msra.mxu0 0.0
        %3232 = vmatprep.subr.mxu0 0.0
        %3233 = vmatpush2.msra.mxu0 0.0
        %3234 = vmatprep.subr.mxu0 0.0
        %3235 = vmatpush2.msra.mxu0 0.0
        %3236 = vmatprep.subr.mxu0 0.0
        %3237 = vmatpush2.msra.mxu0 0.0
        %3238 = vmatprep.subr.mxu0 0.0
        %3239 = vmatpush2.msra.mxu0 0.0
        %3240 = vmatprep.subr.mxu0 0.0
        %3241 = vmatpush2.msra.mxu0 0.0
        %3242 = vmatprep.subr.mxu0 0.0
        %3243 = vmatpush2.msra.mxu0 0.0
        %3244 = vmatprep.subr.mxu0 0.0
        %3245 = vmatpush2.msra.mxu0 0.0
        %3246 = vmatprep.subr.mxu0 0.0
        %3247 = vmatpush2.msra.mxu0 0.0
        %3248 = vmatprep.subr.mxu0 0.0
        %3249 = vmatpush2.msra.mxu0 0.0
        %3250 = vmatprep.subr.mxu0 0.0
        %3251 = vmatpush2.msra.mxu0 0.0
        %3252 = vmatprep.subr.mxu0 0.0
        %3253 = vmatpush2.msra.mxu0 0.0
        %3254 = vmatprep.subr.mxu0 0.0
        %3255 = vmatpush2.msra.mxu0 0.0
        %3256 = vmatprep.mubr.f32.mxu0 0.0
        %3257 = vmatmul.mubr.f32.gmra.mxu0 %v3046
        %v3258 = vpop.f32.mrf.mxu0
        %v3259 = vadd.f32 0.0, %v3258
        %v3260 = vpop.f32.mrf.mxu0
        %3261 = vmatprep.mubr.f32.mxu0 0.0
        %3262 = vmatmul.mubr.f32.gmra.mxu0 %v3049
        %v3263 = vpop.f32.mrf.mxu0
        %v3264 = vadd.f32 0.0, %v3263
        %v3265 = vpop.f32.mrf.mxu0
        %3266 = vmatprep.mubr.f32.mxu0 0.0
        %3267 = vmatmul.mubr.f32.gmra.mxu0 %v3052
        %v3268 = vpop.f32.mrf.mxu0
        %v3269 = vpop.f32.mrf.mxu0
        %3270 = vmatprep.mubr.f32.mxu0 0.0
        %3271 = vmatmul.mubr.f32.gmra.mxu0 %v3055
        %v3272 = vpop.f32.mrf.mxu0
        %v3273 = vadd.f32 0.0, %v3272
        %v3274 = vpop.f32.mrf.mxu0
        %3275 = vmatprep.mubr.f32.mxu0 0.0
        %3276 = vmatmul.mubr.f32.gmra.mxu0 %v3058
        %v3277 = vpop.f32.mrf.mxu0
        %v3278 = vadd.f32 0.0, %v3277
        %v3279 = vpop.f32.mrf.mxu0
        %3280 = vmatprep.mubr.f32.mxu0 0.0
        %3281 = vmatmul.mubr.f32.gmra.mxu0 %v3061
        %v3282 = vpop.f32.mrf.mxu0
        %v3283 = vpop.f32.mrf.mxu0
        %3284 = vmatprep.mubr.f32.mxu0 0.0
        %3285 = vmatmul.mubr.f32.gmra.mxu0 %v3064
        %v3286 = vpop.f32.mrf.mxu0
        %v3287 = vadd.f32 0.0, %v3286
        %v3288 = vpop.f32.mrf.mxu0
        %3289 = vmatprep.mubr.f32.mxu0 0.0
        %3290 = vmatmul.mubr.f32.gmra.mxu0 %v3067
        %v3291 = vpop.f32.mrf.mxu0
        %v3292 = vadd.f32 0.0, %v3291
        %v3293 = vpop.f32.mrf.mxu0
        %3294 = vmatprep.mubr.f32.mxu0 0.0
        %3295 = vmatmul.mubr.f32.gmra.mxu0 %v3070
        %v3296 = vpop.f32.mrf.mxu0
        %v3297 = vpop.f32.mrf.mxu0
        %3298 = vmatprep.mubr.f32.mxu0 0.0
        %3299 = vmatmul.mubr.f32.gmra.mxu0 %v3073
        %v3300 = vpop.f32.mrf.mxu0
        %v3301 = vadd.f32 0.0, %v3300
        %v3302 = vpop.f32.mrf.mxu0
        %3303 = vmatprep.mubr.f32.mxu0 0.0
        %3304 = vmatmul.mubr.f32.gmra.mxu0 %v3076
        %v3305 = vpop.f32.mrf.mxu0
        %v3306 = vadd.f32 0.0, %v3305
        %v3307 = vpop.f32.mrf.mxu0
        %3308 = vmatprep.mubr.f32.mxu0 0.0
        %3309 = vmatmul.mubr.f32.gmra.mxu0 %v3079
        %v3310 = vpop.f32.mrf.mxu0
        %v3311 = vpop.f32.mrf.mxu0
        %3312 = vmatprep.mubr.f32.mxu0 0.0
        %3313 = vmatmul.mubr.f32.gmra.mxu0 %v3082
        %v3314 = vpop.f32.mrf.mxu0
        %v3315 = vadd.f32 0.0, %v3314
        %v3316 = vpop.f32.mrf.mxu0
        %3317 = vmatprep.mubr.f32.mxu0 0.0
        %3318 = vmatmul.mubr.f32.gmra.mxu0 %v3085
        %v3319 = vpop.f32.mrf.mxu0
        %v3320 = vadd.f32 0.0, %v3319
        %v3321 = vpop.f32.mrf.mxu0
        %3322 = vmatprep.mubr.f32.mxu0 0.0
        %3323 = vmatmul.mubr.f32.gmra.mxu0 %v3088
        %v3324 = vpop.f32.mrf.mxu0
        %v3325 = vpop.f32.mrf.mxu0
        %3326 = vmatprep.mubr.f32.mxu0 0.0
        %3327 = vmatmul.mubr.f32.gmra.mxu0 %v3091
        %v3328 = vpop.f32.mrf.mxu0
        %v3329 = vadd.f32 0.0, %v3328
        %v3330 = vpop.f32.mrf.mxu0
        %3331 = vmatprep.mubr.f32.mxu0 0.0
        %3332 = vmatmul.mubr.f32.gmra.mxu0 %v3094
        %v3333 = vpop.f32.mrf.mxu0
        %v3334 = vadd.f32 0.0, %v3333
        %v3335 = vpop.f32.mrf.mxu0
        %3336 = vmatprep.mubr.f32.mxu0 0.0
        %3337 = vmatmul.mubr.f32.gmra.mxu0 %v3097
        %v3338 = vpop.f32.mrf.mxu0
        %v3339 = vpop.f32.mrf.mxu0
        %3340 = vmatprep.mubr.f32.mxu0 0.0
        %3341 = vmatmul.mubr.f32.gmra.mxu0 %v3100
        %v3342 = vpop.f32.mrf.mxu0
        %v3343 = vadd.f32 0.0, %v3342
        %v3344 = vpop.f32.mrf.mxu0
        %3345 = vmatprep.mubr.f32.mxu0 0.0
        %3346 = vmatmul.mubr.f32.gmra.mxu0 %v3103
        %v3347 = vpop.f32.mrf.mxu0
        %v3348 = vadd.f32 0.0, %v3347
        %v3349 = vpop.f32.mrf.mxu0
        %3350 = vmatprep.mubr.f32.mxu0 0.0
        %3351 = vmatmul.mubr.f32.gmra.mxu0 %v3106
        %v3352 = vpop.f32.mrf.mxu0
        %v3353 = vpop.f32.mrf.mxu0
        %3354 = vmatprep.mubr.f32.mxu0 0.0
        %3355 = vmatmul.mubr.f32.gmra.mxu0 %v3109
        %v3356 = vpop.f32.mrf.mxu0
        %v3357 = vadd.f32 0.0, %v3356
        %v3358 = vpop.f32.mrf.mxu0
        %3359 = vmatprep.mubr.f32.mxu0 0.0
        %3360 = vmatmul.mubr.f32.gmra.mxu0 %v3112
        %v3361 = vpop.f32.mrf.mxu0
        %v3362 = vadd.f32 0.0, %v3361
        %v3363 = vpop.f32.mrf.mxu0
        %3364 = vmatprep.mubr.f32.mxu0 0.0
        %3365 = vmatmul.mubr.f32.gmra.mxu0 %v3115
        %v3366 = vpop.f32.mrf.mxu0
        %v3367 = vpop.f32.mrf.mxu0
        %3368 = vmatprep.mubr.f32.mxu0 0.0
        %3369 = vmatmul.mubr.f32.gmra.mxu0 %v3118
        %v3370 = vpop.f32.mrf.mxu0
        %v3371 = vadd.f32 0.0, %v3370
        %v3372 = vpop.f32.mrf.mxu0
        %3373 = vmatprep.mubr.f32.mxu0 0.0
        %3374 = vmatmul.mubr.f32.gmra.mxu0 %v3121
        %v3375 = vpop.f32.mrf.mxu0
        %v3376 = vadd.f32 0.0, %v3375
        %v3377 = vpop.f32.mrf.mxu0
        %3378 = vmatprep.mubr.f32.mxu0 0.0
        %3379 = vmatmul.mubr.f32.gmra.mxu0 %v3124
        %v3380 = vpop.f32.mrf.mxu0
        %v3381 = vpop.f32.mrf.mxu0
        %3382 = vmatprep.mubr.f32.mxu0 0.0
        %3383 = vmatmul.mubr.f32.gmra.mxu0 %v3127
        %v3384 = vpop.f32.mrf.mxu0
        %v3385 = vadd.f32 0.0, %v3384
        %v3386 = vpop.f32.mrf.mxu0
        %3387 = vmatprep.mubr.f32.mxu0 0.0
        %3388 = vmatmul.mubr.f32.gmra.mxu0 %v3130
        %v3389 = vpop.f32.mrf.mxu0
        %v3390 = vadd.f32 0.0, %v3389
        %v3391 = vpop.f32.mrf.mxu0
        %3392 = vmatprep.mubr.f32.mxu0 0.0
        %3393 = vmatmul.mubr.f32.gmra.mxu0 %v3133
        %v3394 = vpop.f32.mrf.mxu0
        %v3395 = vpop.f32.mrf.mxu0
        %3396 = vmatprep.mubr.f32.mxu0 0.0
        %3397 = vmatmul.mubr.f32.gmra.mxu0 %v3136
        %v3398 = vpop.f32.mrf.mxu0
        %v3399 = vadd.f32 0.0, %v3398
        %v3400 = vpop.f32.mrf.mxu0
        %3401 = vmatprep.mubr.f32.mxu0 0.0
        %3402 = vmatmul.mubr.f32.gmra.mxu0 %v3139
        %v3403 = vpop.f32.mrf.mxu0
        %v3404 = vadd.f32 0.0, %v3403
        %v3405 = vpop.f32.mrf.mxu0
        %3406 = vmatprep.mubr.f32.mxu0 0.0
        %3407 = vmatmul.mubr.f32.gmra.mxu0 %v3142
        %v3408 = vpop.f32.mrf.mxu0
        %v3409 = vpop.f32.mrf.mxu0
        %3410 = vmatprep.mubr.f32.mxu0 0.0
        %3411 = vmatmul.mubr.f32.gmra.mxu0 %v3145
        %v3412 = vpop.f32.mrf.mxu0
        %v3413 = vadd.f32 0.0, %v3412
        %v3414 = vpop.f32.mrf.mxu0
        %3415 = vmatprep.mubr.f32.mxu0 0.0
        %3416 = vmatmul.mubr.f32.gmra.mxu0 %v3148
        %v3417 = vpop.f32.mrf.mxu0
        %v3418 = vadd.f32 0.0, %v3417
        %v3419 = vpop.f32.mrf.mxu0
        %3420 = vmatprep.mubr.f32.mxu0 0.0
        %3421 = vmatmul.mubr.f32.gmra.mxu0 %v3151
        %v3422 = vpop.f32.mrf.mxu0
        %v3423 = vpop.f32.mrf.mxu0
        %3424 = vmatprep.mubr.f32.mxu0 0.0
        %3425 = vmatmul.mubr.f32.gmra.mxu0 %v3154
        %v3426 = vpop.f32.mrf.mxu0
        %v3427 = vadd.f32 0.0, %v3426
        %v3428 = vpop.f32.mrf.mxu0
        %3429 = vmatprep.mubr.f32.mxu0 0.0
        %3430 = vmatmul.mubr.f32.gmra.mxu0 %v3157
        %v3431 = vpop.f32.mrf.mxu0
        %v3432 = vadd.f32 0.0, %v3431
        %v3433 = vpop.f32.mrf.mxu0
        %3434 = vmatprep.mubr.f32.mxu0 0.0
        %3435 = vmatmul.mubr.f32.gmra.mxu0 %v3160
        %v3436 = vpop.f32.mrf.mxu0
        %v3437 = vpop.f32.mrf.mxu0
        %3438 = vmatprep.mubr.f32.mxu0 0.0
        %3439 = vmatmul.mubr.f32.gmra.mxu0 %v3163
        %v3440 = vpop.f32.mrf.mxu0
        %v3441 = vadd.f32 0.0, %v3440
        %v3442 = vpop.f32.mrf.mxu0
        %3443 = vmatprep.mubr.f32.mxu0 0.0
        %3444 = vmatmul.mubr.f32.gmra.mxu0 %v3166
        %v3445 = vpop.f32.mrf.mxu0
        %v3446 = vadd.f32 0.0, %v3445
        %v3447 = vpop.f32.mrf.mxu0
        %3448 = vmatprep.mubr.f32.mxu0 0.0
        %3449 = vmatmul.mubr.f32.gmra.mxu0 %v3169
        %v3450 = vpop.f32.mrf.mxu0
        %v3451 = vpop.f32.mrf.mxu0
        %3452 = vmatprep.mubr.f32.mxu0 0.0
        %3453 = vmatmul.mubr.f32.gmra.mxu0 %v3172
        %v3454 = vpop.f32.mrf.mxu0
        %v3455 = vadd.f32 0.0, %v3454
        %v3456 = vpop.f32.mrf.mxu0
        %3457 = vmatprep.mubr.f32.mxu0 0.0
        %3458 = vmatmul.mubr.f32.gmra.mxu0 %v3175
        %v3459 = vpop.f32.mrf.mxu0
        %v3460 = vadd.f32 0.0, %v3459
        %v3461 = vpop.f32.mrf.mxu0
        %3462 = vmatprep.mubr.f32.mxu0 0.0
        %3463 = vmatmul.mubr.f32.gmra.mxu0 %v3178
        %v3464 = vpop.f32.mrf.mxu0
        %v3465 = vpop.f32.mrf.mxu0
        %3466 = vmatprep.mubr.f32.mxu0 0.0
        %3467 = vmatmul.mubr.f32.gmra.mxu0 %v3181
        %v3468 = vpop.f32.mrf.mxu0
        %v3469 = vadd.f32 0.0, %v3468
        %v3470 = vpop.f32.mrf.mxu0
        %3471 = vmatprep.mubr.f32.mxu0 0.0
        %3472 = vmatmul.mubr.f32.gmra.mxu0 %v3184
        %v3473 = vpop.f32.mrf.mxu0
        %v3474 = vadd.f32 0.0, %v3473
        %v3475 = vpop.f32.mrf.mxu0
        %3476 = vmatprep.mubr.f32.mxu0 0.0
        %3477 = vmatmul.mubr.f32.gmra.mxu0 %v3187
        %v3478 = vpop.f32.mrf.mxu0
        %v3479 = vpop.f32.mrf.mxu0
        %3480 = vdwg.mxu0
        %v3481 = vadd.f32 %v2963, %v3259
        %v3482 = vadd.f32 %v2964, %v3264
        %v3483 = vadd.f32 %v2965, %v3273
        %v3484 = vadd.f32 %v2966, %v3278
        %v3485 = vadd.f32 %v2967, %v3287
        %v3486 = vadd.f32 %v2968, %v3292
        %v3487 = vadd.f32 %v2969, %v3301
        %v3488 = vadd.f32 %v2970, %v3306
        %v3489 = vadd.f32 %v2971, %v3315
        %v3490 = vadd.f32 %v2972, %v3320
        %v3491 = vadd.f32 %v2973, %v3329
        %v3492 = vadd.f32 %v2974, %v3334
        %v3493 = vadd.f32 %v2975, %v3343
        %v3494 = vadd.f32 %v2976, %v3348
        %v3495 = vadd.f32 %v2977, %v3357
        %v3496 = vadd.f32 %v2978, %v3362
        %v3497 = vadd.f32 %v2979, %v3371
        %v3498 = vadd.f32 %v2980, %v3376
        %v3499 = vadd.f32 %v2981, %v3385
        %v3500 = vadd.f32 %v2982, %v3390
        %v3501 = vadd.f32 %v2983, %v3399
        %v3502 = vadd.f32 %v2984, %v3404
        %v3503 = vadd.f32 %v2985, %v3413
        %v3504 = vadd.f32 %v2986, %v3418
        %v3505 = vadd.f32 %v2987, %v3427
        %v3506 = vadd.f32 %v2988, %v3432
        %v3507 = vadd.f32 %v2989, %v3441
        %v3508 = vadd.f32 %v2990, %v3446
        %v3509 = vadd.f32 %v2991, %v3455
        %v3510 = vadd.f32 %v2992, %v3460
        %v3511 = vadd.f32 %v2993, %v3469
        %v3512 = vadd.f32 %v2994, %v3474
        %v3513 = vld [vmem:[#allocation2 + $0x30] sm:$0xff]
        %v3514 = vld [vmem:[#allocation2 + $0x38] sm:$0xff]
        %v3515 = vld [vmem:[#allocation2 + $0x40] sm:$0xff]
        %v3516 = vld [vmem:[#allocation2 + $0x48] sm:$0xff]
        %v3517 = vld [vmem:[#allocation2 + $0x50] sm:$0xff]
        %v3518 = vld [vmem:[#allocation2 + $0x58] sm:$0xff]
        %v3519 = vld [vmem:[#allocation2 + $0x60] sm:$0xff]
        %v3520 = vld [vmem:[#allocation2 + $0x68] sm:$0xff]
        %v3521 = vld [vmem:[#allocation2 + $0x70] sm:$0xff]
        %v3522 = vld [vmem:[#allocation2 + $0x78] sm:$0xff]
        %v3523 = vld [vmem:[#allocation2 + $0x80] sm:$0xff]
        %v3524 = vld [vmem:[#allocation2 + $0x88] sm:$0xff]
        %v3525 = vld [vmem:[#allocation2 + $0x90] sm:$0xff]
        %v3526 = vld [vmem:[#allocation2 + $0x98] sm:$0xff]
        %v3527 = vld [vmem:[#allocation2 + $0xa0] sm:$0xff]
        %v3528 = vld [vmem:[#allocation2 + $0xa8] sm:$0xff]
        %v3529 = vld [vmem:[#allocation2 + $0xb0] sm:$0xff]
        %v3530 = vld [vmem:[#allocation2 + $0xb8] sm:$0xff]
        %v3531 = vld [vmem:[#allocation2 + $0xc0] sm:$0xff]
        %v3532 = vld [vmem:[#allocation2 + $0xc8] sm:$0xff]
        %v3533 = vld [vmem:[#allocation2 + $0xd0] sm:$0xff]
        %v3534 = vld [vmem:[#allocation2 + $0xd8] sm:$0xff]
        %v3535 = vld [vmem:[#allocation2 + $0xe0] sm:$0xff]
        %v3536 = vld [vmem:[#allocation2 + $0xe8] sm:$0xff]
        %v3537 = vld [vmem:[#allocation2 + $0xf0] sm:$0xff]
        %v3538 = vld [vmem:[#allocation2 + $0xf8] sm:$0xff]
        %v3539 = vld [vmem:[#allocation2 + $0x100] sm:$0xff]
        %v3540 = vld [vmem:[#allocation2 + $0x108] sm:$0xff]
        %v3541 = vld [vmem:[#allocation2 + $0x110] sm:$0xff]
        %v3542 = vld [vmem:[#allocation2 + $0x118] sm:$0xff]
        %v3543 = vld [vmem:[#allocation2 + $0x120] sm:$0xff]
        %v3544 = vld [vmem:[#allocation2 + $0x128] sm:$0xff]
        %v3545 = vld [vmem:[#allocation2 + $0x130] sm:$0xff]
        %v3546 = vld [vmem:[#allocation2 + $0x138] sm:$0xff]
        %v3547 = vld [vmem:[#allocation2 + $0x140] sm:$0xff]
        %v3548 = vld [vmem:[#allocation2 + $0x148] sm:$0xff]
        %v3549 = vld [vmem:[#allocation2 + $0x150] sm:$0xff]
        %v3550 = vld [vmem:[#allocation2 + $0x158] sm:$0xff]
        %v3551 = vld [vmem:[#allocation2 + $0x160] sm:$0xff]
        %v3552 = vld [vmem:[#allocation2 + $0x168] sm:$0xff]
        %v3553 = vld [vmem:[#allocation2 + $0x170] sm:$0xff]
        %v3554 = vld [vmem:[#allocation2 + $0x178] sm:$0xff]
        %v3555 = vld [vmem:[#allocation2 + $0x180] sm:$0xff]
        %v3556 = vld [vmem:[#allocation2 + $0x188] sm:$0xff]
        %v3557 = vld [vmem:[#allocation2 + $0x190] sm:$0xff]
        %v3558 = vld [vmem:[#allocation2 + $0x198] sm:$0xff]
        %v3559 = vld [vmem:[#allocation2 + $0x1a0] sm:$0xff]
        %v3560 = vld [vmem:[#allocation2 + $0x1a8] sm:$0xff]
        %s3561 = scalar_lea.vmem %s303, 24
        %v3562 = vld [vmem:[%s3561] sm:$0xf]
        %v3564 = vsel %vm567, %v3513, 0
        %v3567 = vsel %vm567, %v3514, 0
        %v3570 = vsel %vm567, %v3515, 0
        %v3573 = vsel %vm567, %v3516, 0
        %v3576 = vsel %vm567, %v3517, 0
        %v3579 = vsel %vm567, %v3518, 0
        %v3582 = vsel %vm567, %v3519, 0
        %v3585 = vsel %vm567, %v3520, 0
        %v3588 = vsel %vm567, %v3521, 0
        %v3591 = vsel %vm567, %v3522, 0
        %v3594 = vsel %vm567, %v3523, 0
        %v3597 = vsel %vm567, %v3524, 0
        %v3600 = vsel %vm567, %v3525, 0
        %v3603 = vsel %vm567, %v3526, 0
        %v3606 = vsel %vm567, %v3527, 0
        %v3609 = vsel %vm567, %v3528, 0
        %v3612 = vsel %vm567, %v3529, 0
        %v3615 = vsel %vm567, %v3530, 0
        %v3618 = vsel %vm567, %v3531, 0
        %v3621 = vsel %vm567, %v3532, 0
        %v3624 = vsel %vm567, %v3533, 0
        %v3627 = vsel %vm567, %v3534, 0
        %v3630 = vsel %vm567, %v3535, 0
        %v3633 = vsel %vm567, %v3536, 0
        %v3636 = vsel %vm567, %v3537, 0
        %v3639 = vsel %vm567, %v3538, 0
        %v3642 = vsel %vm567, %v3539, 0
        %v3645 = vsel %vm567, %v3540, 0
        %v3648 = vsel %vm567, %v3541, 0
        %v3651 = vsel %vm567, %v3542, 0
        %v3654 = vsel %vm567, %v3543, 0
        %v3657 = vsel %vm567, %v3544, 0
        %v3660 = vsel %vm567, %v3545, 0
        %v3663 = vsel %vm567, %v3546, 0
        %v3666 = vsel %vm567, %v3547, 0
        %v3669 = vsel %vm567, %v3548, 0
        %v3672 = vsel %vm567, %v3549, 0
        %v3675 = vsel %vm567, %v3550, 0
        %v3678 = vsel %vm567, %v3551, 0
        %v3681 = vsel %vm567, %v3552, 0
        %v3684 = vsel %vm567, %v3553, 0
        %v3687 = vsel %vm567, %v3554, 0
        %v3690 = vsel %vm567, %v3555, 0
        %v3693 = vsel %vm567, %v3556, 0
        %v3696 = vsel %vm567, %v3557, 0
        %v3699 = vsel %vm567, %v3558, 0
        %v3702 = vsel %vm567, %v3559, 0
        %v3705 = vsel %vm567, %v3560, 0
        %v3708 = vsel %vm712, %v3562, 0
        %3710 = vmatprep.subr.mxu0 0.0
        %3711 = vmatpush1.msra.mxu0 0.0
        %3712 = vmatprep.subr.mxu0 0.0
        %3713 = vmatpush1.msra.mxu0 0.0
        %3714 = vmatprep.subr.mxu0 0.0
        %3715 = vmatpush1.msra.mxu0 0.0
        %3716 = vmatprep.subr.mxu0 0.0
        %3717 = vmatpush1.msra.mxu0 0.0
        %3718 = vmatprep.subr.mxu0 0.0
        %3719 = vmatpush1.msra.mxu0 0.0
        %3720 = vmatprep.subr.mxu0 0.0
        %3721 = vmatpush1.msra.mxu0 0.0
        %3722 = vmatprep.subr.mxu0 0.0
        %3723 = vmatpush1.msra.mxu0 0.0
        %3724 = vmatprep.subr.mxu0 0.0
        %3725 = vmatpush1.msra.mxu0 0.0
        %3726 = vmatprep.subr.mxu0 0.0
        %3727 = vmatpush1.msra.mxu0 0.0
        %3728 = vmatprep.subr.mxu0 0.0
        %3729 = vmatpush1.msra.mxu0 0.0
        %3730 = vmatprep.subr.mxu0 0.0
        %3731 = vmatpush1.msra.mxu0 0.0
        %3732 = vmatprep.subr.mxu0 0.0
        %3733 = vmatpush1.msra.mxu0 0.0
        %3734 = vmatprep.subr.mxu0 0.0
        %3735 = vmatpush1.msra.mxu0 0.0
        %3736 = vmatprep.subr.mxu0 0.0
        %3737 = vmatpush1.msra.mxu0 0.0
        %3738 = vmatprep.subr.mxu0 0.0
        %3739 = vmatpush1.msra.mxu0 0.0
        %3740 = vmatprep.subr.mxu0 0.0
        %3741 = vmatpush1.msra.mxu0 %v3708
        %3742 = vmatprep.subr.mxu0 0.0
        %3743 = vmatpush2.msra.mxu0 0.0
        %3744 = vmatprep.subr.mxu0 0.0
        %3745 = vmatpush2.msra.mxu0 0.0
        %3746 = vmatprep.subr.mxu0 0.0
        %3747 = vmatpush2.msra.mxu0 0.0
        %3748 = vmatprep.subr.mxu0 0.0
        %3749 = vmatpush2.msra.mxu0 0.0
        %3750 = vmatprep.subr.mxu0 0.0
        %3751 = vmatpush2.msra.mxu0 0.0
        %3752 = vmatprep.subr.mxu0 0.0
        %3753 = vmatpush2.msra.mxu0 0.0
        %3754 = vmatprep.subr.mxu0 0.0
        %3755 = vmatpush2.msra.mxu0 0.0
        %3756 = vmatprep.subr.mxu0 0.0
        %3757 = vmatpush2.msra.mxu0 0.0
        %3758 = vmatprep.subr.mxu0 0.0
        %3759 = vmatpush2.msra.mxu0 0.0
        %3760 = vmatprep.subr.mxu0 0.0
        %3761 = vmatpush2.msra.mxu0 0.0
        %3762 = vmatprep.subr.mxu0 0.0
        %3763 = vmatpush2.msra.mxu0 0.0
        %3764 = vmatprep.subr.mxu0 0.0
        %3765 = vmatpush2.msra.mxu0 0.0
        %3766 = vmatprep.subr.mxu0 0.0
        %3767 = vmatpush2.msra.mxu0 0.0
        %3768 = vmatprep.subr.mxu0 0.0
        %3769 = vmatpush2.msra.mxu0 0.0
        %3770 = vmatprep.subr.mxu0 0.0
        %3771 = vmatpush2.msra.mxu0 0.0
        %3772 = vmatprep.subr.mxu0 0.0
        %3773 = vmatpush2.msra.mxu0 0.0
        %3774 = vmatprep.mubr.f32.mxu0 0.0
        %3775 = vmatmul.mubr.f32.gmra.mxu0 %v3564
        %v3776 = vpop.f32.mrf.mxu0
        %v3777 = vadd.f32 0.0, %v3776
        %v3778 = vpop.f32.mrf.mxu0
        %3779 = vmatprep.mubr.f32.mxu0 0.0
        %3780 = vmatmul.mubr.f32.gmra.mxu0 %v3567
        %v3781 = vpop.f32.mrf.mxu0
        %v3782 = vadd.f32 0.0, %v3781
        %v3783 = vpop.f32.mrf.mxu0
        %3784 = vmatprep.mubr.f32.mxu0 0.0
        %3785 = vmatmul.mubr.f32.gmra.mxu0 %v3570
        %v3786 = vpop.f32.mrf.mxu0
        %v3787 = vpop.f32.mrf.mxu0
        %3788 = vmatprep.mubr.f32.mxu0 0.0
        %3789 = vmatmul.mubr.f32.gmra.mxu0 %v3573
        %v3790 = vpop.f32.mrf.mxu0
        %v3791 = vadd.f32 0.0, %v3790
        %v3792 = vpop.f32.mrf.mxu0
        %3793 = vmatprep.mubr.f32.mxu0 0.0
        %3794 = vmatmul.mubr.f32.gmra.mxu0 %v3576
        %v3795 = vpop.f32.mrf.mxu0
        %v3796 = vadd.f32 0.0, %v3795
        %v3797 = vpop.f32.mrf.mxu0
        %3798 = vmatprep.mubr.f32.mxu0 0.0
        %3799 = vmatmul.mubr.f32.gmra.mxu0 %v3579
        %v3800 = vpop.f32.mrf.mxu0
        %v3801 = vpop.f32.mrf.mxu0
        %3802 = vmatprep.mubr.f32.mxu0 0.0
        %3803 = vmatmul.mubr.f32.gmra.mxu0 %v3582
        %v3804 = vpop.f32.mrf.mxu0
        %v3805 = vadd.f32 0.0, %v3804
        %v3806 = vpop.f32.mrf.mxu0
        %3807 = vmatprep.mubr.f32.mxu0 0.0
        %3808 = vmatmul.mubr.f32.gmra.mxu0 %v3585
        %v3809 = vpop.f32.mrf.mxu0
        %v3810 = vadd.f32 0.0, %v3809
        %v3811 = vpop.f32.mrf.mxu0
        %3812 = vmatprep.mubr.f32.mxu0 0.0
        %3813 = vmatmul.mubr.f32.gmra.mxu0 %v3588
        %v3814 = vpop.f32.mrf.mxu0
        %v3815 = vpop.f32.mrf.mxu0
        %3816 = vmatprep.mubr.f32.mxu0 0.0
        %3817 = vmatmul.mubr.f32.gmra.mxu0 %v3591
        %v3818 = vpop.f32.mrf.mxu0
        %v3819 = vadd.f32 0.0, %v3818
        %v3820 = vpop.f32.mrf.mxu0
        %3821 = vmatprep.mubr.f32.mxu0 0.0
        %3822 = vmatmul.mubr.f32.gmra.mxu0 %v3594
        %v3823 = vpop.f32.mrf.mxu0
        %v3824 = vadd.f32 0.0, %v3823
        %v3825 = vpop.f32.mrf.mxu0
        %3826 = vmatprep.mubr.f32.mxu0 0.0
        %3827 = vmatmul.mubr.f32.gmra.mxu0 %v3597
        %v3828 = vpop.f32.mrf.mxu0
        %v3829 = vpop.f32.mrf.mxu0
        %3830 = vmatprep.mubr.f32.mxu0 0.0
        %3831 = vmatmul.mubr.f32.gmra.mxu0 %v3600
        %v3832 = vpop.f32.mrf.mxu0
        %v3833 = vadd.f32 0.0, %v3832
        %v3834 = vpop.f32.mrf.mxu0
        %3835 = vmatprep.mubr.f32.mxu0 0.0
        %3836 = vmatmul.mubr.f32.gmra.mxu0 %v3603
        %v3837 = vpop.f32.mrf.mxu0
        %v3838 = vadd.f32 0.0, %v3837
        %v3839 = vpop.f32.mrf.mxu0
        %3840 = vmatprep.mubr.f32.mxu0 0.0
        %3841 = vmatmul.mubr.f32.gmra.mxu0 %v3606
        %v3842 = vpop.f32.mrf.mxu0
        %v3843 = vpop.f32.mrf.mxu0
        %3844 = vmatprep.mubr.f32.mxu0 0.0
        %3845 = vmatmul.mubr.f32.gmra.mxu0 %v3609
        %v3846 = vpop.f32.mrf.mxu0
        %v3847 = vadd.f32 0.0, %v3846
        %v3848 = vpop.f32.mrf.mxu0
        %3849 = vmatprep.mubr.f32.mxu0 0.0
        %3850 = vmatmul.mubr.f32.gmra.mxu0 %v3612
        %v3851 = vpop.f32.mrf.mxu0
        %v3852 = vadd.f32 0.0, %v3851
        %v3853 = vpop.f32.mrf.mxu0
        %3854 = vmatprep.mubr.f32.mxu0 0.0
        %3855 = vmatmul.mubr.f32.gmra.mxu0 %v3615
        %v3856 = vpop.f32.mrf.mxu0
        %v3857 = vpop.f32.mrf.mxu0
        %3858 = vmatprep.mubr.f32.mxu0 0.0
        %3859 = vmatmul.mubr.f32.gmra.mxu0 %v3618
        %v3860 = vpop.f32.mrf.mxu0
        %v3861 = vadd.f32 0.0, %v3860
        %v3862 = vpop.f32.mrf.mxu0
        %3863 = vmatprep.mubr.f32.mxu0 0.0
        %3864 = vmatmul.mubr.f32.gmra.mxu0 %v3621
        %v3865 = vpop.f32.mrf.mxu0
        %v3866 = vadd.f32 0.0, %v3865
        %v3867 = vpop.f32.mrf.mxu0
        %3868 = vmatprep.mubr.f32.mxu0 0.0
        %3869 = vmatmul.mubr.f32.gmra.mxu0 %v3624
        %v3870 = vpop.f32.mrf.mxu0
        %v3871 = vpop.f32.mrf.mxu0
        %3872 = vmatprep.mubr.f32.mxu0 0.0
        %3873 = vmatmul.mubr.f32.gmra.mxu0 %v3627
        %v3874 = vpop.f32.mrf.mxu0
        %v3875 = vadd.f32 0.0, %v3874
        %v3876 = vpop.f32.mrf.mxu0
        %3877 = vmatprep.mubr.f32.mxu0 0.0
        %3878 = vmatmul.mubr.f32.gmra.mxu0 %v3630
        %v3879 = vpop.f32.mrf.mxu0
        %v3880 = vadd.f32 0.0, %v3879
        %v3881 = vpop.f32.mrf.mxu0
        %3882 = vmatprep.mubr.f32.mxu0 0.0
        %3883 = vmatmul.mubr.f32.gmra.mxu0 %v3633
        %v3884 = vpop.f32.mrf.mxu0
        %v3885 = vpop.f32.mrf.mxu0
        %3886 = vmatprep.mubr.f32.mxu0 0.0
        %3887 = vmatmul.mubr.f32.gmra.mxu0 %v3636
        %v3888 = vpop.f32.mrf.mxu0
        %v3889 = vadd.f32 0.0, %v3888
        %v3890 = vpop.f32.mrf.mxu0
        %3891 = vmatprep.mubr.f32.mxu0 0.0
        %3892 = vmatmul.mubr.f32.gmra.mxu0 %v3639
        %v3893 = vpop.f32.mrf.mxu0
        %v3894 = vadd.f32 0.0, %v3893
        %v3895 = vpop.f32.mrf.mxu0
        %3896 = vmatprep.mubr.f32.mxu0 0.0
        %3897 = vmatmul.mubr.f32.gmra.mxu0 %v3642
        %v3898 = vpop.f32.mrf.mxu0
        %v3899 = vpop.f32.mrf.mxu0
        %3900 = vmatprep.mubr.f32.mxu0 0.0
        %3901 = vmatmul.mubr.f32.gmra.mxu0 %v3645
        %v3902 = vpop.f32.mrf.mxu0
        %v3903 = vadd.f32 0.0, %v3902
        %v3904 = vpop.f32.mrf.mxu0
        %3905 = vmatprep.mubr.f32.mxu0 0.0
        %3906 = vmatmul.mubr.f32.gmra.mxu0 %v3648
        %v3907 = vpop.f32.mrf.mxu0
        %v3908 = vadd.f32 0.0, %v3907
        %v3909 = vpop.f32.mrf.mxu0
        %3910 = vmatprep.mubr.f32.mxu0 0.0
        %3911 = vmatmul.mubr.f32.gmra.mxu0 %v3651
        %v3912 = vpop.f32.mrf.mxu0
        %v3913 = vpop.f32.mrf.mxu0
        %3914 = vmatprep.mubr.f32.mxu0 0.0
        %3915 = vmatmul.mubr.f32.gmra.mxu0 %v3654
        %v3916 = vpop.f32.mrf.mxu0
        %v3917 = vadd.f32 0.0, %v3916
        %v3918 = vpop.f32.mrf.mxu0
        %3919 = vmatprep.mubr.f32.mxu0 0.0
        %3920 = vmatmul.mubr.f32.gmra.mxu0 %v3657
        %v3921 = vpop.f32.mrf.mxu0
        %v3922 = vadd.f32 0.0, %v3921
        %v3923 = vpop.f32.mrf.mxu0
        %3924 = vmatprep.mubr.f32.mxu0 0.0
        %3925 = vmatmul.mubr.f32.gmra.mxu0 %v3660
        %v3926 = vpop.f32.mrf.mxu0
        %v3927 = vpop.f32.mrf.mxu0
        %3928 = vmatprep.mubr.f32.mxu0 0.0
        %3929 = vmatmul.mubr.f32.gmra.mxu0 %v3663
        %v3930 = vpop.f32.mrf.mxu0
        %v3931 = vadd.f32 0.0, %v3930
        %v3932 = vpop.f32.mrf.mxu0
        %3933 = vmatprep.mubr.f32.mxu0 0.0
        %3934 = vmatmul.mubr.f32.gmra.mxu0 %v3666
        %v3935 = vpop.f32.mrf.mxu0
        %v3936 = vadd.f32 0.0, %v3935
        %v3937 = vpop.f32.mrf.mxu0
        %3938 = vmatprep.mubr.f32.mxu0 0.0
        %3939 = vmatmul.mubr.f32.gmra.mxu0 %v3669
        %v3940 = vpop.f32.mrf.mxu0
        %v3941 = vpop.f32.mrf.mxu0
        %3942 = vmatprep.mubr.f32.mxu0 0.0
        %3943 = vmatmul.mubr.f32.gmra.mxu0 %v3672
        %v3944 = vpop.f32.mrf.mxu0
        %v3945 = vadd.f32 0.0, %v3944
        %v3946 = vpop.f32.mrf.mxu0
        %3947 = vmatprep.mubr.f32.mxu0 0.0
        %3948 = vmatmul.mubr.f32.gmra.mxu0 %v3675
        %v3949 = vpop.f32.mrf.mxu0
        %v3950 = vadd.f32 0.0, %v3949
        %v3951 = vpop.f32.mrf.mxu0
        %3952 = vmatprep.mubr.f32.mxu0 0.0
        %3953 = vmatmul.mubr.f32.gmra.mxu0 %v3678
        %v3954 = vpop.f32.mrf.mxu0
        %v3955 = vpop.f32.mrf.mxu0
        %3956 = vmatprep.mubr.f32.mxu0 0.0
        %3957 = vmatmul.mubr.f32.gmra.mxu0 %v3681
        %v3958 = vpop.f32.mrf.mxu0
        %v3959 = vadd.f32 0.0, %v3958
        %v3960 = vpop.f32.mrf.mxu0
        %3961 = vmatprep.mubr.f32.mxu0 0.0
        %3962 = vmatmul.mubr.f32.gmra.mxu0 %v3684
        %v3963 = vpop.f32.mrf.mxu0
        %v3964 = vadd.f32 0.0, %v3963
        %v3965 = vpop.f32.mrf.mxu0
        %3966 = vmatprep.mubr.f32.mxu0 0.0
        %3967 = vmatmul.mubr.f32.gmra.mxu0 %v3687
        %v3968 = vpop.f32.mrf.mxu0
        %v3969 = vpop.f32.mrf.mxu0
        %3970 = vmatprep.mubr.f32.mxu0 0.0
        %3971 = vmatmul.mubr.f32.gmra.mxu0 %v3690
        %v3972 = vpop.f32.mrf.mxu0
        %v3973 = vadd.f32 0.0, %v3972
        %v3974 = vpop.f32.mrf.mxu0
        %3975 = vmatprep.mubr.f32.mxu0 0.0
        %3976 = vmatmul.mubr.f32.gmra.mxu0 %v3693
        %v3977 = vpop.f32.mrf.mxu0
        %v3978 = vadd.f32 0.0, %v3977
        %v3979 = vpop.f32.mrf.mxu0
        %3980 = vmatprep.mubr.f32.mxu0 0.0
        %3981 = vmatmul.mubr.f32.gmra.mxu0 %v3696
        %v3982 = vpop.f32.mrf.mxu0
        %v3983 = vpop.f32.mrf.mxu0
        %3984 = vmatprep.mubr.f32.mxu0 0.0
        %3985 = vmatmul.mubr.f32.gmra.mxu0 %v3699
        %v3986 = vpop.f32.mrf.mxu0
        %v3987 = vadd.f32 0.0, %v3986
        %v3988 = vpop.f32.mrf.mxu0
        %3989 = vmatprep.mubr.f32.mxu0 0.0
        %3990 = vmatmul.mubr.f32.gmra.mxu0 %v3702
        %v3991 = vpop.f32.mrf.mxu0
        %v3992 = vadd.f32 0.0, %v3991
        %v3993 = vpop.f32.mrf.mxu0
        %3994 = vmatprep.mubr.f32.mxu0 0.0
        %3995 = vmatmul.mubr.f32.gmra.mxu0 %v3705
        %v3996 = vpop.f32.mrf.mxu0
        %v3997 = vpop.f32.mrf.mxu0
        %3998 = vdwg.mxu0
        %v3999 = vadd.f32 %v3481, %v3777
        %v4000 = vadd.f32 %v3482, %v3782
        %v4001 = vadd.f32 %v3483, %v3791
        %v4002 = vadd.f32 %v3484, %v3796
        %v4003 = vadd.f32 %v3485, %v3805
        %v4004 = vadd.f32 %v3486, %v3810
        %v4005 = vadd.f32 %v3487, %v3819
        %v4006 = vadd.f32 %v3488, %v3824
        %v4007 = vadd.f32 %v3489, %v3833
        %v4008 = vadd.f32 %v3490, %v3838
        %v4009 = vadd.f32 %v3491, %v3847
        %v4010 = vadd.f32 %v3492, %v3852
        %v4011 = vadd.f32 %v3493, %v3861
        %v4012 = vadd.f32 %v3494, %v3866
        %v4013 = vadd.f32 %v3495, %v3875
        %v4014 = vadd.f32 %v3496, %v3880
        %v4015 = vadd.f32 %v3497, %v3889
        %v4016 = vadd.f32 %v3498, %v3894
        %v4017 = vadd.f32 %v3499, %v3903
        %v4018 = vadd.f32 %v3500, %v3908
        %v4019 = vadd.f32 %v3501, %v3917
        %v4020 = vadd.f32 %v3502, %v3922
        %v4021 = vadd.f32 %v3503, %v3931
        %v4022 = vadd.f32 %v3504, %v3936
        %v4023 = vadd.f32 %v3505, %v3945
        %v4024 = vadd.f32 %v3506, %v3950
        %v4025 = vadd.f32 %v3507, %v3959
        %v4026 = vadd.f32 %v3508, %v3964
        %v4027 = vadd.f32 %v3509, %v3973
        %v4028 = vadd.f32 %v3510, %v3978
        %v4029 = vadd.f32 %v3511, %v3987
        %v4030 = vadd.f32 %v3512, %v3992
        %v4031 = vld [vmem:[#allocation2 + $0x31] sm:$0xff]
        %v4032 = vld [vmem:[#allocation2 + $0x39] sm:$0xff]
        %v4033 = vld [vmem:[#allocation2 + $0x41] sm:$0xff]
        %v4034 = vld [vmem:[#allocation2 + $0x49] sm:$0xff]
        %v4035 = vld [vmem:[#allocation2 + $0x51] sm:$0xff]
        %v4036 = vld [vmem:[#allocation2 + $0x59] sm:$0xff]
        %v4037 = vld [vmem:[#allocation2 + $0x61] sm:$0xff]
        %v4038 = vld [vmem:[#allocation2 + $0x69] sm:$0xff]
        %v4039 = vld [vmem:[#allocation2 + $0x71] sm:$0xff]
        %v4040 = vld [vmem:[#allocation2 + $0x79] sm:$0xff]
        %v4041 = vld [vmem:[#allocation2 + $0x81] sm:$0xff]
        %v4042 = vld [vmem:[#allocation2 + $0x89] sm:$0xff]
        %v4043 = vld [vmem:[#allocation2 + $0x91] sm:$0xff]
        %v4044 = vld [vmem:[#allocation2 + $0x99] sm:$0xff]
        %v4045 = vld [vmem:[#allocation2 + $0xa1] sm:$0xff]
        %v4046 = vld [vmem:[#allocation2 + $0xa9] sm:$0xff]
        %v4047 = vld [vmem:[#allocation2 + $0xb1] sm:$0xff]
        %v4048 = vld [vmem:[#allocation2 + $0xb9] sm:$0xff]
        %v4049 = vld [vmem:[#allocation2 + $0xc1] sm:$0xff]
        %v4050 = vld [vmem:[#allocation2 + $0xc9] sm:$0xff]
        %v4051 = vld [vmem:[#allocation2 + $0xd1] sm:$0xff]
        %v4052 = vld [vmem:[#allocation2 + $0xd9] sm:$0xff]
        %v4053 = vld [vmem:[#allocation2 + $0xe1] sm:$0xff]
        %v4054 = vld [vmem:[#allocation2 + $0xe9] sm:$0xff]
        %v4055 = vld [vmem:[#allocation2 + $0xf1] sm:$0xff]
        %v4056 = vld [vmem:[#allocation2 + $0xf9] sm:$0xff]
        %v4057 = vld [vmem:[#allocation2 + $0x101] sm:$0xff]
        %v4058 = vld [vmem:[#allocation2 + $0x109] sm:$0xff]
        %v4059 = vld [vmem:[#allocation2 + $0x111] sm:$0xff]
        %v4060 = vld [vmem:[#allocation2 + $0x119] sm:$0xff]
        %v4061 = vld [vmem:[#allocation2 + $0x121] sm:$0xff]
        %v4062 = vld [vmem:[#allocation2 + $0x129] sm:$0xff]
        %v4063 = vld [vmem:[#allocation2 + $0x131] sm:$0xff]
        %v4064 = vld [vmem:[#allocation2 + $0x139] sm:$0xff]
        %v4065 = vld [vmem:[#allocation2 + $0x141] sm:$0xff]
        %v4066 = vld [vmem:[#allocation2 + $0x149] sm:$0xff]
        %v4067 = vld [vmem:[#allocation2 + $0x151] sm:$0xff]
        %v4068 = vld [vmem:[#allocation2 + $0x159] sm:$0xff]
        %v4069 = vld [vmem:[#allocation2 + $0x161] sm:$0xff]
        %v4070 = vld [vmem:[#allocation2 + $0x169] sm:$0xff]
        %v4071 = vld [vmem:[#allocation2 + $0x171] sm:$0xff]
        %v4072 = vld [vmem:[#allocation2 + $0x179] sm:$0xff]
        %v4073 = vld [vmem:[#allocation2 + $0x181] sm:$0xff]
        %v4074 = vld [vmem:[#allocation2 + $0x189] sm:$0xff]
        %v4075 = vld [vmem:[#allocation2 + $0x191] sm:$0xff]
        %v4076 = vld [vmem:[#allocation2 + $0x199] sm:$0xff]
        %v4077 = vld [vmem:[#allocation2 + $0x1a1] sm:$0xff]
        %v4078 = vld [vmem:[#allocation2 + $0x1a9] sm:$0xff]
        %s4079 = scalar_lea.vmem %s303, 28
        %v4080 = vld [vmem:[%s4079] sm:$0xf]
        %v4082 = vsel %vm567, %v4031, 0
        %v4085 = vsel %vm567, %v4032, 0
        %v4088 = vsel %vm567, %v4033, 0
        %v4091 = vsel %vm567, %v4034, 0
        %v4094 = vsel %vm567, %v4035, 0
        %v4097 = vsel %vm567, %v4036, 0
        %v4100 = vsel %vm567, %v4037, 0
        %v4103 = vsel %vm567, %v4038, 0
        %v4106 = vsel %vm567, %v4039, 0
        %v4109 = vsel %vm567, %v4040, 0
        %v4112 = vsel %vm567, %v4041, 0
        %v4115 = vsel %vm567, %v4042, 0
        %v4118 = vsel %vm567, %v4043, 0
        %v4121 = vsel %vm567, %v4044, 0
        %v4124 = vsel %vm567, %v4045, 0
        %v4127 = vsel %vm567, %v4046, 0
        %v4130 = vsel %vm567, %v4047, 0
        %v4133 = vsel %vm567, %v4048, 0
        %v4136 = vsel %vm567, %v4049, 0
        %v4139 = vsel %vm567, %v4050, 0
        %v4142 = vsel %vm567, %v4051, 0
        %v4145 = vsel %vm567, %v4052, 0
        %v4148 = vsel %vm567, %v4053, 0
        %v4151 = vsel %vm567, %v4054, 0
        %v4154 = vsel %vm567, %v4055, 0
        %v4157 = vsel %vm567, %v4056, 0
        %v4160 = vsel %vm567, %v4057, 0
        %v4163 = vsel %vm567, %v4058, 0
        %v4166 = vsel %vm567, %v4059, 0
        %v4169 = vsel %vm567, %v4060, 0
        %v4172 = vsel %vm567, %v4061, 0
        %v4175 = vsel %vm567, %v4062, 0
        %v4178 = vsel %vm567, %v4063, 0
        %v4181 = vsel %vm567, %v4064, 0
        %v4184 = vsel %vm567, %v4065, 0
        %v4187 = vsel %vm567, %v4066, 0
        %v4190 = vsel %vm567, %v4067, 0
        %v4193 = vsel %vm567, %v4068, 0
        %v4196 = vsel %vm567, %v4069, 0
        %v4199 = vsel %vm567, %v4070, 0
        %v4202 = vsel %vm567, %v4071, 0
        %v4205 = vsel %vm567, %v4072, 0
        %v4208 = vsel %vm567, %v4073, 0
        %v4211 = vsel %vm567, %v4074, 0
        %v4214 = vsel %vm567, %v4075, 0
        %v4217 = vsel %vm567, %v4076, 0
        %v4220 = vsel %vm567, %v4077, 0
        %v4223 = vsel %vm567, %v4078, 0
        %v4226 = vsel %vm712, %v4080, 0
        %4228 = vmatprep.subr.mxu0 0.0
        %4229 = vmatpush1.msra.mxu0 0.0
        %4230 = vmatprep.subr.mxu0 0.0
        %4231 = vmatpush1.msra.mxu0 0.0
        %4232 = vmatprep.subr.mxu0 0.0
        %4233 = vmatpush1.msra.mxu0 0.0
        %4234 = vmatprep.subr.mxu0 0.0
        %4235 = vmatpush1.msra.mxu0 0.0
        %4236 = vmatprep.subr.mxu0 0.0
        %4237 = vmatpush1.msra.mxu0 0.0
        %4238 = vmatprep.subr.mxu0 0.0
        %4239 = vmatpush1.msra.mxu0 0.0
        %4240 = vmatprep.subr.mxu0 0.0
        %4241 = vmatpush1.msra.mxu0 0.0
        %4242 = vmatprep.subr.mxu0 0.0
        %4243 = vmatpush1.msra.mxu0 0.0
        %4244 = vmatprep.subr.mxu0 0.0
        %4245 = vmatpush1.msra.mxu0 0.0
        %4246 = vmatprep.subr.mxu0 0.0
        %4247 = vmatpush1.msra.mxu0 0.0
        %4248 = vmatprep.subr.mxu0 0.0
        %4249 = vmatpush1.msra.mxu0 0.0
        %4250 = vmatprep.subr.mxu0 0.0
        %4251 = vmatpush1.msra.mxu0 0.0
        %4252 = vmatprep.subr.mxu0 0.0
        %4253 = vmatpush1.msra.mxu0 0.0
        %4254 = vmatprep.subr.mxu0 0.0
        %4255 = vmatpush1.msra.mxu0 0.0
        %4256 = vmatprep.subr.mxu0 0.0
        %4257 = vmatpush1.msra.mxu0 0.0
        %4258 = vmatprep.subr.mxu0 0.0
        %4259 = vmatpush1.msra.mxu0 %v4226
        %4260 = vmatprep.subr.mxu0 0.0
        %4261 = vmatpush2.msra.mxu0 0.0
        %4262 = vmatprep.subr.mxu0 0.0
        %4263 = vmatpush2.msra.mxu0 0.0
        %4264 = vmatprep.subr.mxu0 0.0
        %4265 = vmatpush2.msra.mxu0 0.0
        %4266 = vmatprep.subr.mxu0 0.0
        %4267 = vmatpush2.msra.mxu0 0.0
        %4268 = vmatprep.subr.mxu0 0.0
        %4269 = vmatpush2.msra.mxu0 0.0
        %4270 = vmatprep.subr.mxu0 0.0
        %4271 = vmatpush2.msra.mxu0 0.0
        %4272 = vmatprep.subr.mxu0 0.0
        %4273 = vmatpush2.msra.mxu0 0.0
        %4274 = vmatprep.subr.mxu0 0.0
        %4275 = vmatpush2.msra.mxu0 0.0
        %4276 = vmatprep.subr.mxu0 0.0
        %4277 = vmatpush2.msra.mxu0 0.0
        %4278 = vmatprep.subr.mxu0 0.0
        %4279 = vmatpush2.msra.mxu0 0.0
        %4280 = vmatprep.subr.mxu0 0.0
        %4281 = vmatpush2.msra.mxu0 0.0
        %4282 = vmatprep.subr.mxu0 0.0
        %4283 = vmatpush2.msra.mxu0 0.0
        %4284 = vmatprep.subr.mxu0 0.0
        %4285 = vmatpush2.msra.mxu0 0.0
        %4286 = vmatprep.subr.mxu0 0.0
        %4287 = vmatpush2.msra.mxu0 0.0
        %4288 = vmatprep.subr.mxu0 0.0
        %4289 = vmatpush2.msra.mxu0 0.0
        %4290 = vmatprep.subr.mxu0 0.0
        %4291 = vmatpush2.msra.mxu0 0.0
        %4292 = vmatprep.mubr.f32.mxu0 0.0
        %4293 = vmatmul.mubr.f32.gmra.mxu0 %v4082
        %v4294 = vpop.f32.mrf.mxu0
        %v4295 = vadd.f32 0.0, %v4294
        %v4296 = vpop.f32.mrf.mxu0
        %4297 = vmatprep.mubr.f32.mxu0 0.0
        %4298 = vmatmul.mubr.f32.gmra.mxu0 %v4085
        %v4299 = vpop.f32.mrf.mxu0
        %v4300 = vadd.f32 0.0, %v4299
        %v4301 = vpop.f32.mrf.mxu0
        %4302 = vmatprep.mubr.f32.mxu0 0.0
        %4303 = vmatmul.mubr.f32.gmra.mxu0 %v4088
        %v4304 = vpop.f32.mrf.mxu0
        %v4305 = vpop.f32.mrf.mxu0
        %4306 = vmatprep.mubr.f32.mxu0 0.0
        %4307 = vmatmul.mubr.f32.gmra.mxu0 %v4091
        %v4308 = vpop.f32.mrf.mxu0
        %v4309 = vadd.f32 0.0, %v4308
        %v4310 = vpop.f32.mrf.mxu0
        %4311 = vmatprep.mubr.f32.mxu0 0.0
        %4312 = vmatmul.mubr.f32.gmra.mxu0 %v4094
        %v4313 = vpop.f32.mrf.mxu0
        %v4314 = vadd.f32 0.0, %v4313
        %v4315 = vpop.f32.mrf.mxu0
        %4316 = vmatprep.mubr.f32.mxu0 0.0
        %4317 = vmatmul.mubr.f32.gmra.mxu0 %v4097
        %v4318 = vpop.f32.mrf.mxu0
        %v4319 = vpop.f32.mrf.mxu0
        %4320 = vmatprep.mubr.f32.mxu0 0.0
        %4321 = vmatmul.mubr.f32.gmra.mxu0 %v4100
        %v4322 = vpop.f32.mrf.mxu0
        %v4323 = vadd.f32 0.0, %v4322
        %v4324 = vpop.f32.mrf.mxu0
        %4325 = vmatprep.mubr.f32.mxu0 0.0
        %4326 = vmatmul.mubr.f32.gmra.mxu0 %v4103
        %v4327 = vpop.f32.mrf.mxu0
        %v4328 = vadd.f32 0.0, %v4327
        %v4329 = vpop.f32.mrf.mxu0
        %4330 = vmatprep.mubr.f32.mxu0 0.0
        %4331 = vmatmul.mubr.f32.gmra.mxu0 %v4106
        %v4332 = vpop.f32.mrf.mxu0
        %v4333 = vpop.f32.mrf.mxu0
        %4334 = vmatprep.mubr.f32.mxu0 0.0
        %4335 = vmatmul.mubr.f32.gmra.mxu0 %v4109
        %v4336 = vpop.f32.mrf.mxu0
        %v4337 = vadd.f32 0.0, %v4336
        %v4338 = vpop.f32.mrf.mxu0
        %4339 = vmatprep.mubr.f32.mxu0 0.0
        %4340 = vmatmul.mubr.f32.gmra.mxu0 %v4112
        %v4341 = vpop.f32.mrf.mxu0
        %v4342 = vadd.f32 0.0, %v4341
        %v4343 = vpop.f32.mrf.mxu0
        %4344 = vmatprep.mubr.f32.mxu0 0.0
        %4345 = vmatmul.mubr.f32.gmra.mxu0 %v4115
        %v4346 = vpop.f32.mrf.mxu0
        %v4347 = vpop.f32.mrf.mxu0
        %4348 = vmatprep.mubr.f32.mxu0 0.0
        %4349 = vmatmul.mubr.f32.gmra.mxu0 %v4118
        %v4350 = vpop.f32.mrf.mxu0
        %v4351 = vadd.f32 0.0, %v4350
        %v4352 = vpop.f32.mrf.mxu0
        %4353 = vmatprep.mubr.f32.mxu0 0.0
        %4354 = vmatmul.mubr.f32.gmra.mxu0 %v4121
        %v4355 = vpop.f32.mrf.mxu0
        %v4356 = vadd.f32 0.0, %v4355
        %v4357 = vpop.f32.mrf.mxu0
        %4358 = vmatprep.mubr.f32.mxu0 0.0
        %4359 = vmatmul.mubr.f32.gmra.mxu0 %v4124
        %v4360 = vpop.f32.mrf.mxu0
        %v4361 = vpop.f32.mrf.mxu0
        %4362 = vmatprep.mubr.f32.mxu0 0.0
        %4363 = vmatmul.mubr.f32.gmra.mxu0 %v4127
        %v4364 = vpop.f32.mrf.mxu0
        %v4365 = vadd.f32 0.0, %v4364
        %v4366 = vpop.f32.mrf.mxu0
        %4367 = vmatprep.mubr.f32.mxu0 0.0
        %4368 = vmatmul.mubr.f32.gmra.mxu0 %v4130
        %v4369 = vpop.f32.mrf.mxu0
        %v4370 = vadd.f32 0.0, %v4369
        %v4371 = vpop.f32.mrf.mxu0
        %4372 = vmatprep.mubr.f32.mxu0 0.0
        %4373 = vmatmul.mubr.f32.gmra.mxu0 %v4133
        %v4374 = vpop.f32.mrf.mxu0
        %v4375 = vpop.f32.mrf.mxu0
        %4376 = vmatprep.mubr.f32.mxu0 0.0
        %4377 = vmatmul.mubr.f32.gmra.mxu0 %v4136
        %v4378 = vpop.f32.mrf.mxu0
        %v4379 = vadd.f32 0.0, %v4378
        %v4380 = vpop.f32.mrf.mxu0
        %4381 = vmatprep.mubr.f32.mxu0 0.0
        %4382 = vmatmul.mubr.f32.gmra.mxu0 %v4139
        %v4383 = vpop.f32.mrf.mxu0
        %v4384 = vadd.f32 0.0, %v4383
        %v4385 = vpop.f32.mrf.mxu0
        %4386 = vmatprep.mubr.f32.mxu0 0.0
        %4387 = vmatmul.mubr.f32.gmra.mxu0 %v4142
        %v4388 = vpop.f32.mrf.mxu0
        %v4389 = vpop.f32.mrf.mxu0
        %4390 = vmatprep.mubr.f32.mxu0 0.0
        %4391 = vmatmul.mubr.f32.gmra.mxu0 %v4145
        %v4392 = vpop.f32.mrf.mxu0
        %v4393 = vadd.f32 0.0, %v4392
        %v4394 = vpop.f32.mrf.mxu0
        %4395 = vmatprep.mubr.f32.mxu0 0.0
        %4396 = vmatmul.mubr.f32.gmra.mxu0 %v4148
        %v4397 = vpop.f32.mrf.mxu0
        %v4398 = vadd.f32 0.0, %v4397
        %v4399 = vpop.f32.mrf.mxu0
        %4400 = vmatprep.mubr.f32.mxu0 0.0
        %4401 = vmatmul.mubr.f32.gmra.mxu0 %v4151
        %v4402 = vpop.f32.mrf.mxu0
        %v4403 = vpop.f32.mrf.mxu0
        %4404 = vmatprep.mubr.f32.mxu0 0.0
        %4405 = vmatmul.mubr.f32.gmra.mxu0 %v4154
        %v4406 = vpop.f32.mrf.mxu0
        %v4407 = vadd.f32 0.0, %v4406
        %v4408 = vpop.f32.mrf.mxu0
        %4409 = vmatprep.mubr.f32.mxu0 0.0
        %4410 = vmatmul.mubr.f32.gmra.mxu0 %v4157
        %v4411 = vpop.f32.mrf.mxu0
        %v4412 = vadd.f32 0.0, %v4411
        %v4413 = vpop.f32.mrf.mxu0
        %4414 = vmatprep.mubr.f32.mxu0 0.0
        %4415 = vmatmul.mubr.f32.gmra.mxu0 %v4160
        %v4416 = vpop.f32.mrf.mxu0
        %v4417 = vpop.f32.mrf.mxu0
        %4418 = vmatprep.mubr.f32.mxu0 0.0
        %4419 = vmatmul.mubr.f32.gmra.mxu0 %v4163
        %v4420 = vpop.f32.mrf.mxu0
        %v4421 = vadd.f32 0.0, %v4420
        %v4422 = vpop.f32.mrf.mxu0
        %4423 = vmatprep.mubr.f32.mxu0 0.0
        %4424 = vmatmul.mubr.f32.gmra.mxu0 %v4166
        %v4425 = vpop.f32.mrf.mxu0
        %v4426 = vadd.f32 0.0, %v4425
        %v4427 = vpop.f32.mrf.mxu0
        %4428 = vmatprep.mubr.f32.mxu0 0.0
        %4429 = vmatmul.mubr.f32.gmra.mxu0 %v4169
        %v4430 = vpop.f32.mrf.mxu0
        %v4431 = vpop.f32.mrf.mxu0
        %4432 = vmatprep.mubr.f32.mxu0 0.0
        %4433 = vmatmul.mubr.f32.gmra.mxu0 %v4172
        %v4434 = vpop.f32.mrf.mxu0
        %v4435 = vadd.f32 0.0, %v4434
        %v4436 = vpop.f32.mrf.mxu0
        %4437 = vmatprep.mubr.f32.mxu0 0.0
        %4438 = vmatmul.mubr.f32.gmra.mxu0 %v4175
        %v4439 = vpop.f32.mrf.mxu0
        %v4440 = vadd.f32 0.0, %v4439
        %v4441 = vpop.f32.mrf.mxu0
        %4442 = vmatprep.mubr.f32.mxu0 0.0
        %4443 = vmatmul.mubr.f32.gmra.mxu0 %v4178
        %v4444 = vpop.f32.mrf.mxu0
        %v4445 = vpop.f32.mrf.mxu0
        %4446 = vmatprep.mubr.f32.mxu0 0.0
        %4447 = vmatmul.mubr.f32.gmra.mxu0 %v4181
        %v4448 = vpop.f32.mrf.mxu0
        %v4449 = vadd.f32 0.0, %v4448
        %v4450 = vpop.f32.mrf.mxu0
        %4451 = vmatprep.mubr.f32.mxu0 0.0
        %4452 = vmatmul.mubr.f32.gmra.mxu0 %v4184
        %v4453 = vpop.f32.mrf.mxu0
        %v4454 = vadd.f32 0.0, %v4453
        %v4455 = vpop.f32.mrf.mxu0
        %4456 = vmatprep.mubr.f32.mxu0 0.0
        %4457 = vmatmul.mubr.f32.gmra.mxu0 %v4187
        %v4458 = vpop.f32.mrf.mxu0
        %v4459 = vpop.f32.mrf.mxu0
        %4460 = vmatprep.mubr.f32.mxu0 0.0
        %4461 = vmatmul.mubr.f32.gmra.mxu0 %v4190
        %v4462 = vpop.f32.mrf.mxu0
        %v4463 = vadd.f32 0.0, %v4462
        %v4464 = vpop.f32.mrf.mxu0
        %4465 = vmatprep.mubr.f32.mxu0 0.0
        %4466 = vmatmul.mubr.f32.gmra.mxu0 %v4193
        %v4467 = vpop.f32.mrf.mxu0
        %v4468 = vadd.f32 0.0, %v4467
        %v4469 = vpop.f32.mrf.mxu0
        %4470 = vmatprep.mubr.f32.mxu0 0.0
        %4471 = vmatmul.mubr.f32.gmra.mxu0 %v4196
        %v4472 = vpop.f32.mrf.mxu0
        %v4473 = vpop.f32.mrf.mxu0
        %4474 = vmatprep.mubr.f32.mxu0 0.0
        %4475 = vmatmul.mubr.f32.gmra.mxu0 %v4199
        %v4476 = vpop.f32.mrf.mxu0
        %v4477 = vadd.f32 0.0, %v4476
        %v4478 = vpop.f32.mrf.mxu0
        %4479 = vmatprep.mubr.f32.mxu0 0.0
        %4480 = vmatmul.mubr.f32.gmra.mxu0 %v4202
        %v4481 = vpop.f32.mrf.mxu0
        %v4482 = vadd.f32 0.0, %v4481
        %v4483 = vpop.f32.mrf.mxu0
        %4484 = vmatprep.mubr.f32.mxu0 0.0
        %4485 = vmatmul.mubr.f32.gmra.mxu0 %v4205
        %v4486 = vpop.f32.mrf.mxu0
        %v4487 = vpop.f32.mrf.mxu0
        %4488 = vmatprep.mubr.f32.mxu0 0.0
        %4489 = vmatmul.mubr.f32.gmra.mxu0 %v4208
        %v4490 = vpop.f32.mrf.mxu0
        %v4491 = vadd.f32 0.0, %v4490
        %v4492 = vpop.f32.mrf.mxu0
        %4493 = vmatprep.mubr.f32.mxu0 0.0
        %4494 = vmatmul.mubr.f32.gmra.mxu0 %v4211
        %v4495 = vpop.f32.mrf.mxu0
        %v4496 = vadd.f32 0.0, %v4495
        %v4497 = vpop.f32.mrf.mxu0
        %4498 = vmatprep.mubr.f32.mxu0 0.0
        %4499 = vmatmul.mubr.f32.gmra.mxu0 %v4214
        %v4500 = vpop.f32.mrf.mxu0
        %v4501 = vpop.f32.mrf.mxu0
        %4502 = vmatprep.mubr.f32.mxu0 0.0
        %4503 = vmatmul.mubr.f32.gmra.mxu0 %v4217
        %v4504 = vpop.f32.mrf.mxu0
        %v4505 = vadd.f32 0.0, %v4504
        %v4506 = vpop.f32.mrf.mxu0
        %4507 = vmatprep.mubr.f32.mxu0 0.0
        %4508 = vmatmul.mubr.f32.gmra.mxu0 %v4220
        %v4509 = vpop.f32.mrf.mxu0
        %v4510 = vadd.f32 0.0, %v4509
        %v4511 = vpop.f32.mrf.mxu0
        %4512 = vmatprep.mubr.f32.mxu0 0.0
        %4513 = vmatmul.mubr.f32.gmra.mxu0 %v4223
        %v4514 = vpop.f32.mrf.mxu0
        %v4515 = vpop.f32.mrf.mxu0
        %4516 = vdwg.mxu0
        %v4517 = vadd.f32 %v3999, %v4295
        %v4518 = vadd.f32 %v4000, %v4300
        %v4519 = vadd.f32 %v4001, %v4309
        %v4520 = vadd.f32 %v4002, %v4314
        %v4521 = vadd.f32 %v4003, %v4323
        %v4522 = vadd.f32 %v4004, %v4328
        %v4523 = vadd.f32 %v4005, %v4337
        %v4524 = vadd.f32 %v4006, %v4342
        %v4525 = vadd.f32 %v4007, %v4351
        %v4526 = vadd.f32 %v4008, %v4356
        %v4527 = vadd.f32 %v4009, %v4365
        %v4528 = vadd.f32 %v4010, %v4370
        %v4529 = vadd.f32 %v4011, %v4379
        %v4530 = vadd.f32 %v4012, %v4384
        %v4531 = vadd.f32 %v4013, %v4393
        %v4532 = vadd.f32 %v4014, %v4398
        %v4533 = vadd.f32 %v4015, %v4407
        %v4534 = vadd.f32 %v4016, %v4412
        %v4535 = vadd.f32 %v4017, %v4421
        %v4536 = vadd.f32 %v4018, %v4426
        %v4537 = vadd.f32 %v4019, %v4435
        %v4538 = vadd.f32 %v4020, %v4440
        %v4539 = vadd.f32 %v4021, %v4449
        %v4540 = vadd.f32 %v4022, %v4454
        %v4541 = vadd.f32 %v4023, %v4463
        %v4542 = vadd.f32 %v4024, %v4468
        %v4543 = vadd.f32 %v4025, %v4477
        %v4544 = vadd.f32 %v4026, %v4482
        %v4545 = vadd.f32 %v4027, %v4491
        %v4546 = vadd.f32 %v4028, %v4496
        %v4547 = vadd.f32 %v4029, %v4505
        %v4548 = vadd.f32 %v4030, %v4510
        %v4549 = vld [vmem:[#allocation2 + $0x32] sm:$0xff]
        %v4550 = vld [vmem:[#allocation2 + $0x3a] sm:$0xff]
        %v4551 = vld [vmem:[#allocation2 + $0x42] sm:$0xff]
        %v4552 = vld [vmem:[#allocation2 + $0x4a] sm:$0xff]
        %v4553 = vld [vmem:[#allocation2 + $0x52] sm:$0xff]
        %v4554 = vld [vmem:[#allocation2 + $0x5a] sm:$0xff]
        %v4555 = vld [vmem:[#allocation2 + $0x62] sm:$0xff]
        %v4556 = vld [vmem:[#allocation2 + $0x6a] sm:$0xff]
        %v4557 = vld [vmem:[#allocation2 + $0x72] sm:$0xff]
        %v4558 = vld [vmem:[#allocation2 + $0x7a] sm:$0xff]
        %v4559 = vld [vmem:[#allocation2 + $0x82] sm:$0xff]
        %v4560 = vld [vmem:[#allocation2 + $0x8a] sm:$0xff]
        %v4561 = vld [vmem:[#allocation2 + $0x92] sm:$0xff]
        %v4562 = vld [vmem:[#allocation2 + $0x9a] sm:$0xff]
        %v4563 = vld [vmem:[#allocation2 + $0xa2] sm:$0xff]
        %v4564 = vld [vmem:[#allocation2 + $0xaa] sm:$0xff]
        %v4565 = vld [vmem:[#allocation2 + $0xb2] sm:$0xff]
        %v4566 = vld [vmem:[#allocation2 + $0xba] sm:$0xff]
        %v4567 = vld [vmem:[#allocation2 + $0xc2] sm:$0xff]
        %v4568 = vld [vmem:[#allocation2 + $0xca] sm:$0xff]
        %v4569 = vld [vmem:[#allocation2 + $0xd2] sm:$0xff]
        %v4570 = vld [vmem:[#allocation2 + $0xda] sm:$0xff]
        %v4571 = vld [vmem:[#allocation2 + $0xe2] sm:$0xff]
        %v4572 = vld [vmem:[#allocation2 + $0xea] sm:$0xff]
        %v4573 = vld [vmem:[#allocation2 + $0xf2] sm:$0xff]
        %v4574 = vld [vmem:[#allocation2 + $0xfa] sm:$0xff]
        %v4575 = vld [vmem:[#allocation2 + $0x102] sm:$0xff]
        %v4576 = vld [vmem:[#allocation2 + $0x10a] sm:$0xff]
        %v4577 = vld [vmem:[#allocation2 + $0x112] sm:$0xff]
        %v4578 = vld [vmem:[#allocation2 + $0x11a] sm:$0xff]
        %v4579 = vld [vmem:[#allocation2 + $0x122] sm:$0xff]
        %v4580 = vld [vmem:[#allocation2 + $0x12a] sm:$0xff]
        %v4581 = vld [vmem:[#allocation2 + $0x132] sm:$0xff]
        %v4582 = vld [vmem:[#allocation2 + $0x13a] sm:$0xff]
        %v4583 = vld [vmem:[#allocation2 + $0x142] sm:$0xff]
        %v4584 = vld [vmem:[#allocation2 + $0x14a] sm:$0xff]
        %v4585 = vld [vmem:[#allocation2 + $0x152] sm:$0xff]
        %v4586 = vld [vmem:[#allocation2 + $0x15a] sm:$0xff]
        %v4587 = vld [vmem:[#allocation2 + $0x162] sm:$0xff]
        %v4588 = vld [vmem:[#allocation2 + $0x16a] sm:$0xff]
        %v4589 = vld [vmem:[#allocation2 + $0x172] sm:$0xff]
        %v4590 = vld [vmem:[#allocation2 + $0x17a] sm:$0xff]
        %v4591 = vld [vmem:[#allocation2 + $0x182] sm:$0xff]
        %v4592 = vld [vmem:[#allocation2 + $0x18a] sm:$0xff]
        %v4593 = vld [vmem:[#allocation2 + $0x192] sm:$0xff]
        %v4594 = vld [vmem:[#allocation2 + $0x19a] sm:$0xff]
        %v4595 = vld [vmem:[#allocation2 + $0x1a2] sm:$0xff]
        %v4596 = vld [vmem:[#allocation2 + $0x1aa] sm:$0xff]
        %s4597 = scalar_lea.vmem %s303, 32
        %v4598 = vld [vmem:[%s4597] sm:$0xf]
        %v4600 = vsel %vm567, %v4549, 0
        %v4603 = vsel %vm567, %v4550, 0
        %v4606 = vsel %vm567, %v4551, 0
        %v4609 = vsel %vm567, %v4552, 0
        %v4612 = vsel %vm567, %v4553, 0
        %v4615 = vsel %vm567, %v4554, 0
        %v4618 = vsel %vm567, %v4555, 0
        %v4621 = vsel %vm567, %v4556, 0
        %v4624 = vsel %vm567, %v4557, 0
        %v4627 = vsel %vm567, %v4558, 0
        %v4630 = vsel %vm567, %v4559, 0
        %v4633 = vsel %vm567, %v4560, 0
        %v4636 = vsel %vm567, %v4561, 0
        %v4639 = vsel %vm567, %v4562, 0
        %v4642 = vsel %vm567, %v4563, 0
        %v4645 = vsel %vm567, %v4564, 0
        %v4648 = vsel %vm567, %v4565, 0
        %v4651 = vsel %vm567, %v4566, 0
        %v4654 = vsel %vm567, %v4567, 0
        %v4657 = vsel %vm567, %v4568, 0
        %v4660 = vsel %vm567, %v4569, 0
        %v4663 = vsel %vm567, %v4570, 0
        %v4666 = vsel %vm567, %v4571, 0
        %v4669 = vsel %vm567, %v4572, 0
        %v4672 = vsel %vm567, %v4573, 0
        %v4675 = vsel %vm567, %v4574, 0
        %v4678 = vsel %vm567, %v4575, 0
        %v4681 = vsel %vm567, %v4576, 0
        %v4684 = vsel %vm567, %v4577, 0
        %v4687 = vsel %vm567, %v4578, 0
        %v4690 = vsel %vm567, %v4579, 0
        %v4693 = vsel %vm567, %v4580, 0
        %v4696 = vsel %vm567, %v4581, 0
        %v4699 = vsel %vm567, %v4582, 0
        %v4702 = vsel %vm567, %v4583, 0
        %v4705 = vsel %vm567, %v4584, 0
        %v4708 = vsel %vm567, %v4585, 0
        %v4711 = vsel %vm567, %v4586, 0
        %v4714 = vsel %vm567, %v4587, 0
        %v4717 = vsel %vm567, %v4588, 0
        %v4720 = vsel %vm567, %v4589, 0
        %v4723 = vsel %vm567, %v4590, 0
        %v4726 = vsel %vm567, %v4591, 0
        %v4729 = vsel %vm567, %v4592, 0
        %v4732 = vsel %vm567, %v4593, 0
        %v4735 = vsel %vm567, %v4594, 0
        %v4738 = vsel %vm567, %v4595, 0
        %v4741 = vsel %vm567, %v4596, 0
        %v4744 = vsel %vm712, %v4598, 0
        %4746 = vmatprep.subr.mxu0 0.0
        %4747 = vmatpush1.msra.mxu0 0.0
        %4748 = vmatprep.subr.mxu0 0.0
        %4749 = vmatpush1.msra.mxu0 0.0
        %4750 = vmatprep.subr.mxu0 0.0
        %4751 = vmatpush1.msra.mxu0 0.0
        %4752 = vmatprep.subr.mxu0 0.0
        %4753 = vmatpush1.msra.mxu0 0.0
        %4754 = vmatprep.subr.mxu0 0.0
        %4755 = vmatpush1.msra.mxu0 0.0
        %4756 = vmatprep.subr.mxu0 0.0
        %4757 = vmatpush1.msra.mxu0 0.0
        %4758 = vmatprep.subr.mxu0 0.0
        %4759 = vmatpush1.msra.mxu0 0.0
        %4760 = vmatprep.subr.mxu0 0.0
        %4761 = vmatpush1.msra.mxu0 0.0
        %4762 = vmatprep.subr.mxu0 0.0
        %4763 = vmatpush1.msra.mxu0 0.0
        %4764 = vmatprep.subr.mxu0 0.0
        %4765 = vmatpush1.msra.mxu0 0.0
        %4766 = vmatprep.subr.mxu0 0.0
        %4767 = vmatpush1.msra.mxu0 0.0
        %4768 = vmatprep.subr.mxu0 0.0
        %4769 = vmatpush1.msra.mxu0 0.0
        %4770 = vmatprep.subr.mxu0 0.0
        %4771 = vmatpush1.msra.mxu0 0.0
        %4772 = vmatprep.subr.mxu0 0.0
        %4773 = vmatpush1.msra.mxu0 0.0
        %4774 = vmatprep.subr.mxu0 0.0
        %4775 = vmatpush1.msra.mxu0 0.0
        %4776 = vmatprep.subr.mxu0 0.0
        %4777 = vmatpush1.msra.mxu0 %v4744
        %4778 = vmatprep.subr.mxu0 0.0
        %4779 = vmatpush2.msra.mxu0 0.0
        %4780 = vmatprep.subr.mxu0 0.0
        %4781 = vmatpush2.msra.mxu0 0.0
        %4782 = vmatprep.subr.mxu0 0.0
        %4783 = vmatpush2.msra.mxu0 0.0
        %4784 = vmatprep.subr.mxu0 0.0
        %4785 = vmatpush2.msra.mxu0 0.0
        %4786 = vmatprep.subr.mxu0 0.0
        %4787 = vmatpush2.msra.mxu0 0.0
        %4788 = vmatprep.subr.mxu0 0.0
        %4789 = vmatpush2.msra.mxu0 0.0
        %4790 = vmatprep.subr.mxu0 0.0
        %4791 = vmatpush2.msra.mxu0 0.0
        %4792 = vmatprep.subr.mxu0 0.0
        %4793 = vmatpush2.msra.mxu0 0.0
        %4794 = vmatprep.subr.mxu0 0.0
        %4795 = vmatpush2.msra.mxu0 0.0
        %4796 = vmatprep.subr.mxu0 0.0
        %4797 = vmatpush2.msra.mxu0 0.0
        %4798 = vmatprep.subr.mxu0 0.0
        %4799 = vmatpush2.msra.mxu0 0.0
        %4800 = vmatprep.subr.mxu0 0.0
        %4801 = vmatpush2.msra.mxu0 0.0
        %4802 = vmatprep.subr.mxu0 0.0
        %4803 = vmatpush2.msra.mxu0 0.0
        %4804 = vmatprep.subr.mxu0 0.0
        %4805 = vmatpush2.msra.mxu0 0.0
        %4806 = vmatprep.subr.mxu0 0.0
        %4807 = vmatpush2.msra.mxu0 0.0
        %4808 = vmatprep.subr.mxu0 0.0
        %4809 = vmatpush2.msra.mxu0 0.0
        %4810 = vmatprep.mubr.f32.mxu0 0.0
        %4811 = vmatmul.mubr.f32.gmra.mxu0 %v4600
        %v4812 = vpop.f32.mrf.mxu0
        %v4813 = vadd.f32 0.0, %v4812
        %v4814 = vpop.f32.mrf.mxu0
        %4815 = vmatprep.mubr.f32.mxu0 0.0
        %4816 = vmatmul.mubr.f32.gmra.mxu0 %v4603
        %v4817 = vpop.f32.mrf.mxu0
        %v4818 = vadd.f32 0.0, %v4817
        %v4819 = vpop.f32.mrf.mxu0
        %4820 = vmatprep.mubr.f32.mxu0 0.0
        %4821 = vmatmul.mubr.f32.gmra.mxu0 %v4606
        %v4822 = vpop.f32.mrf.mxu0
        %v4823 = vpop.f32.mrf.mxu0
        %4824 = vmatprep.mubr.f32.mxu0 0.0
        %4825 = vmatmul.mubr.f32.gmra.mxu0 %v4609
        %v4826 = vpop.f32.mrf.mxu0
        %v4827 = vadd.f32 0.0, %v4826
        %v4828 = vpop.f32.mrf.mxu0
        %4829 = vmatprep.mubr.f32.mxu0 0.0
        %4830 = vmatmul.mubr.f32.gmra.mxu0 %v4612
        %v4831 = vpop.f32.mrf.mxu0
        %v4832 = vadd.f32 0.0, %v4831
        %v4833 = vpop.f32.mrf.mxu0
        %4834 = vmatprep.mubr.f32.mxu0 0.0
        %4835 = vmatmul.mubr.f32.gmra.mxu0 %v4615
        %v4836 = vpop.f32.mrf.mxu0
        %v4837 = vpop.f32.mrf.mxu0
        %4838 = vmatprep.mubr.f32.mxu0 0.0
        %4839 = vmatmul.mubr.f32.gmra.mxu0 %v4618
        %v4840 = vpop.f32.mrf.mxu0
        %v4841 = vadd.f32 0.0, %v4840
        %v4842 = vpop.f32.mrf.mxu0
        %4843 = vmatprep.mubr.f32.mxu0 0.0
        %4844 = vmatmul.mubr.f32.gmra.mxu0 %v4621
        %v4845 = vpop.f32.mrf.mxu0
        %v4846 = vadd.f32 0.0, %v4845
        %v4847 = vpop.f32.mrf.mxu0
        %4848 = vmatprep.mubr.f32.mxu0 0.0
        %4849 = vmatmul.mubr.f32.gmra.mxu0 %v4624
        %v4850 = vpop.f32.mrf.mxu0
        %v4851 = vpop.f32.mrf.mxu0
        %4852 = vmatprep.mubr.f32.mxu0 0.0
        %4853 = vmatmul.mubr.f32.gmra.mxu0 %v4627
        %v4854 = vpop.f32.mrf.mxu0
        %v4855 = vadd.f32 0.0, %v4854
        %v4856 = vpop.f32.mrf.mxu0
        %4857 = vmatprep.mubr.f32.mxu0 0.0
        %4858 = vmatmul.mubr.f32.gmra.mxu0 %v4630
        %v4859 = vpop.f32.mrf.mxu0
        %v4860 = vadd.f32 0.0, %v4859
        %v4861 = vpop.f32.mrf.mxu0
        %4862 = vmatprep.mubr.f32.mxu0 0.0
        %4863 = vmatmul.mubr.f32.gmra.mxu0 %v4633
        %v4864 = vpop.f32.mrf.mxu0
        %v4865 = vpop.f32.mrf.mxu0
        %4866 = vmatprep.mubr.f32.mxu0 0.0
        %4867 = vmatmul.mubr.f32.gmra.mxu0 %v4636
        %v4868 = vpop.f32.mrf.mxu0
        %v4869 = vadd.f32 0.0, %v4868
        %v4870 = vpop.f32.mrf.mxu0
        %4871 = vmatprep.mubr.f32.mxu0 0.0
        %4872 = vmatmul.mubr.f32.gmra.mxu0 %v4639
        %v4873 = vpop.f32.mrf.mxu0
        %v4874 = vadd.f32 0.0, %v4873
        %v4875 = vpop.f32.mrf.mxu0
        %4876 = vmatprep.mubr.f32.mxu0 0.0
        %4877 = vmatmul.mubr.f32.gmra.mxu0 %v4642
        %v4878 = vpop.f32.mrf.mxu0
        %v4879 = vpop.f32.mrf.mxu0
        %4880 = vmatprep.mubr.f32.mxu0 0.0
        %4881 = vmatmul.mubr.f32.gmra.mxu0 %v4645
        %v4882 = vpop.f32.mrf.mxu0
        %v4883 = vadd.f32 0.0, %v4882
        %v4884 = vpop.f32.mrf.mxu0
        %4885 = vmatprep.mubr.f32.mxu0 0.0
        %4886 = vmatmul.mubr.f32.gmra.mxu0 %v4648
        %v4887 = vpop.f32.mrf.mxu0
        %v4888 = vadd.f32 0.0, %v4887
        %v4889 = vpop.f32.mrf.mxu0
        %4890 = vmatprep.mubr.f32.mxu0 0.0
        %4891 = vmatmul.mubr.f32.gmra.mxu0 %v4651
        %v4892 = vpop.f32.mrf.mxu0
        %v4893 = vpop.f32.mrf.mxu0
        %4894 = vmatprep.mubr.f32.mxu0 0.0
        %4895 = vmatmul.mubr.f32.gmra.mxu0 %v4654
        %v4896 = vpop.f32.mrf.mxu0
        %v4897 = vadd.f32 0.0, %v4896
        %v4898 = vpop.f32.mrf.mxu0
        %4899 = vmatprep.mubr.f32.mxu0 0.0
        %4900 = vmatmul.mubr.f32.gmra.mxu0 %v4657
        %v4901 = vpop.f32.mrf.mxu0
        %v4902 = vadd.f32 0.0, %v4901
        %v4903 = vpop.f32.mrf.mxu0
        %4904 = vmatprep.mubr.f32.mxu0 0.0
        %4905 = vmatmul.mubr.f32.gmra.mxu0 %v4660
        %v4906 = vpop.f32.mrf.mxu0
        %v4907 = vpop.f32.mrf.mxu0
        %4908 = vmatprep.mubr.f32.mxu0 0.0
        %4909 = vmatmul.mubr.f32.gmra.mxu0 %v4663
        %v4910 = vpop.f32.mrf.mxu0
        %v4911 = vadd.f32 0.0, %v4910
        %v4912 = vpop.f32.mrf.mxu0
        %4913 = vmatprep.mubr.f32.mxu0 0.0
        %4914 = vmatmul.mubr.f32.gmra.mxu0 %v4666
        %v4915 = vpop.f32.mrf.mxu0
        %v4916 = vadd.f32 0.0, %v4915
        %v4917 = vpop.f32.mrf.mxu0
        %4918 = vmatprep.mubr.f32.mxu0 0.0
        %4919 = vmatmul.mubr.f32.gmra.mxu0 %v4669
        %v4920 = vpop.f32.mrf.mxu0
        %v4921 = vpop.f32.mrf.mxu0
        %4922 = vmatprep.mubr.f32.mxu0 0.0
        %4923 = vmatmul.mubr.f32.gmra.mxu0 %v4672
        %v4924 = vpop.f32.mrf.mxu0
        %v4925 = vadd.f32 0.0, %v4924
        %v4926 = vpop.f32.mrf.mxu0
        %4927 = vmatprep.mubr.f32.mxu0 0.0
        %4928 = vmatmul.mubr.f32.gmra.mxu0 %v4675
        %v4929 = vpop.f32.mrf.mxu0
        %v4930 = vadd.f32 0.0, %v4929
        %v4931 = vpop.f32.mrf.mxu0
        %4932 = vmatprep.mubr.f32.mxu0 0.0
        %4933 = vmatmul.mubr.f32.gmra.mxu0 %v4678
        %v4934 = vpop.f32.mrf.mxu0
        %v4935 = vpop.f32.mrf.mxu0
        %4936 = vmatprep.mubr.f32.mxu0 0.0
        %4937 = vmatmul.mubr.f32.gmra.mxu0 %v4681
        %v4938 = vpop.f32.mrf.mxu0
        %v4939 = vadd.f32 0.0, %v4938
        %v4940 = vpop.f32.mrf.mxu0
        %4941 = vmatprep.mubr.f32.mxu0 0.0
        %4942 = vmatmul.mubr.f32.gmra.mxu0 %v4684
        %v4943 = vpop.f32.mrf.mxu0
        %v4944 = vadd.f32 0.0, %v4943
        %v4945 = vpop.f32.mrf.mxu0
        %4946 = vmatprep.mubr.f32.mxu0 0.0
        %4947 = vmatmul.mubr.f32.gmra.mxu0 %v4687
        %v4948 = vpop.f32.mrf.mxu0
        %v4949 = vpop.f32.mrf.mxu0
        %4950 = vmatprep.mubr.f32.mxu0 0.0
        %4951 = vmatmul.mubr.f32.gmra.mxu0 %v4690
        %v4952 = vpop.f32.mrf.mxu0
        %v4953 = vadd.f32 0.0, %v4952
        %v4954 = vpop.f32.mrf.mxu0
        %4955 = vmatprep.mubr.f32.mxu0 0.0
        %4956 = vmatmul.mubr.f32.gmra.mxu0 %v4693
        %v4957 = vpop.f32.mrf.mxu0
        %v4958 = vadd.f32 0.0, %v4957
        %v4959 = vpop.f32.mrf.mxu0
        %4960 = vmatprep.mubr.f32.mxu0 0.0
        %4961 = vmatmul.mubr.f32.gmra.mxu0 %v4696
        %v4962 = vpop.f32.mrf.mxu0
        %v4963 = vpop.f32.mrf.mxu0
        %4964 = vmatprep.mubr.f32.mxu0 0.0
        %4965 = vmatmul.mubr.f32.gmra.mxu0 %v4699
        %v4966 = vpop.f32.mrf.mxu0
        %v4967 = vadd.f32 0.0, %v4966
        %v4968 = vpop.f32.mrf.mxu0
        %4969 = vmatprep.mubr.f32.mxu0 0.0
        %4970 = vmatmul.mubr.f32.gmra.mxu0 %v4702
        %v4971 = vpop.f32.mrf.mxu0
        %v4972 = vadd.f32 0.0, %v4971
        %v4973 = vpop.f32.mrf.mxu0
        %4974 = vmatprep.mubr.f32.mxu0 0.0
        %4975 = vmatmul.mubr.f32.gmra.mxu0 %v4705
        %v4976 = vpop.f32.mrf.mxu0
        %v4977 = vpop.f32.mrf.mxu0
        %4978 = vmatprep.mubr.f32.mxu0 0.0
        %4979 = vmatmul.mubr.f32.gmra.mxu0 %v4708
        %v4980 = vpop.f32.mrf.mxu0
        %v4981 = vadd.f32 0.0, %v4980
        %v4982 = vpop.f32.mrf.mxu0
        %4983 = vmatprep.mubr.f32.mxu0 0.0
        %4984 = vmatmul.mubr.f32.gmra.mxu0 %v4711
        %v4985 = vpop.f32.mrf.mxu0
        %v4986 = vadd.f32 0.0, %v4985
        %v4987 = vpop.f32.mrf.mxu0
        %4988 = vmatprep.mubr.f32.mxu0 0.0
        %4989 = vmatmul.mubr.f32.gmra.mxu0 %v4714
        %v4990 = vpop.f32.mrf.mxu0
        %v4991 = vpop.f32.mrf.mxu0
        %4992 = vmatprep.mubr.f32.mxu0 0.0
        %4993 = vmatmul.mubr.f32.gmra.mxu0 %v4717
        %v4994 = vpop.f32.mrf.mxu0
        %v4995 = vadd.f32 0.0, %v4994
        %v4996 = vpop.f32.mrf.mxu0
        %4997 = vmatprep.mubr.f32.mxu0 0.0
        %4998 = vmatmul.mubr.f32.gmra.mxu0 %v4720
        %v4999 = vpop.f32.mrf.mxu0
        %v5000 = vadd.f32 0.0, %v4999
        %v5001 = vpop.f32.mrf.mxu0
        %5002 = vmatprep.mubr.f32.mxu0 0.0
        %5003 = vmatmul.mubr.f32.gmra.mxu0 %v4723
        %v5004 = vpop.f32.mrf.mxu0
        %v5005 = vpop.f32.mrf.mxu0
        %5006 = vmatprep.mubr.f32.mxu0 0.0
        %5007 = vmatmul.mubr.f32.gmra.mxu0 %v4726
        %v5008 = vpop.f32.mrf.mxu0
        %v5009 = vadd.f32 0.0, %v5008
        %v5010 = vpop.f32.mrf.mxu0
        %5011 = vmatprep.mubr.f32.mxu0 0.0
        %5012 = vmatmul.mubr.f32.gmra.mxu0 %v4729
        %v5013 = vpop.f32.mrf.mxu0
        %v5014 = vadd.f32 0.0, %v5013
        %v5015 = vpop.f32.mrf.mxu0
        %5016 = vmatprep.mubr.f32.mxu0 0.0
        %5017 = vmatmul.mubr.f32.gmra.mxu0 %v4732
        %v5018 = vpop.f32.mrf.mxu0
        %v5019 = vpop.f32.mrf.mxu0
        %5020 = vmatprep.mubr.f32.mxu0 0.0
        %5021 = vmatmul.mubr.f32.gmra.mxu0 %v4735
        %v5022 = vpop.f32.mrf.mxu0
        %v5023 = vadd.f32 0.0, %v5022
        %v5024 = vpop.f32.mrf.mxu0
        %5025 = vmatprep.mubr.f32.mxu0 0.0
        %5026 = vmatmul.mubr.f32.gmra.mxu0 %v4738
        %v5027 = vpop.f32.mrf.mxu0
        %v5028 = vadd.f32 0.0, %v5027
        %v5029 = vpop.f32.mrf.mxu0
        %5030 = vmatprep.mubr.f32.mxu0 0.0
        %5031 = vmatmul.mubr.f32.gmra.mxu0 %v4741
        %v5032 = vpop.f32.mrf.mxu0
        %v5033 = vpop.f32.mrf.mxu0
        %5034 = vdwg.mxu0
        %v5035 = vadd.f32 %v4517, %v4813
        %v5036 = vadd.f32 %v4518, %v4818
        %v5037 = vadd.f32 %v4519, %v4827
        %v5038 = vadd.f32 %v4520, %v4832
        %v5039 = vadd.f32 %v4521, %v4841
        %v5040 = vadd.f32 %v4522, %v4846
        %v5041 = vadd.f32 %v4523, %v4855
        %v5042 = vadd.f32 %v4524, %v4860
        %v5043 = vadd.f32 %v4525, %v4869
        %v5044 = vadd.f32 %v4526, %v4874
        %v5045 = vadd.f32 %v4527, %v4883
        %v5046 = vadd.f32 %v4528, %v4888
        %v5047 = vadd.f32 %v4529, %v4897
        %v5048 = vadd.f32 %v4530, %v4902
        %v5049 = vadd.f32 %v4531, %v4911
        %v5050 = vadd.f32 %v4532, %v4916
        %v5051 = vadd.f32 %v4533, %v4925
        %v5052 = vadd.f32 %v4534, %v4930
        %v5053 = vadd.f32 %v4535, %v4939
        %v5054 = vadd.f32 %v4536, %v4944
        %v5055 = vadd.f32 %v4537, %v4953
        %v5056 = vadd.f32 %v4538, %v4958
        %v5057 = vadd.f32 %v4539, %v4967
        %v5058 = vadd.f32 %v4540, %v4972
        %v5059 = vadd.f32 %v4541, %v4981
        %v5060 = vadd.f32 %v4542, %v4986
        %v5061 = vadd.f32 %v4543, %v4995
        %v5062 = vadd.f32 %v4544, %v5000
        %v5063 = vadd.f32 %v4545, %v5009
        %v5064 = vadd.f32 %v4546, %v5014
        %v5065 = vadd.f32 %v4547, %v5023
        %v5066 = vadd.f32 %v4548, %v5028
        %v5067 = vld [vmem:[%s299] sm:$0xff]
        %v5068 = vld [vmem:[%s299 + $0x8] sm:$0xff]
        %v5069 = vld [vmem:[%s299 + $0x10] sm:$0xff]
        %v5070 = vld [vmem:[%s299 + $0x18] sm:$0xff]
        %v5071 = vld [vmem:[%s299 + $0x20] sm:$0xff]
        %v5072 = vld [vmem:[%s299 + $0x28] sm:$0xff]
        %v5073 = vld [vmem:[%s299 + $0x30] sm:$0xff]
        %v5074 = vld [vmem:[%s299 + $0x38] sm:$0xff]
        %v5075 = vld [vmem:[%s299 + $0x40] sm:$0xff]
        %v5076 = vld [vmem:[%s299 + $0x48] sm:$0xff]
        %v5077 = vld [vmem:[%s299 + $0x50] sm:$0xff]
        %v5078 = vld [vmem:[%s299 + $0x58] sm:$0xff]
        %v5079 = vld [vmem:[%s299 + $0x60] sm:$0xff]
        %v5080 = vld [vmem:[%s299 + $0x68] sm:$0xff]
        %v5081 = vld [vmem:[%s299 + $0x70] sm:$0xff]
        %v5082 = vld [vmem:[%s299 + $0x78] sm:$0xff]
        %v5083 = vld [vmem:[%s299 + $0x80] sm:$0xff]
        %v5084 = vld [vmem:[%s299 + $0x88] sm:$0xff]
        %v5085 = vld [vmem:[%s299 + $0x90] sm:$0xff]
        %v5086 = vld [vmem:[%s299 + $0x98] sm:$0xff]
        %v5087 = vld [vmem:[%s299 + $0xa0] sm:$0xff]
        %v5088 = vld [vmem:[%s299 + $0xa8] sm:$0xff]
        %v5089 = vld [vmem:[%s299 + $0xb0] sm:$0xff]
        %v5090 = vld [vmem:[%s299 + $0xb8] sm:$0xff]
        %v5091 = vld [vmem:[%s299 + $0xc0] sm:$0xff]
        %v5092 = vld [vmem:[%s299 + $0xc8] sm:$0xff]
        %v5093 = vld [vmem:[%s299 + $0xd0] sm:$0xff]
        %v5094 = vld [vmem:[%s299 + $0xd8] sm:$0xff]
        %v5095 = vld [vmem:[%s299 + $0xe0] sm:$0xff]
        %v5096 = vld [vmem:[%s299 + $0xe8] sm:$0xff]
        %v5097 = vld [vmem:[%s299 + $0xf0] sm:$0xff]
        %v5098 = vld [vmem:[%s299 + $0xf8] sm:$0xff]
        %v5099 = vstv %s327
        %v5100 = vmul.f32 %v5099, %v5067
        %v5101 = vmul.f32 %v5099, %v5068
        %v5102 = vmul.f32 %v5099, %v5069
        %v5103 = vmul.f32 %v5099, %v5070
        %v5104 = vmul.f32 %v5099, %v5071
        %v5105 = vmul.f32 %v5099, %v5072
        %v5106 = vmul.f32 %v5099, %v5073
        %v5107 = vmul.f32 %v5099, %v5074
        %v5108 = vmul.f32 %v5099, %v5075
        %v5109 = vmul.f32 %v5099, %v5076
        %v5110 = vmul.f32 %v5099, %v5077
        %v5111 = vmul.f32 %v5099, %v5078
        %v5112 = vmul.f32 %v5099, %v5079
        %v5113 = vmul.f32 %v5099, %v5080
        %v5114 = vmul.f32 %v5099, %v5081
        %v5115 = vmul.f32 %v5099, %v5082
        %v5116 = vmul.f32 %v5099, %v5083
        %v5117 = vmul.f32 %v5099, %v5084
        %v5118 = vmul.f32 %v5099, %v5085
        %v5119 = vmul.f32 %v5099, %v5086
        %v5120 = vmul.f32 %v5099, %v5087
        %v5121 = vmul.f32 %v5099, %v5088
        %v5122 = vmul.f32 %v5099, %v5089
        %v5123 = vmul.f32 %v5099, %v5090
        %v5124 = vmul.f32 %v5099, %v5091
        %v5125 = vmul.f32 %v5099, %v5092
        %v5126 = vmul.f32 %v5099, %v5093
        %v5127 = vmul.f32 %v5099, %v5094
        %v5128 = vmul.f32 %v5099, %v5095
        %v5129 = vmul.f32 %v5099, %v5096
        %v5130 = vmul.f32 %v5099, %v5097
        %v5131 = vmul.f32 %v5099, %v5098
        %v5132 = vstv %s467
        %v5133 = vmul.f32 %v5132, %v5035
        %v5134 = vmul.f32 %v5132, %v5036
        %v5135 = vmul.f32 %v5132, %v5037
        %v5136 = vmul.f32 %v5132, %v5038
        %v5137 = vmul.f32 %v5132, %v5039
        %v5138 = vmul.f32 %v5132, %v5040
        %v5139 = vmul.f32 %v5132, %v5041
        %v5140 = vmul.f32 %v5132, %v5042
        %v5141 = vmul.f32 %v5132, %v5043
        %v5142 = vmul.f32 %v5132, %v5044
        %v5143 = vmul.f32 %v5132, %v5045
        %v5144 = vmul.f32 %v5132, %v5046
        %v5145 = vmul.f32 %v5132, %v5047
        %v5146 = vmul.f32 %v5132, %v5048
        %v5147 = vmul.f32 %v5132, %v5049
        %v5148 = vmul.f32 %v5132, %v5050
        %v5149 = vmul.f32 %v5132, %v5051
        %v5150 = vmul.f32 %v5132, %v5052
        %v5151 = vmul.f32 %v5132, %v5053
        %v5152 = vmul.f32 %v5132, %v5054
        %v5153 = vmul.f32 %v5132, %v5055
        %v5154 = vmul.f32 %v5132, %v5056
        %v5155 = vmul.f32 %v5132, %v5057
        %v5156 = vmul.f32 %v5132, %v5058
        %v5157 = vmul.f32 %v5132, %v5059
        %v5158 = vmul.f32 %v5132, %v5060
        %v5159 = vmul.f32 %v5132, %v5061
        %v5160 = vmul.f32 %v5132, %v5062
        %v5161 = vmul.f32 %v5132, %v5063
        %v5162 = vmul.f32 %v5132, %v5064
        %v5163 = vmul.f32 %v5132, %v5065
        %v5164 = vmul.f32 %v5132, %v5066
        %v5165 = vadd.f32 %v5100, %v5133
        %v5166 = vadd.f32 %v5101, %v5134
        %v5167 = vadd.f32 %v5102, %v5135
        %v5168 = vadd.f32 %v5103, %v5136
        %v5169 = vadd.f32 %v5104, %v5137
        %v5170 = vadd.f32 %v5105, %v5138
        %v5171 = vadd.f32 %v5106, %v5139
        %v5172 = vadd.f32 %v5107, %v5140
        %v5173 = vadd.f32 %v5108, %v5141
        %v5174 = vadd.f32 %v5109, %v5142
        %v5175 = vadd.f32 %v5110, %v5143
        %v5176 = vadd.f32 %v5111, %v5144
        %v5177 = vadd.f32 %v5112, %v5145
        %v5178 = vadd.f32 %v5113, %v5146
        %v5179 = vadd.f32 %v5114, %v5147
        %v5180 = vadd.f32 %v5115, %v5148
        %v5181 = vadd.f32 %v5116, %v5149
        %v5182 = vadd.f32 %v5117, %v5150
        %v5183 = vadd.f32 %v5118, %v5151
        %v5184 = vadd.f32 %v5119, %v5152
        %v5185 = vadd.f32 %v5120, %v5153
        %v5186 = vadd.f32 %v5121, %v5154
        %v5187 = vadd.f32 %v5122, %v5155
        %v5188 = vadd.f32 %v5123, %v5156
        %v5189 = vadd.f32 %v5124, %v5157
        %v5190 = vadd.f32 %v5125, %v5158
        %v5191 = vadd.f32 %v5126, %v5159
        %v5192 = vadd.f32 %v5127, %v5160
        %v5193 = vadd.f32 %v5128, %v5161
        %v5194 = vadd.f32 %v5129, %v5162
        %v5195 = vadd.f32 %v5130, %v5163
        %v5196 = vadd.f32 %v5131, %v5164
        %v5198 = vlaneseq
        %v5199 = vshrl.u32 %v5198, 7
        %v5200 = vsub.s32 0, %v5199
        %v5201 = vrot.slane %v466, %v5200
        %v5203 = vadd.f32 %v5165, %v5201
        %v5204 = vadd.f32 %v5166, %v5201
        %v5205 = vadd.f32 %v5167, %v5201
        %v5206 = vadd.f32 %v5168, %v5201
        %v5207 = vadd.f32 %v5169, %v5201
        %v5208 = vadd.f32 %v5170, %v5201
        %v5209 = vadd.f32 %v5171, %v5201
        %v5210 = vadd.f32 %v5172, %v5201
        %v5211 = vadd.f32 %v5173, %v5201
        %v5212 = vadd.f32 %v5174, %v5201
        %v5213 = vadd.f32 %v5175, %v5201
        %v5214 = vadd.f32 %v5176, %v5201
        %v5215 = vadd.f32 %v5177, %v5201
        %v5216 = vadd.f32 %v5178, %v5201
        %v5217 = vadd.f32 %v5179, %v5201
        %v5218 = vadd.f32 %v5180, %v5201
        %v5219 = vadd.f32 %v5181, %v5201
        %v5220 = vadd.f32 %v5182, %v5201
        %v5221 = vadd.f32 %v5183, %v5201
        %v5222 = vadd.f32 %v5184, %v5201
        %v5223 = vadd.f32 %v5185, %v5201
        %v5224 = vadd.f32 %v5186, %v5201
        %v5225 = vadd.f32 %v5187, %v5201
        %v5226 = vadd.f32 %v5188, %v5201
        %v5227 = vadd.f32 %v5189, %v5201
        %v5228 = vadd.f32 %v5190, %v5201
        %v5229 = vadd.f32 %v5191, %v5201
        %v5230 = vadd.f32 %v5192, %v5201
        %v5231 = vadd.f32 %v5193, %v5201
        %v5232 = vadd.f32 %v5194, %v5201
        %v5233 = vadd.f32 %v5195, %v5201
        %v5234 = vadd.f32 %v5196, %v5201
        %5235 = vst.msk [vmem:[%s322] sm:$0xff] %vm567, %v5203
        %5236 = vst.msk [vmem:[%s322 + $0x8] sm:$0xff] %vm567, %v5204
        %5237 = vst.msk [vmem:[%s322 + $0x10] sm:$0xff] %vm567, %v5205
        %5238 = vst.msk [vmem:[%s322 + $0x18] sm:$0xff] %vm567, %v5206
        %5239 = vst.msk [vmem:[%s322 + $0x20] sm:$0xff] %vm567, %v5207
        %5240 = vst.msk [vmem:[%s322 + $0x28] sm:$0xff] %vm567, %v5208
        %5241 = vst.msk [vmem:[%s322 + $0x30] sm:$0xff] %vm567, %v5209
        %5242 = vst.msk [vmem:[%s322 + $0x38] sm:$0xff] %vm567, %v5210
        %5243 = vst.msk [vmem:[%s322 + $0x40] sm:$0xff] %vm567, %v5211
        %5244 = vst.msk [vmem:[%s322 + $0x48] sm:$0xff] %vm567, %v5212
        %5245 = vst.msk [vmem:[%s322 + $0x50] sm:$0xff] %vm567, %v5213
        %5246 = vst.msk [vmem:[%s322 + $0x58] sm:$0xff] %vm567, %v5214
        %5247 = vst.msk [vmem:[%s322 + $0x60] sm:$0xff] %vm567, %v5215
        %5248 = vst.msk [vmem:[%s322 + $0x68] sm:$0xff] %vm567, %v5216
        %5249 = vst.msk [vmem:[%s322 + $0x70] sm:$0xff] %vm567, %v5217
        %5250 = vst.msk [vmem:[%s322 + $0x78] sm:$0xff] %vm567, %v5218
        %5251 = vst.msk [vmem:[%s322 + $0x80] sm:$0xff] %vm567, %v5219
        %5252 = vst.msk [vmem:[%s322 + $0x88] sm:$0xff] %vm567, %v5220
        %5253 = vst.msk [vmem:[%s322 + $0x90] sm:$0xff] %vm567, %v5221
        %5254 = vst.msk [vmem:[%s322 + $0x98] sm:$0xff] %vm567, %v5222
        %5255 = vst.msk [vmem:[%s322 + $0xa0] sm:$0xff] %vm567, %v5223
        %5256 = vst.msk [vmem:[%s322 + $0xa8] sm:$0xff] %vm567, %v5224
        %5257 = vst.msk [vmem:[%s322 + $0xb0] sm:$0xff] %vm567, %v5225
        %5258 = vst.msk [vmem:[%s322 + $0xb8] sm:$0xff] %vm567, %v5226
        %5259 = vst.msk [vmem:[%s322 + $0xc0] sm:$0xff] %vm567, %v5227
        %5260 = vst.msk [vmem:[%s322 + $0xc8] sm:$0xff] %vm567, %v5228
        %5261 = vst.msk [vmem:[%s322 + $0xd0] sm:$0xff] %vm567, %v5229
        %5262 = vst.msk [vmem:[%s322 + $0xd8] sm:$0xff] %vm567, %v5230
        %5263 = vst.msk [vmem:[%s322 + $0xe0] sm:$0xff] %vm567, %v5231
        %5264 = vst.msk [vmem:[%s322 + $0xe8] sm:$0xff] %vm567, %v5232
        %5265 = vst.msk [vmem:[%s322 + $0xf0] sm:$0xff] %vm567, %v5233
        %5266 = vst.msk [vmem:[%s322 + $0xf8] sm:$0xff] %vm567, %v5234
        %s5267 = smul.u32 16, %s24
        %p5268 = scmp.lt.s32.totalorder %s22, 1
        %s5269 = scalar_select %p5268, %s22, 1
        %p5270 = scmp.lt.s32.totalorder %s5267, 15
        %s5271 = scalar_select %p5270, %s5267, 15
        %p5272 = scmp.lt.s32.totalorder %s23, 0
        %s5273 = scalar_select %p5272, %s23, 0
        %s5274 = smul.addr %s5271, 2
        %s5275 = sadd.s32 %s5273, %s5274
        %s5276 = smul.addr %s5269, 32
        %s5277 = sadd.s32 %s5275, %s5276
        %s5278 = smul.addr %s5277, 8
        %s5279 = scalar_lea.vmem %s5, %s5278
        // Predicated region
        $region49: #{tpu_custom_call.1} parent=39 // pred_check
          %p5280 = pneg %p183
        $region50: #{tpu_custom_call.1} parent=39 // pred_check_branch
          %5282 = sbr.rel (%p5280) target = $region52
        $region51: #{tpu_custom_call.1} parent=39 // pred_region
          %s5283 = smul.u32 16, %s24
        $region52: #{tpu_custom_call.1} parent=39 // pred_fallthru
          _
      $region40: #{tpu_custom_call.1} parent=5 // pred_fallthru
        _
      %p5284 = scmp.le.s32.totalorder 2, %s12
      // Predicated region
      $region53: #{tpu_custom_call.1} parent=5 // pred_check
        %p5285 = pneg %p5284
      $region54: #{tpu_custom_call.1} parent=5 // pred_check_branch
        %5287 = sbr.rel (%p5285) target = $region56
      $region55: #{tpu_custom_call.1} parent=5 // pred_region
        %s5288 = ssub.s32 %s12, 2
        // Predicated region
        $region57: #{tpu_custom_call.1} parent=55 // pred_check
          %p5289 = pneg %p189
        $region58: #{tpu_custom_call.1} parent=55 // pred_check_branch
          %5291 = sbr.rel (%p5289) target = $region60
        $region59: #{tpu_custom_call.1} parent=55 // pred_region
          %s5292 = smul.u32 16, %s27
          %p5293 = scmp.lt.s32.totalorder %s25, 1
          %s5294 = scalar_select %p5293, %s25, 1
          %p5295 = scmp.lt.s32.totalorder %s5292, 15
          %s5296 = scalar_select %p5295, %s5292, 15
          %p5297 = scmp.lt.s32.totalorder %s26, 0
          %s5298 = scalar_select %p5297, %s26, 0
          %s5299 = smul.addr %s5296, 2
          %s5300 = sadd.s32 %s5298, %s5299
          %s5301 = smul.addr %s5294, 32
          %s5302 = sadd.s32 %s5300, %s5301
          %s5303 = smul.addr %s5302, 8
          %s5304 = scalar_lea.vmem %s5, %s5303
        $region60: #{tpu_custom_call.1} parent=55 // pred_fallthru
          _
      $region56: #{tpu_custom_call.1} parent=5 // pred_fallthru
        _
    $region6: #{tpu_custom_call.1} parent=1 // loop_footer
      %s16 = sadd.s32 1, %s12
    $region7: #{tpu_custom_call.1} parent=1 // loop_footer_branch
      %11 = sbr.rel target = $region3
    $region8: #{tpu_custom_call.1} parent=1 // loop_exit
      _
    %5305 = vsyncpa [#allocation4], 1
    %s5306 = scalar_lea.sflag [#allocation4], 1
    %5307 = vsyncpa %s5306, 1

</llo_original>
